<compile_context>
chip_gen: v7x
topology: tpu7x:2x2x1
jax: 0.10.0
libtpu: 0.0.40
codegen_flags: <defaults>
</compile_context>

<pallas_src>
import functools

import jax
import jax.numpy as jnp
from jax import lax
from jax.experimental import pallas as pl
from jax.experimental.pallas import tpu as pltpu


_INV_SQRT2 = 0.7071067811865476
_MXU_ALIGN = 256        # MXU M tile on v6e/v7x; also a multiple of 128 (v5e MXU)
_MAX_TILE = 1024


def _round_up(x, m):
    return -(-x // m) * m


def _round_down(x, m):
    return (x // m) * m


def _gelu(x, approx):
    if approx:
        # tanh approximation: exp/tanh execute in the EUP slot (frees the VALU).
        c = 0.7978845608028654  # sqrt(2/pi)
        return 0.5 * x * (1.0 + jnp.tanh(c * (x + 0.044715 * x * x * x)))
    # nn.GELU() default = exact erf-based GELU (f32).
    return 0.5 * x * (1.0 + lax.erf(x * _INV_SQRT2))


def _layernorm(x, gamma, beta, eps=1e-5):
    # Centered two-pass form (avoids E[x^2] - mean^2 cancellation).
    mean = jnp.mean(x, axis=-1, keepdims=True)
    xc = x - mean
    var = jnp.mean(xc * xc, axis=-1, keepdims=True)
    return xc * lax.rsqrt(var + eps) * gamma + beta


def critic_kernel(
    x_ref,
    w1_ref, b1_ref, g1_ref, be1_ref,
    w2_ref, b2_ref, g2_ref, be2_ref,
    w3_ref, b3_ref,
    out_ref,
    *, approx_gelu,
):
    # Layer 1: Linear(E -> H)  [bf16 MXU, f32 accumulate] + LayerNorm(H) + GELU
    x = x_ref[...].astype(jnp.bfloat16)                               # (tb, E)
    h = jnp.dot(x, w1_ref[...], preferred_element_type=jnp.float32) + b1_ref[...]
    h = _layernorm(h, g1_ref[...], be1_ref[...])
    h = _gelu(h, approx_gelu)
    # Dropout(0.1): identity in eval mode.
    # TODO(synk): training-mode stochastic Dropout(0.1) not implemented.

    # Layer 2: Linear(H -> H/2) [bf16 MXU, f32 accumulate] + LayerNorm(H/2) + GELU
    h = jnp.dot(h.astype(jnp.bfloat16), w2_ref[...],
                preferred_element_type=jnp.float32) + b2_ref[...]
    h = _layernorm(h, g2_ref[...], be2_ref[...])
    h = _gelu(h, approx_gelu)
    # Dropout(0.1): identity in eval mode.

    # Layer 3: Linear(H/2 -> 1), produced lane-dense.  w3 is padded to (8, H2) with
    # the real weights in row 0; trans_b dot_general gives (8, tb) and row 0 is the
    # (1, tb) result -> unmasked lane-dense store into the (1, batch_tile) out block.
    v = lax.dot_general(
        w3_ref[...], h,
        dimension_numbers=(((1,), (1,)), ((), ())),
        preferred_element_type=jnp.float32,
    )                                                                  # (8, tb)
    out_ref[...] = (v[0:1, :] + b3_ref[...]).astype(out_ref.dtype)     # (1, tb)


def _vmem_budget_bytes():
    try:
        cap = int(pltpu.get_tpu_info().vmem_capacity_bytes)
    except Exception:
        cap = 64 * 1024 * 1024          # conservative default (v7x per-core VMEM)
    return int(0.8 * cap)               # leave headroom for compiler-internal scratch


def _choose_batch_tile(B, batch_tile, per_row_bytes, resident_bytes, vmem_budget):
    if batch_tile is not None:
        bt = int(batch_tile)
        if bt >= B:
            return _round_up(B, 8)
        # Multi-tile: output lane-dim block must be 128-aligned (also MXU friendly).
        return max(128, _round_down(bt, 128))
    if B <= _MXU_ALIGN:
        return _round_up(B, 8)          # single tile (block == full padded batch)
    avail = max(vmem_budget - resident_bytes, vmem_budget // 4)
    cand = min(_MAX_TILE, max(_MXU_ALIGN, avail // max(per_row_bytes, 1)))
    cand = max(_MXU_ALIGN, _round_down(cand, _MXU_ALIGN))
    # Keep >= 2 grid steps when the batch allows it (megacore on v7x).
    if B >= 2 * _MXU_ALIGN:
        cand = min(cand, max(_MXU_ALIGN,
                             _round_down(_round_up(B, _MXU_ALIGN) // 2, _MXU_ALIGN)))
    return min(cand, _round_up(B, _MXU_ALIGN))


def enhanced_critic_forward(x, params, *, batch_tile=None, approx_gelu=False):
    """x: (B, embed_dim) float32 or bfloat16.  Returns (B, 1) float32."""
    B, E = x.shape
    w1, b1, g1, be1, w2, b2, g2, be2, w3, b3 = params
    H = w1.shape[1]
    H2 = w2.shape[1]
    assert w3.shape[-1] == H2

    vmem_budget = _vmem_budget_bytes()

    # VMEM-resident parameter footprint (bf16 matmul weights + f32 row params).
    weight_bytes = (E * H + H * H2) * 2
    small_bytes = (3 * H + 3 * H2) * 4 + 8 * H2 * 4 + 4
    resident = weight_bytes + small_bytes
    if resident > vmem_budget // 2:
        # TODO(synk): tiled-weight (H / output-N) grid axis for very large E/H.
        raise ValueError(
            "bf16 weights (%d B) exceed half the VMEM budget (%d B); the "
            "VMEM-resident-weight design needs a tiled-weight path." %
            (resident, vmem_budget))

    x_elt = x.dtype.itemsize
    # Per-batch-row VMEM: double-buffered x tile + double-buffered lane-dense out
    # + ~3 live f32 activation rows of the widest layer (headroom for temps).
    per_row = 2 * E * x_elt + 2 * 4 + 3 * 4 * max(H, H2)

    batch_tile = _choose_batch_tile(B, batch_tile, per_row, resident, vmem_budget)
    num_tiles = -(-B // batch_tile)
    Bp = num_tiles * batch_tile
    xp = x if Bp == B else jnp.pad(x, ((0, Bp - B), (0, 0)))

    # One-time parameter prep (outside the hot loop).
    w1b = w1.astype(jnp.bfloat16)
    w2b = w2.astype(jnp.bfloat16)
    w3p = jnp.pad(w3.reshape(1, H2).astype(jnp.float32), ((0, 7), (0, 0)))  # (8, H2)
    b3r = b3.reshape(1, 1).astype(jnp.float32)

    est_bytes = (
        2 * batch_tile * E * x_elt          # x tile, double-buffered
        + 2 * batch_tile * 4                # out tile, double-buffered
        + 2 * weight_bytes                  # weights (worst case: 2 buffers)
        + 2 * small_bytes
        + 6 * batch_tile * max(H, H2) * 4   # live activations + temps headroom
    )
    vmem_limit = int(min(max(2 * est_bytes, 16 * 1024 * 1024), vmem_budget))

    cost = pl.CostEstimate(
        flops=2 * Bp * (E * H + H * H2 + 8 * H2),
        transcendentals=Bp * (H + H2),
        bytes_accessed=Bp * E * x_elt + Bp * 4 + weight_bytes + small_bytes,
    )

    kernel = functools.partial(critic_kernel, approx_gelu=approx_gelu)
    args = (xp, w1b, b1, g1, be1, w2b, b2, g2, be2, w3p, b3r)

    def build(single_buffer_consts):
        if single_buffer_consts:
            def const_spec(shape):
                return pl.BlockSpec(shape, lambda i: (0, 0),
                                    pipeline_mode=pl.Buffered(1))
        else:
            def const_spec(shape):
                return pl.BlockSpec(shape, lambda i: (0, 0))
        return pl.pallas_call(
            kernel,
            out_shape=jax.ShapeDtypeStruct((1, Bp), jnp.float32),
            grid_spec=pltpu.PrefetchScalarGridSpec(
                num_scalar_prefetch=0,
                grid=(num_tiles,),
                in_specs=[
                    pl.BlockSpec((batch_tile, E), lambda i: (i, 0)),   # x (streamed)
                    const_spec((E, H)),                                # w1 (bf16)
                    const_spec((1, H)),                                # b1
                    const_spec((1, H)),                                # ln1 gamma
                    const_spec((1, H)),                                # ln1 beta
                    const_spec((H, H2)),                               # w2 (bf16)
                    const_spec((1, H2)),                               # b2
                    const_spec((1, H2)),                               # ln2 gamma
                    const_spec((1, H2)),                               # ln2 beta
                    const_spec((8, H2)),                               # w3 (padded)
                    const_spec((1, 1)),                                # b3
                ],
                out_specs=pl.BlockSpec((1, batch_tile), lambda i: (0, i)),
            ),
            compiler_params=pltpu.CompilerParams(
                dimension_semantics=("parallel",),
                vmem_limit_bytes=vmem_limit,
            ),
            cost_estimate=cost,
        )

    try:
        out = build(True)(*args)          # single-buffered resident weights
    except Exception:
        out = build(False)(*args)         # fallback: default double buffering

    out = out.reshape(Bp, 1)
    return out[:B] if Bp != B else out


def init_params(key, embed_dim, hidden_dim):
    """Mirror EnhancedCritic._init_weights: Linear weights ~ N(0, 0.02), biases 0,
    LayerNorm weight 1, bias 0. w1/w2 stored (in, out); w3 stored as a (1, H/2) row."""
    h2 = hidden_dim // 2
    k1, k2, k3 = jax.random.split(key, 3)
    w1 = 0.02 * jax.random.normal(k1, (embed_dim, hidden_dim), jnp.float32)
    w2 = 0.02 * jax.random.normal(k2, (hidden_dim, h2), jnp.float32)
    w3 = 0.02 * jax.random.normal(k3, (1, h2), jnp.float32)
    b1 = jnp.zeros((1, hidden_dim), jnp.float32)
    b2 = jnp.zeros((1, h2), jnp.float32)
    b3 = jnp.zeros((1, 1), jnp.float32)
    g1 = jnp.ones((1, hidden_dim), jnp.float32)
    be1 = jnp.zeros((1, hidden_dim), jnp.float32)
    g2 = jnp.ones((1, h2), jnp.float32)
    be2 = jnp.zeros((1, h2), jnp.float32)
    return (w1, b1, g1, be1, w2, b2, g2, be2, w3, b3)


def reference_forward(x, params):
    """Pure f32 reference matching the PyTorch module (eval mode)."""
    w1, b1, g1, be1, w2, b2, g2, be2, w3, b3 = params
    h = x @ w1 + b1
    h = _layernorm(h, g1, be1)
    h = _gelu(h, False)
    h = h @ w2 + b2
    h = _layernorm(h, g2, be2)
    h = _gelu(h, False)
    return h @ w3.T + b3


if __name__ == "__main__":
    # Small shapes consistent with the module (embed -> hidden -> hidden//2 -> 1).
    # batch=512 with the default MXU-aligned tile (256) gives a 2-step grid, so the
    # pipeline / megacore path and the lane-dense output store are both exercised.
    batch, embed_dim, hidden_dim = 512, 128, 256

    key = jax.random.PRNGKey(0)
    kx, kp = jax.random.split(key)
    x = jax.random.normal(kx, (batch, embed_dim), jnp.float32)
    params = init_params(kp, embed_dim, hidden_dim)

    out = enhanced_critic_forward(x, params)
    out = jax.block_until_ready(out)

    ref = reference_forward(x, params)
    assert out.shape == (batch, 1), out.shape
    # bf16 MXU inputs (f32 accumulation) => relaxed tolerance vs the f32 reference.
    assert jnp.allclose(out, ref, atol=2e-2, rtol=2e-2), (out, ref)

    print("KERNEL_OK")
</pallas_src>

<mosaic_0001>
module attributes {stable_mosaic.version = 11 : i64} {
  func.func @critic_kernel(%arg0: i32, %arg1: memref<256x128xf32, #tpu.memory_space<vmem>>, %arg2: memref<128x256xbf16, #tpu.memory_space<vmem>>, %arg3: memref<1x256xf32, #tpu.memory_space<vmem>>, %arg4: memref<1x256xf32, #tpu.memory_space<vmem>>, %arg5: memref<1x256xf32, #tpu.memory_space<vmem>>, %arg6: memref<256x128xbf16, #tpu.memory_space<vmem>>, %arg7: memref<1x128xf32, #tpu.memory_space<vmem>>, %arg8: memref<1x128xf32, #tpu.memory_space<vmem>>, %arg9: memref<1x128xf32, #tpu.memory_space<vmem>>, %arg10: memref<8x128xf32, #tpu.memory_space<vmem>>, %arg11: memref<1x1xf32, #tpu.memory_space<vmem>>, %arg12: memref<1x256xf32, #tpu.memory_space<vmem>>) attributes {dimension_semantics = [#tpu.dimension_semantics<parallel>], iteration_bounds = array<i64: 2>, scalar_prefetch = 0 : i64, scratch_operands = 0 : i64, tpu.core_type = #tpu.core_type<tc>, window_params = [{transform_indices = @transform_0, window_bounds = array<i64: 256, 128>}, {pipeline_mode = #tpu.pipeline_mode<synchronous>, transform_indices = @transform_1, window_bounds = array<i64: 128, 256>}, {pipeline_mode = #tpu.pipeline_mode<synchronous>, transform_indices = @transform_2, window_bounds = array<i64: 1, 256>}, {pipeline_mode = #tpu.pipeline_mode<synchronous>, transform_indices = @transform_3, window_bounds = array<i64: 1, 256>}, {pipeline_mode = #tpu.pipeline_mode<synchronous>, transform_indices = @transform_4, window_bounds = array<i64: 1, 256>}, {pipeline_mode = #tpu.pipeline_mode<synchronous>, transform_indices = @transform_5, window_bounds = array<i64: 256, 128>}, {pipeline_mode = #tpu.pipeline_mode<synchronous>, transform_indices = @transform_6, window_bounds = array<i64: 1, 128>}, {pipeline_mode = #tpu.pipeline_mode<synchronous>, transform_indices = @transform_7, window_bounds = array<i64: 1, 128>}, {pipeline_mode = #tpu.pipeline_mode<synchronous>, transform_indices = @transform_8, window_bounds = array<i64: 1, 128>}, {pipeline_mode = #tpu.pipeline_mode<synchronous>, transform_indices = @transform_9, window_bounds = array<i64: 8, 128>}, {pipeline_mode = #tpu.pipeline_mode<synchronous>, transform_indices = @transform_10, window_bounds = array<i64: 1, 1>}, {transform_indices = @transform_11, window_bounds = array<i64: 1, 256>}]} {
    %c0 = arith.constant 0 : index
    %c0_0 = arith.constant 0 : index
    %0 = vector.load %arg1[%c0, %c0_0] : memref<256x128xf32, #tpu.memory_space<vmem>>, vector<256x128xf32>
    %1 = arith.truncf %0 : vector<256x128xf32> to vector<256x128xbf16>
    %c0_1 = arith.constant 0 : index
    %c0_2 = arith.constant 0 : index
    %2 = vector.load %arg2[%c0_1, %c0_2] : memref<128x256xbf16, #tpu.memory_space<vmem>>, vector<128x256xbf16>
    %cst = arith.constant dense<0.000000e+00> : vector<256x256xf32>
    %3 = tpu.matmul %1, %2, %cst {dimension_numbers = #tpu.dot_dimension_numbers<[1], [0], [0], [1], [0, 0, 1, 1], [], []>} : vector<256x128xbf16>, vector<128x256xbf16>, vector<256x256xf32> -> vector<256x256xf32>
    %c0_3 = arith.constant 0 : index
    %c0_4 = arith.constant 0 : index
    %4 = vector.load %arg3[%c0_3, %c0_4] : memref<1x256xf32, #tpu.memory_space<vmem>>, vector<1x256xf32>
    %5 = vector.broadcast %4 : vector<1x256xf32> to vector<256x256xf32>
    %6 = arith.addf %3, %5 : vector<256x256xf32>
    %c0_5 = arith.constant 0 : index
    %c0_6 = arith.constant 0 : index
    %7 = vector.load %arg4[%c0_5, %c0_6] : memref<1x256xf32, #tpu.memory_space<vmem>>, vector<1x256xf32>
    %c0_7 = arith.constant 0 : index
    %c0_8 = arith.constant 0 : index
    %8 = vector.load %arg5[%c0_7, %c0_8] : memref<1x256xf32, #tpu.memory_space<vmem>>, vector<1x256xf32>
    %cst_9 = arith.constant dense<0.000000e+00> : vector<256xf32>
    %9 = vector.multi_reduction <add>, %6, %cst_9 [1] : vector<256x256xf32> to vector<256xf32>
    %10 = vector.shape_cast %9 : vector<256xf32> to vector<256x1xf32>
    %cst_10 = arith.constant 2.560000e+02 : f32
    %11 = vector.broadcast %cst_10 : f32 to vector<256x1xf32>
    %12 = arith.divf %10, %11 : vector<256x1xf32>
    %13 = vector.broadcast %12 : vector<256x1xf32> to vector<256x256xf32>
    %14 = arith.subf %6, %13 : vector<256x256xf32>
    %15 = arith.mulf %14, %14 : vector<256x256xf32>
    %cst_11 = arith.constant dense<0.000000e+00> : vector<256xf32>
    %16 = vector.multi_reduction <add>, %15, %cst_11 [1] : vector<256x256xf32> to vector<256xf32>
    %17 = vector.shape_cast %16 : vector<256xf32> to vector<256x1xf32>
    %cst_12 = arith.constant 2.560000e+02 : f32
    %18 = vector.broadcast %cst_12 : f32 to vector<256x1xf32>
    %19 = arith.divf %17, %18 : vector<256x1xf32>
    %cst_13 = arith.constant 9.99999974E-6 : f32
    %20 = vector.broadcast %cst_13 : f32 to vector<256x1xf32>
    %21 = arith.addf %19, %20 : vector<256x1xf32>
    %22 = math.rsqrt %21 : vector<256x1xf32>
    %23 = vector.broadcast %22 : vector<256x1xf32> to vector<256x256xf32>
    %24 = arith.mulf %14, %23 : vector<256x256xf32>
    %25 = vector.broadcast %7 : vector<1x256xf32> to vector<256x256xf32>
    %26 = arith.mulf %24, %25 : vector<256x256xf32>
    %27 = vector.broadcast %8 : vector<1x256xf32> to vector<256x256xf32>
    %28 = arith.addf %26, %27 : vector<256x256xf32>
    %cst_14 = arith.constant 5.000000e-01 : f32
    %29 = vector.broadcast %cst_14 : f32 to vector<256x256xf32>
    %30 = arith.mulf %29, %28 : vector<256x256xf32>
    %cst_15 = arith.constant 0.707106769 : f32
    %31 = vector.broadcast %cst_15 : f32 to vector<256x256xf32>
    %32 = arith.mulf %28, %31 : vector<256x256xf32>
    %33 = math.erf %32 : vector<256x256xf32>
    %cst_16 = arith.constant 1.000000e+00 : f32
    %34 = vector.broadcast %cst_16 : f32 to vector<256x256xf32>
    %35 = arith.addf %34, %33 : vector<256x256xf32>
    %36 = arith.mulf %30, %35 : vector<256x256xf32>
    %37 = arith.truncf %36 : vector<256x256xf32> to vector<256x256xbf16>
    %c0_17 = arith.constant 0 : index
    %c0_18 = arith.constant 0 : index
    %38 = vector.load %arg6[%c0_17, %c0_18] : memref<256x128xbf16, #tpu.memory_space<vmem>>, vector<256x128xbf16>
    %cst_19 = arith.constant dense<0.000000e+00> : vector<256x128xf32>
    %39 = tpu.matmul %37, %38, %cst_19 {dimension_numbers = #tpu.dot_dimension_numbers<[1], [0], [0], [1], [0, 0, 1, 1], [], []>} : vector<256x256xbf16>, vector<256x128xbf16>, vector<256x128xf32> -> vector<256x128xf32>
    %c0_20 = arith.constant 0 : index
    %c0_21 = arith.constant 0 : index
    %40 = vector.load %arg7[%c0_20, %c0_21] : memref<1x128xf32, #tpu.memory_space<vmem>>, vector<1x128xf32>
    %41 = vector.broadcast %40 : vector<1x128xf32> to vector<256x128xf32>
    %42 = arith.addf %39, %41 : vector<256x128xf32>
    %c0_22 = arith.constant 0 : index
    %c0_23 = arith.constant 0 : index
    %43 = vector.load %arg8[%c0_22, %c0_23] : memref<1x128xf32, #tpu.memory_space<vmem>>, vector<1x128xf32>
    %c0_24 = arith.constant 0 : index
    %c0_25 = arith.constant 0 : index
    %44 = vector.load %arg9[%c0_24, %c0_25] : memref<1x128xf32, #tpu.memory_space<vmem>>, vector<1x128xf32>
    %cst_26 = arith.constant dense<0.000000e+00> : vector<256xf32>
    %45 = vector.multi_reduction <add>, %42, %cst_26 [1] : vector<256x128xf32> to vector<256xf32>
    %46 = vector.shape_cast %45 : vector<256xf32> to vector<256x1xf32>
    %cst_27 = arith.constant 1.280000e+02 : f32
    %47 = vector.broadcast %cst_27 : f32 to vector<256x1xf32>
    %48 = arith.divf %46, %47 : vector<256x1xf32>
    %49 = vector.broadcast %48 : vector<256x1xf32> to vector<256x128xf32>
    %50 = arith.subf %42, %49 : vector<256x128xf32>
    %51 = arith.mulf %50, %50 : vector<256x128xf32>
    %cst_28 = arith.constant dense<0.000000e+00> : vector<256xf32>
    %52 = vector.multi_reduction <add>, %51, %cst_28 [1] : vector<256x128xf32> to vector<256xf32>
    %53 = vector.shape_cast %52 : vector<256xf32> to vector<256x1xf32>
    %cst_29 = arith.constant 1.280000e+02 : f32
    %54 = vector.broadcast %cst_29 : f32 to vector<256x1xf32>
    %55 = arith.divf %53, %54 : vector<256x1xf32>
    %cst_30 = arith.constant 9.99999974E-6 : f32
    %56 = vector.broadcast %cst_30 : f32 to vector<256x1xf32>
    %57 = arith.addf %55, %56 : vector<256x1xf32>
    %58 = math.rsqrt %57 : vector<256x1xf32>
    %59 = vector.broadcast %58 : vector<256x1xf32> to vector<256x128xf32>
    %60 = arith.mulf %50, %59 : vector<256x128xf32>
    %61 = vector.broadcast %43 : vector<1x128xf32> to vector<256x128xf32>
    %62 = arith.mulf %60, %61 : vector<256x128xf32>
    %63 = vector.broadcast %44 : vector<1x128xf32> to vector<256x128xf32>
    %64 = arith.addf %62, %63 : vector<256x128xf32>
    %cst_31 = arith.constant 5.000000e-01 : f32
    %65 = vector.broadcast %cst_31 : f32 to vector<256x128xf32>
    %66 = arith.mulf %65, %64 : vector<256x128xf32>
    %cst_32 = arith.constant 0.707106769 : f32
    %67 = vector.broadcast %cst_32 : f32 to vector<256x128xf32>
    %68 = arith.mulf %64, %67 : vector<256x128xf32>
    %69 = math.erf %68 : vector<256x128xf32>
    %cst_33 = arith.constant 1.000000e+00 : f32
    %70 = vector.broadcast %cst_33 : f32 to vector<256x128xf32>
    %71 = arith.addf %70, %69 : vector<256x128xf32>
    %72 = arith.mulf %66, %71 : vector<256x128xf32>
    %c0_34 = arith.constant 0 : index
    %c0_35 = arith.constant 0 : index
    %73 = vector.load %arg10[%c0_34, %c0_35] : memref<8x128xf32, #tpu.memory_space<vmem>>, vector<8x128xf32>
    %cst_36 = arith.constant dense<0.000000e+00> : vector<8x256xf32>
    %74 = tpu.matmul %73, %72, %cst_36 {dimension_numbers = #tpu.dot_dimension_numbers<[1], [1], [0], [0], [0, 0, 1, 0], [], []>} : vector<8x128xf32>, vector<256x128xf32>, vector<8x256xf32> -> vector<8x256xf32>
    %75 = vector.extract_strided_slice %74 {offsets = [0, 0], sizes = [1, 256], strides = [1, 1]} : vector<8x256xf32> to vector<1x256xf32>
    %c0_37 = arith.constant 0 : index
    %c0_38 = arith.constant 0 : index
    %76 = vector.load %arg11[%c0_37, %c0_38] : memref<1x1xf32, #tpu.memory_space<vmem>>, vector<1x1xf32>
    %77 = vector.broadcast %76 : vector<1x1xf32> to vector<1x256xf32>
    %78 = arith.addf %75, %77 : vector<1x256xf32>
    %c0_39 = arith.constant 0 : index
    %c0_40 = arith.constant 0 : index
    %79 = vector.load %arg12[%c0_39, %c0_40] : memref<1x256xf32, #tpu.memory_space<vmem>>, vector<1x256xf32>
    tpu.vector_store %arg12[%c0_39, %c0_40], %78 {strides = array<i32>} : memref<1x256xf32, #tpu.memory_space<vmem>>, vector<1x256xf32>,
    return
  }
  func.func @transform_0(%arg0: i32) -> (i32, i32) {
    %c0_i32 = arith.constant 0 : i32
    %c0_i32_0 = arith.constant 0 : i32
    return %arg0, %c0_i32 : i32, i32
  }
  func.func @transform_1(%arg0: i32) -> (i32, i32) {
    %c0_i32 = arith.constant 0 : i32
    %c0_i32_0 = arith.constant 0 : i32
    %c0_i32_1 = arith.constant 0 : i32
    return %c0_i32, %c0_i32_0 : i32, i32
  }
  func.func @transform_2(%arg0: i32) -> (i32, i32) {
    %c0_i32 = arith.constant 0 : i32
    %c0_i32_0 = arith.constant 0 : i32
    %c0_i32_1 = arith.constant 0 : i32
    return %c0_i32, %c0_i32_0 : i32, i32
  }
  func.func @transform_3(%arg0: i32) -> (i32, i32) {
    %c0_i32 = arith.constant 0 : i32
    %c0_i32_0 = arith.constant 0 : i32
    %c0_i32_1 = arith.constant 0 : i32
    return %c0_i32, %c0_i32_0 : i32, i32
  }
  func.func @transform_4(%arg0: i32) -> (i32, i32) {
    %c0_i32 = arith.constant 0 : i32
    %c0_i32_0 = arith.constant 0 : i32
    %c0_i32_1 = arith.constant 0 : i32
    return %c0_i32, %c0_i32_0 : i32, i32
  }
  func.func @transform_5(%arg0: i32) -> (i32, i32) {
    %c0_i32 = arith.constant 0 : i32
    %c0_i32_0 = arith.constant 0 : i32
    %c0_i32_1 = arith.constant 0 : i32
    return %c0_i32, %c0_i32_0 : i32, i32
  }
  func.func @transform_6(%arg0: i32) -> (i32, i32) {
    %c0_i32 = arith.constant 0 : i32
    %c0_i32_0 = arith.constant 0 : i32
    %c0_i32_1 = arith.constant 0 : i32
    return %c0_i32, %c0_i32_0 : i32, i32
  }
  func.func @transform_7(%arg0: i32) -> (i32, i32) {
    %c0_i32 = arith.constant 0 : i32
    %c0_i32_0 = arith.constant 0 : i32
    %c0_i32_1 = arith.constant 0 : i32
    return %c0_i32, %c0_i32_0 : i32, i32
  }
  func.func @transform_8(%arg0: i32) -> (i32, i32) {
    %c0_i32 = arith.constant 0 : i32
    %c0_i32_0 = arith.constant 0 : i32
    %c0_i32_1 = arith.constant 0 : i32
    return %c0_i32, %c0_i32_0 : i32, i32
  }
  func.func @transform_9(%arg0: i32) -> (i32, i32) {
    %c0_i32 = arith.constant 0 : i32
    %c0_i32_0 = arith.constant 0 : i32
    %c0_i32_1 = arith.constant 0 : i32
    return %c0_i32, %c0_i32_0 : i32, i32
  }
  func.func @transform_10(%arg0: i32) -> (i32, i32) {
    %c0_i32 = arith.constant 0 : i32
    %c0_i32_0 = arith.constant 0 : i32
    %c0_i32_1 = arith.constant 0 : i32
    return %c0_i32, %c0_i32_0 : i32, i32
  }
  func.func @transform_11(%arg0: i32) -> (i32, i32) {
    %c0_i32 = arith.constant 0 : i32
    %c0_i32_0 = arith.constant 0 : i32
    return %c0_i32, %arg0 : i32, i32
  }
}

module attributes {stable_mosaic.version = 11 : i64} {
  func.func @critic_kernel(%arg0: i32, %arg1: memref<256x128xf32, #tpu.memory_space<vmem>>, %arg2: memref<128x256xbf16, #tpu.memory_space<vmem>>, %arg3: memref<1x256xf32, #tpu.memory_space<vmem>>, %arg4: memref<1x256xf32, #tpu.memory_space<vmem>>, %arg5: memref<1x256xf32, #tpu.memory_space<vmem>>, %arg6: memref<256x128xbf16, #tpu.memory_space<vmem>>, %arg7: memref<1x128xf32, #tpu.memory_space<vmem>>, %arg8: memref<1x128xf32, #tpu.memory_space<vmem>>, %arg9: memref<1x128xf32, #tpu.memory_space<vmem>>, %arg10: memref<8x128xf32, #tpu.memory_space<vmem>>, %arg11: memref<1x1xf32, #tpu.memory_space<vmem>>, %arg12: memref<1x256xf32, #tpu.memory_space<vmem>>) attributes {dimension_semantics = [#tpu.dimension_semantics<parallel>], iteration_bounds = array<i64: 2>, scalar_prefetch = 0 : i64, scratch_operands = 0 : i64, tpu.core_type = #tpu.core_type<tc>, window_params = [{transform_indices = @transform_0, window_bounds = array<i64: 256, 128>}, {pipeline_mode = #tpu.pipeline_mode<synchronous>, transform_indices = @transform_1, window_bounds = array<i64: 128, 256>}, {pipeline_mode = #tpu.pipeline_mode<synchronous>, transform_indices = @transform_2, window_bounds = array<i64: 1, 256>}, {pipeline_mode = #tpu.pipeline_mode<synchronous>, transform_indices = @transform_3, window_bounds = array<i64: 1, 256>}, {pipeline_mode = #tpu.pipeline_mode<synchronous>, transform_indices = @transform_4, window_bounds = array<i64: 1, 256>}, {pipeline_mode = #tpu.pipeline_mode<synchronous>, transform_indices = @transform_5, window_bounds = array<i64: 256, 128>}, {pipeline_mode = #tpu.pipeline_mode<synchronous>, transform_indices = @transform_6, window_bounds = array<i64: 1, 128>}, {pipeline_mode = #tpu.pipeline_mode<synchronous>, transform_indices = @transform_7, window_bounds = array<i64: 1, 128>}, {pipeline_mode = #tpu.pipeline_mode<synchronous>, transform_indices = @transform_8, window_bounds = array<i64: 1, 128>}, {pipeline_mode = #tpu.pipeline_mode<synchronous>, transform_indices = @transform_9, window_bounds = array<i64: 8, 128>}, {pipeline_mode = #tpu.pipeline_mode<synchronous>, transform_indices = @transform_10, window_bounds = array<i64: 1, 1>}, {transform_indices = @transform_11, window_bounds = array<i64: 1, 256>}]} {
    %c0 = arith.constant 0 : index
    %c0_0 = arith.constant 0 : index
    %0 = vector.load %arg1[%c0, %c0_0] : memref<256x128xf32, #tpu.memory_space<vmem>>, vector<256x128xf32>
    %1 = arith.truncf %0 : vector<256x128xf32> to vector<256x128xbf16>
    %c0_1 = arith.constant 0 : index
    %c0_2 = arith.constant 0 : index
    %2 = vector.load %arg2[%c0_1, %c0_2] : memref<128x256xbf16, #tpu.memory_space<vmem>>, vector<128x256xbf16>
    %cst = arith.constant dense<0.000000e+00> : vector<256x256xf32>
    %3 = tpu.matmul %1, %2, %cst {dimension_numbers = #tpu.dot_dimension_numbers<[1], [0], [0], [1], [0, 0, 1, 1], [], []>} : vector<256x128xbf16>, vector<128x256xbf16>, vector<256x256xf32> -> vector<256x256xf32>
    %c0_3 = arith.constant 0 : index
    %c0_4 = arith.constant 0 : index
    %4 = vector.load %arg3[%c0_3, %c0_4] : memref<1x256xf32, #tpu.memory_space<vmem>>, vector<1x256xf32>
    %5 = vector.broadcast %4 : vector<1x256xf32> to vector<256x256xf32>
    %6 = arith.addf %3, %5 : vector<256x256xf32>
    %c0_5 = arith.constant 0 : index
    %c0_6 = arith.constant 0 : index
    %7 = vector.load %arg4[%c0_5, %c0_6] : memref<1x256xf32, #tpu.memory_space<vmem>>, vector<1x256xf32>
    %c0_7 = arith.constant 0 : index
    %c0_8 = arith.constant 0 : index
    %8 = vector.load %arg5[%c0_7, %c0_8] : memref<1x256xf32, #tpu.memory_space<vmem>>, vector<1x256xf32>
    %cst_9 = arith.constant dense<0.000000e+00> : vector<256xf32>
    %9 = vector.multi_reduction <add>, %6, %cst_9 [1] : vector<256x256xf32> to vector<256xf32>
    %10 = vector.shape_cast %9 : vector<256xf32> to vector<256x1xf32>
    %cst_10 = arith.constant 2.560000e+02 : f32
    %11 = vector.broadcast %cst_10 : f32 to vector<256x1xf32>
    %12 = arith.divf %10, %11 : vector<256x1xf32>
    %13 = vector.broadcast %12 : vector<256x1xf32> to vector<256x256xf32>
    %14 = arith.subf %6, %13 : vector<256x256xf32>
    %15 = arith.mulf %14, %14 : vector<256x256xf32>
    %cst_11 = arith.constant dense<0.000000e+00> : vector<256xf32>
    %16 = vector.multi_reduction <add>, %15, %cst_11 [1] : vector<256x256xf32> to vector<256xf32>
    %17 = vector.shape_cast %16 : vector<256xf32> to vector<256x1xf32>
    %cst_12 = arith.constant 2.560000e+02 : f32
    %18 = vector.broadcast %cst_12 : f32 to vector<256x1xf32>
    %19 = arith.divf %17, %18 : vector<256x1xf32>
    %cst_13 = arith.constant 9.99999974E-6 : f32
    %20 = vector.broadcast %cst_13 : f32 to vector<256x1xf32>
    %21 = arith.addf %19, %20 : vector<256x1xf32>
    %22 = math.rsqrt %21 : vector<256x1xf32>
    %23 = vector.broadcast %22 : vector<256x1xf32> to vector<256x256xf32>
    %24 = arith.mulf %14, %23 : vector<256x256xf32>
    %25 = vector.broadcast %7 : vector<1x256xf32> to vector<256x256xf32>
    %26 = arith.mulf %24, %25 : vector<256x256xf32>
    %27 = vector.broadcast %8 : vector<1x256xf32> to vector<256x256xf32>
    %28 = arith.addf %26, %27 : vector<256x256xf32>
    %cst_14 = arith.constant 5.000000e-01 : f32
    %29 = vector.broadcast %cst_14 : f32 to vector<256x256xf32>
    %30 = arith.mulf %29, %28 : vector<256x256xf32>
    %cst_15 = arith.constant 0.707106769 : f32
    %31 = vector.broadcast %cst_15 : f32 to vector<256x256xf32>
    %32 = arith.mulf %28, %31 : vector<256x256xf32>
    %33 = math.erf %32 : vector<256x256xf32>
    %cst_16 = arith.constant 1.000000e+00 : f32
    %34 = vector.broadcast %cst_16 : f32 to vector<256x256xf32>
    %35 = arith.addf %34, %33 : vector<256x256xf32>
    %36 = arith.mulf %30, %35 : vector<256x256xf32>
    %37 = arith.truncf %36 : vector<256x256xf32> to vector<256x256xbf16>
    %c0_17 = arith.constant 0 : index
    %c0_18 = arith.constant 0 : index
    %38 = vector.load %arg6[%c0_17, %c0_18] : memref<256x128xbf16, #tpu.memory_space<vmem>>, vector<256x128xbf16>
    %cst_19 = arith.constant dense<0.000000e+00> : vector<256x128xf32>
    %39 = tpu.matmul %37, %38, %cst_19 {dimension_numbers = #tpu.dot_dimension_numbers<[1], [0], [0], [1], [0, 0, 1, 1], [], []>} : vector<256x256xbf16>, vector<256x128xbf16>, vector<256x128xf32> -> vector<256x128xf32>
    %c0_20 = arith.constant 0 : index
    %c0_21 = arith.constant 0 : index
    %40 = vector.load %arg7[%c0_20, %c0_21] : memref<1x128xf32, #tpu.memory_space<vmem>>, vector<1x128xf32>
    %41 = vector.broadcast %40 : vector<1x128xf32> to vector<256x128xf32>
    %42 = arith.addf %39, %41 : vector<256x128xf32>
    %c0_22 = arith.constant 0 : index
    %c0_23 = arith.constant 0 : index
    %43 = vector.load %arg8[%c0_22, %c0_23] : memref<1x128xf32, #tpu.memory_space<vmem>>, vector<1x128xf32>
    %c0_24 = arith.constant 0 : index
    %c0_25 = arith.constant 0 : index
    %44 = vector.load %arg9[%c0_24, %c0_25] : memref<1x128xf32, #tpu.memory_space<vmem>>, vector<1x128xf32>
    %cst_26 = arith.constant dense<0.000000e+00> : vector<256xf32>
    %45 = vector.multi_reduction <add>, %42, %cst_26 [1] : vector<256x128xf32> to vector<256xf32>
    %46 = vector.shape_cast %45 : vector<256xf32> to vector<256x1xf32>
    %cst_27 = arith.constant 1.280000e+02 : f32
    %47 = vector.broadcast %cst_27 : f32 to vector<256x1xf32>
    %48 = arith.divf %46, %47 : vector<256x1xf32>
    %49 = vector.broadcast %48 : vector<256x1xf32> to vector<256x128xf32>
    %50 = arith.subf %42, %49 : vector<256x128xf32>
    %51 = arith.mulf %50, %50 : vector<256x128xf32>
    %cst_28 = arith.constant dense<0.000000e+00> : vector<256xf32>
    %52 = vector.multi_reduction <add>, %51, %cst_28 [1] : vector<256x128xf32> to vector<256xf32>
    %53 = vector.shape_cast %52 : vector<256xf32> to vector<256x1xf32>
    %cst_29 = arith.constant 1.280000e+02 : f32
    %54 = vector.broadcast %cst_29 : f32 to vector<256x1xf32>
    %55 = arith.divf %53, %54 : vector<256x1xf32>
    %cst_30 = arith.constant 9.99999974E-6 : f32
    %56 = vector.broadcast %cst_30 : f32 to vector<256x1xf32>
    %57 = arith.addf %55, %56 : vector<256x1xf32>
    %58 = math.rsqrt %57 : vector<256x1xf32>
    %59 = vector.broadcast %58 : vector<256x1xf32> to vector<256x128xf32>
    %60 = arith.mulf %50, %59 : vector<256x128xf32>
    %61 = vector.broadcast %43 : vector<1x128xf32> to vector<256x128xf32>
    %62 = arith.mulf %60, %61 : vector<256x128xf32>
    %63 = vector.broadcast %44 : vector<1x128xf32> to vector<256x128xf32>
    %64 = arith.addf %62, %63 : vector<256x128xf32>
    %cst_31 = arith.constant 5.000000e-01 : f32
    %65 = vector.broadcast %cst_31 : f32 to vector<256x128xf32>
    %66 = arith.mulf %65, %64 : vector<256x128xf32>
    %cst_32 = arith.constant 0.707106769 : f32
    %67 = vector.broadcast %cst_32 : f32 to vector<256x128xf32>
    %68 = arith.mulf %64, %67 : vector<256x128xf32>
    %69 = math.erf %68 : vector<256x128xf32>
    %cst_33 = arith.constant 1.000000e+00 : f32
    %70 = vector.broadcast %cst_33 : f32 to vector<256x128xf32>
    %71 = arith.addf %70, %69 : vector<256x128xf32>
    %72 = arith.mulf %66, %71 : vector<256x128xf32>
    %c0_34 = arith.constant 0 : index
    %c0_35 = arith.constant 0 : index
    %73 = vector.load %arg10[%c0_34, %c0_35] : memref<8x128xf32, #tpu.memory_space<vmem>>, vector<8x128xf32>
    %cst_36 = arith.constant dense<0.000000e+00> : vector<8x256xf32>
    %74 = tpu.matmul %73, %72, %cst_36 {dimension_numbers = #tpu.dot_dimension_numbers<[1], [1], [0], [0], [0, 0, 1, 0], [], []>} : vector<8x128xf32>, vector<256x128xf32>, vector<8x256xf32> -> vector<8x256xf32>
    %75 = vector.extract_strided_slice %74 {offsets = [0, 0], sizes = [1, 256], strides = [1, 1]} : vector<8x256xf32> to vector<1x256xf32>
    %c0_37 = arith.constant 0 : index
    %c0_38 = arith.constant 0 : index
    %76 = vector.load %arg11[%c0_37, %c0_38] : memref<1x1xf32, #tpu.memory_space<vmem>>, vector<1x1xf32>
    %77 = vector.broadcast %76 : vector<1x1xf32> to vector<1x256xf32>
    %78 = arith.addf %75, %77 : vector<1x256xf32>
    %c0_39 = arith.constant 0 : index
    %c0_40 = arith.constant 0 : index
    %79 = vector.load %arg12[%c0_39, %c0_40] : memref<1x256xf32, #tpu.memory_space<vmem>>, vector<1x256xf32>
    tpu.vector_store %arg12[%c0_39, %c0_40], %78 {strides = array<i32>} : memref<1x256xf32, #tpu.memory_space<vmem>>, vector<1x256xf32>,
    return
  }
  func.func @transform_0(%arg0: i32) -> (i32, i32) {
    %c0_i32 = arith.constant 0 : i32
    %c0_i32_0 = arith.constant 0 : i32
    return %arg0, %c0_i32 : i32, i32
  }
  func.func @transform_1(%arg0: i32) -> (i32, i32) {
    %c0_i32 = arith.constant 0 : i32
    %c0_i32_0 = arith.constant 0 : i32
    %c0_i32_1 = arith.constant 0 : i32
    return %c0_i32, %c0_i32_0 : i32, i32
  }
  func.func @transform_2(%arg0: i32) -> (i32, i32) {
    %c0_i32 = arith.constant 0 : i32
    %c0_i32_0 = arith.constant 0 : i32
    %c0_i32_1 = arith.constant 0 : i32
    return %c0_i32, %c0_i32_0 : i32, i32
  }
  func.func @transform_3(%arg0: i32) -> (i32, i32) {
    %c0_i32 = arith.constant 0 : i32
    %c0_i32_0 = arith.constant 0 : i32
    %c0_i32_1 = arith.constant 0 : i32
    return %c0_i32, %c0_i32_0 : i32, i32
  }
  func.func @transform_4(%arg0: i32) -> (i32, i32) {
    %c0_i32 = arith.constant 0 : i32
    %c0_i32_0 = arith.constant 0 : i32
    %c0_i32_1 = arith.constant 0 : i32
    return %c0_i32, %c0_i32_0 : i32, i32
  }
  func.func @transform_5(%arg0: i32) -> (i32, i32) {
    %c0_i32 = arith.constant 0 : i32
    %c0_i32_0 = arith.constant 0 : i32
    %c0_i32_1 = arith.constant 0 : i32
    return %c0_i32, %c0_i32_0 : i32, i32
  }
  func.func @transform_6(%arg0: i32) -> (i32, i32) {
    %c0_i32 = arith.constant 0 : i32
    %c0_i32_0 = arith.constant 0 : i32
    %c0_i32_1 = arith.constant 0 : i32
    return %c0_i32, %c0_i32_0 : i32, i32
  }
  func.func @transform_7(%arg0: i32) -> (i32, i32) {
    %c0_i32 = arith.constant 0 : i32
    %c0_i32_0 = arith.constant 0 : i32
    %c0_i32_1 = arith.constant 0 : i32
    return %c0_i32, %c0_i32_0 : i32, i32
  }
  func.func @transform_8(%arg0: i32) -> (i32, i32) {
    %c0_i32 = arith.constant 0 : i32
    %c0_i32_0 = arith.constant 0 : i32
    %c0_i32_1 = arith.constant 0 : i32
    return %c0_i32, %c0_i32_0 : i32, i32
  }
  func.func @transform_9(%arg0: i32) -> (i32, i32) {
    %c0_i32 = arith.constant 0 : i32
    %c0_i32_0 = arith.constant 0 : i32
    %c0_i32_1 = arith.constant 0 : i32
    return %c0_i32, %c0_i32_0 : i32, i32
  }
  func.func @transform_10(%arg0: i32) -> (i32, i32) {
    %c0_i32 = arith.constant 0 : i32
    %c0_i32_0 = arith.constant 0 : i32
    %c0_i32_1 = arith.constant 0 : i32
    return %c0_i32, %c0_i32_0 : i32, i32
  }
  func.func @transform_11(%arg0: i32) -> (i32, i32) {
    %c0_i32 = arith.constant 0 : i32
    %c0_i32_0 = arith.constant 0 : i32
    return %c0_i32, %arg0 : i32, i32
  }
}

</mosaic_0001>

<llo_original>
// kernel: tpu_custom_call.1
$region0: #{tpu_custom_call.1}
  #allocation0 [shape = 'u32[]', space=smem, size = 0x4, offset = 0x4, fixed_abs, tag = 'smem constant byte address 0x4 - core index']
  #allocation1 [shape = 'u32[144,128]{1,0:T(1,128)}', space=vmem, size = 0x12000, scoped, tag = 'internal scratch']
  #allocation2 [shape = 'f32[1,1]{1,0:T(1,128)S(1)}', space=vmem, size = 0x200, scoped, tag = 'scoped memory for tpu_custom_call.1']
  %s0 = inlined_call_operand.hbm [shape: f32[512,128], index: 0, kind: input, shape index: {}]
  %s1 = inlined_call_operand.hbm [shape: bf16[128,256], index: 1, kind: input, shape index: {}]
  %s2 = inlined_call_operand.vmem [shape: f32[1,256], index: 2, kind: input, shape index: {}]
  %s3 = inlined_call_operand.vmem [shape: f32[1,256], index: 3, kind: input, shape index: {}]
  %s4 = inlined_call_operand.vmem [shape: f32[1,256], index: 4, kind: input, shape index: {}]
  %s5 = inlined_call_operand.hbm [shape: bf16[256,128], index: 5, kind: input, shape index: {}]
  %s6 = inlined_call_operand.vmem [shape: f32[1,128], index: 6, kind: input, shape index: {}]
  %s7 = inlined_call_operand.vmem [shape: f32[1,128], index: 7, kind: input, shape index: {}]
  %s8 = inlined_call_operand.vmem [shape: f32[1,128], index: 8, kind: input, shape index: {}]
  %s9 = inlined_call_operand.vmem [shape: f32[8,128], index: 9, kind: input, shape index: {}]
  %s10 = inlined_call_operand.<no memory space> [shape: f32[1,1], index: 10, kind: input, shape index: {}]
  %s11 = inlined_call_operand.hbm [shape: f32[1,512], index: 11, kind: output, shape index: {}]
  %s12 = sld [smem:[#allocation0]]
  $region89: #{tpu_custom_call.1} parent=0
    _
  %s14 = ssub.s32 1, %s12
  %s15 = scalar_select 0, %s14, %s12
  %v16 = vstv %s10
  %17 = vst [vmem:[#allocation2] sm:$0x1] %v16
  $region1: #{tpu_custom_call.1} parent=0
    #allocation3 [shape = 'u8[262144]{0}', space=vmem, size = 0x40000, scoped, tag = 'input window, operand 0']
    #allocation4 [shape = 's32[2]{0}', space=sflag, size = 0x8, scoped, tag = 'scoped memory for tpu_custom_call.1']
    #allocation5 [shape = 's32[2]{0}', space=sflag, size = 0x8, scoped, tag = 'scoped memory for tpu_custom_call.1']
    #allocation6 [shape = 'u8[65536]{0}', space=vmem, size = 0x10000, scoped, tag = 'input window, operand 1, single buffered']
    #allocation7 [shape = 's32[1]{0}', space=sflag, size = 0x4, scoped, tag = 'scoped memory for tpu_custom_call.1']
    #allocation8 [shape = 'u8[65536]{0}', space=vmem, size = 0x10000, scoped, tag = 'input window, operand 5, single buffered']
    #allocation9 [shape = 'u8[2048]{0}', space=vmem, size = 0x800, scoped, tag = 'output window, operand 0']
    %18 = vsyncpa [#allocation4], 0
    %s19 = scalar_lea.sflag [#allocation4], 1
    %20 = vsyncpa %s19, 0
    %21 = vsyncpa [#allocation7], 0
    %22 = vsyncpa [#allocation5], 0
    %s23 = scalar_lea.sflag [#allocation5], 1
    %24 = vsyncpa %s23, 0
    loop: start=0, step=1, limit=4
    $region2: #{tpu_custom_call.1} parent=1 // loop_pre_header
      _
    $region3: #{tpu_custom_call.1} parent=1 // loop_header
      %s26 = sphi 0, %s30
      %p27 = scmp.ge.s32.totalorder %s26, 4
      %s36 = sphi 0, %s38
      %s39 = sphi 0, %s36
      %s40 = sphi 0, %s39
      %s56 = sphi 0, %s40
      %s60 = sphi 0, %s60
      %s62 = sphi 0, %s60
      %s63 = sphi 0, %s62
      %s77 = sphi 0, %s63
      %s81 = sphi 0, %s81
      %s83 = sphi 0, %s81
      %s84 = sphi 0, %s83
      %s98 = sphi 0, %s84
      %s102 = sphi 0, %s102
      %s104 = sphi 0, %s102
      %s105 = sphi 0, %s104
      %s119 = sphi 0, %s105
      %s123 = sphi 0, %s123
      %s125 = sphi 0, %s123
      %s126 = sphi 0, %s125
      %s140 = sphi 0, %s126
      %s144 = sphi 0, %s144
      %s146 = sphi 0, %s144
      %s147 = sphi 0, %s146
      %s161 = sphi 0, %s147
      %s165 = sphi 0, %s165
      %s167 = sphi 0, %s165
      %s168 = sphi 0, %s167
      %s182 = sphi 0, %s168
      %s186 = sphi 0, %s186
      %s188 = sphi 0, %s186
      %s189 = sphi 0, %s188
      %s203 = sphi 0, %s189
      %s207 = sphi 0, %s207
      %s209 = sphi 0, %s207
      %s210 = sphi 0, %s209
      %s224 = sphi 0, %s210
      %s228 = sphi 0, %s228
      %s230 = sphi 0, %s228
      %s231 = sphi 0, %s230
      %s245 = sphi 0, %s231
      %s249 = sphi 0, %s249
      %s251 = sphi 0, %s249
      %s252 = sphi 0, %s251
      %s266 = sphi 0, %s252
      %s272 = sphi 0, %s274
      %s275 = sphi 0, %s272
      %s276 = sphi 0, %s275
      %s292 = sphi 0, %s276
    $region4: #{tpu_custom_call.1} parent=1 // loop_header_branch
      %29 = sbr.rel (%p27) target = $region8
    $region5: #{tpu_custom_call.1} parent=1 // loop_body
      %s31 = ssub.s32 %s26, 1
      %s32 = ssub.s32 %s26, 2
      %s33 = sadd.s32 %s26, 1
      %s34 = ssub.s32 %s26, %s33
      %p35 = scmp.eq.s32.totalorder %s34, 0
      %s37 = sadd.s32 %s36, 1
      %s38 = scalar_select %p35, %s36, %s37
      %p41 = pneg %p35
      %p42 = scmp.eq.s32.totalorder %s26, 1
      %p43 = por %p41, %p42
      %p44 = scmp.ne.s32.totalorder %s36, %s39
      %p45 = scmp.eq.s32.totalorder %s26, 0
      %p46 = por %p44, %p45
      %p47 = scmp.ne.s32.totalorder %s36, %s39
      %p48 = scmp.eq.s32.totalorder %s31, 1
      %p49 = por %p47, %p48
      %p50 = scmp.ne.s32.totalorder %s39, %s40
      %p51 = scmp.eq.s32.totalorder %s31, 0
      %p52 = por %p50, %p51
      %p53 = scmp.ne.s32.totalorder %s39, %s40
      %p54 = scmp.eq.s32.totalorder %s32, 1
      %p55 = por %p53, %p54
      %p57 = scmp.ne.s32.totalorder %s40, %s56
      %p58 = scmp.eq.s32.totalorder %s32, 0
      %p59 = por %p57, %p58
      %s61 = sadd.s32 %s60, 1
      %p64 = scmp.eq.s32.totalorder %s26, 1
      %p65 = scmp.ne.s32.totalorder %s60, %s62
      %p66 = scmp.eq.s32.totalorder %s26, 0
      %p67 = por %p65, %p66
      %p68 = scmp.ne.s32.totalorder %s60, %s62
      %p69 = scmp.eq.s32.totalorder %s31, 1
      %p70 = por %p68, %p69
      %p71 = scmp.ne.s32.totalorder %s62, %s63
      %p72 = scmp.eq.s32.totalorder %s31, 0
      %p73 = por %p71, %p72
      %p74 = scmp.ne.s32.totalorder %s62, %s63
      %p75 = scmp.eq.s32.totalorder %s32, 1
      %p76 = por %p74, %p75
      %p78 = scmp.ne.s32.totalorder %s63, %s77
      %p79 = scmp.eq.s32.totalorder %s32, 0
      %p80 = por %p78, %p79
      %s82 = sadd.s32 %s81, 1
      %p85 = scmp.eq.s32.totalorder %s26, 1
      %p86 = scmp.ne.s32.totalorder %s81, %s83
      %p87 = scmp.eq.s32.totalorder %s26, 0
      %p88 = por %p86, %p87
      %p89 = scmp.ne.s32.totalorder %s81, %s83
      %p90 = scmp.eq.s32.totalorder %s31, 1
      %p91 = por %p89, %p90
      %p92 = scmp.ne.s32.totalorder %s83, %s84
      %p93 = scmp.eq.s32.totalorder %s31, 0
      %p94 = por %p92, %p93
      %p95 = scmp.ne.s32.totalorder %s83, %s84
      %p96 = scmp.eq.s32.totalorder %s32, 1
      %p97 = por %p95, %p96
      %p99 = scmp.ne.s32.totalorder %s84, %s98
      %p100 = scmp.eq.s32.totalorder %s32, 0
      %p101 = por %p99, %p100
      %s103 = sadd.s32 %s102, 1
      %p106 = scmp.eq.s32.totalorder %s26, 1
      %p107 = scmp.ne.s32.totalorder %s102, %s104
      %p108 = scmp.eq.s32.totalorder %s26, 0
      %p109 = por %p107, %p108
      %p110 = scmp.ne.s32.totalorder %s102, %s104
      %p111 = scmp.eq.s32.totalorder %s31, 1
      %p112 = por %p110, %p111
      %p113 = scmp.ne.s32.totalorder %s104, %s105
      %p114 = scmp.eq.s32.totalorder %s31, 0
      %p115 = por %p113, %p114
      %p116 = scmp.ne.s32.totalorder %s104, %s105
      %p117 = scmp.eq.s32.totalorder %s32, 1
      %p118 = por %p116, %p117
      %p120 = scmp.ne.s32.totalorder %s105, %s119
      %p121 = scmp.eq.s32.totalorder %s32, 0
      %p122 = por %p120, %p121
      %s124 = sadd.s32 %s123, 1
      %p127 = scmp.eq.s32.totalorder %s26, 1
      %p128 = scmp.ne.s32.totalorder %s123, %s125
      %p129 = scmp.eq.s32.totalorder %s26, 0
      %p130 = por %p128, %p129
      %p131 = scmp.ne.s32.totalorder %s123, %s125
      %p132 = scmp.eq.s32.totalorder %s31, 1
      %p133 = por %p131, %p132
      %p134 = scmp.ne.s32.totalorder %s125, %s126
      %p135 = scmp.eq.s32.totalorder %s31, 0
      %p136 = por %p134, %p135
      %p137 = scmp.ne.s32.totalorder %s125, %s126
      %p138 = scmp.eq.s32.totalorder %s32, 1
      %p139 = por %p137, %p138
      %p141 = scmp.ne.s32.totalorder %s126, %s140
      %p142 = scmp.eq.s32.totalorder %s32, 0
      %p143 = por %p141, %p142
      %s145 = sadd.s32 %s144, 1
      %p148 = scmp.eq.s32.totalorder %s26, 1
      %p149 = scmp.ne.s32.totalorder %s144, %s146
      %p150 = scmp.eq.s32.totalorder %s26, 0
      %p151 = por %p149, %p150
      %p152 = scmp.ne.s32.totalorder %s144, %s146
      %p153 = scmp.eq.s32.totalorder %s31, 1
      %p154 = por %p152, %p153
      %p155 = scmp.ne.s32.totalorder %s146, %s147
      %p156 = scmp.eq.s32.totalorder %s31, 0
      %p157 = por %p155, %p156
      %p158 = scmp.ne.s32.totalorder %s146, %s147
      %p159 = scmp.eq.s32.totalorder %s32, 1
      %p160 = por %p158, %p159
      %p162 = scmp.ne.s32.totalorder %s147, %s161
      %p163 = scmp.eq.s32.totalorder %s32, 0
      %p164 = por %p162, %p163
      %s166 = sadd.s32 %s165, 1
      %p169 = scmp.eq.s32.totalorder %s26, 1
      %p170 = scmp.ne.s32.totalorder %s165, %s167
      %p171 = scmp.eq.s32.totalorder %s26, 0
      %p172 = por %p170, %p171
      %p173 = scmp.ne.s32.totalorder %s165, %s167
      %p174 = scmp.eq.s32.totalorder %s31, 1
      %p175 = por %p173, %p174
      %p176 = scmp.ne.s32.totalorder %s167, %s168
      %p177 = scmp.eq.s32.totalorder %s31, 0
      %p178 = por %p176, %p177
      %p179 = scmp.ne.s32.totalorder %s167, %s168
      %p180 = scmp.eq.s32.totalorder %s32, 1
      %p181 = por %p179, %p180
      %p183 = scmp.ne.s32.totalorder %s168, %s182
      %p184 = scmp.eq.s32.totalorder %s32, 0
      %p185 = por %p183, %p184
      %s187 = sadd.s32 %s186, 1
      %p190 = scmp.eq.s32.totalorder %s26, 1
      %p191 = scmp.ne.s32.totalorder %s186, %s188
      %p192 = scmp.eq.s32.totalorder %s26, 0
      %p193 = por %p191, %p192
      %p194 = scmp.ne.s32.totalorder %s186, %s188
      %p195 = scmp.eq.s32.totalorder %s31, 1
      %p196 = por %p194, %p195
      %p197 = scmp.ne.s32.totalorder %s188, %s189
      %p198 = scmp.eq.s32.totalorder %s31, 0
      %p199 = por %p197, %p198
      %p200 = scmp.ne.s32.totalorder %s188, %s189
      %p201 = scmp.eq.s32.totalorder %s32, 1
      %p202 = por %p200, %p201
      %p204 = scmp.ne.s32.totalorder %s189, %s203
      %p205 = scmp.eq.s32.totalorder %s32, 0
      %p206 = por %p204, %p205
      %s208 = sadd.s32 %s207, 1
      %p211 = scmp.eq.s32.totalorder %s26, 1
      %p212 = scmp.ne.s32.totalorder %s207, %s209
      %p213 = scmp.eq.s32.totalorder %s26, 0
      %p214 = por %p212, %p213
      %p215 = scmp.ne.s32.totalorder %s207, %s209
      %p216 = scmp.eq.s32.totalorder %s31, 1
      %p217 = por %p215, %p216
      %p218 = scmp.ne.s32.totalorder %s209, %s210
      %p219 = scmp.eq.s32.totalorder %s31, 0
      %p220 = por %p218, %p219
      %p221 = scmp.ne.s32.totalorder %s209, %s210
      %p222 = scmp.eq.s32.totalorder %s32, 1
      %p223 = por %p221, %p222
      %p225 = scmp.ne.s32.totalorder %s210, %s224
      %p226 = scmp.eq.s32.totalorder %s32, 0
      %p227 = por %p225, %p226
      %s229 = sadd.s32 %s228, 1
      %p232 = scmp.eq.s32.totalorder %s26, 1
      %p233 = scmp.ne.s32.totalorder %s228, %s230
      %p234 = scmp.eq.s32.totalorder %s26, 0
      %p235 = por %p233, %p234
      %p236 = scmp.ne.s32.totalorder %s228, %s230
      %p237 = scmp.eq.s32.totalorder %s31, 1
      %p238 = por %p236, %p237
      %p239 = scmp.ne.s32.totalorder %s230, %s231
      %p240 = scmp.eq.s32.totalorder %s31, 0
      %p241 = por %p239, %p240
      %p242 = scmp.ne.s32.totalorder %s230, %s231
      %p243 = scmp.eq.s32.totalorder %s32, 1
      %p244 = por %p242, %p243
      %p246 = scmp.ne.s32.totalorder %s231, %s245
      %p247 = scmp.eq.s32.totalorder %s32, 0
      %p248 = por %p246, %p247
      %s250 = sadd.s32 %s249, 1
      %p253 = scmp.eq.s32.totalorder %s26, 1
      %p254 = scmp.ne.s32.totalorder %s249, %s251
      %p255 = scmp.eq.s32.totalorder %s26, 0
      %p256 = por %p254, %p255
      %p257 = scmp.ne.s32.totalorder %s249, %s251
      %p258 = scmp.eq.s32.totalorder %s31, 1
      %p259 = por %p257, %p258
      %p260 = scmp.ne.s32.totalorder %s251, %s252
      %p261 = scmp.eq.s32.totalorder %s31, 0
      %p262 = por %p260, %p261
      %p263 = scmp.ne.s32.totalorder %s251, %s252
      %p264 = scmp.eq.s32.totalorder %s32, 1
      %p265 = por %p263, %p264
      %p267 = scmp.ne.s32.totalorder %s252, %s266
      %p268 = scmp.eq.s32.totalorder %s32, 0
      %p269 = por %p267, %p268
      %s270 = ssub.s32 %s26, %s33
      %p271 = scmp.eq.s32.totalorder %s270, 0
      %s273 = sadd.s32 %s272, 1
      %s274 = scalar_select %p271, %s272, %s273
      %p277 = pneg %p271
      %p278 = scmp.eq.s32.totalorder %s26, 1
      %p279 = por %p277, %p278
      %p280 = scmp.ne.s32.totalorder %s272, %s275
      %p281 = scmp.eq.s32.totalorder %s26, 0
      %p282 = por %p280, %p281
      %p283 = scmp.ne.s32.totalorder %s272, %s275
      %p284 = scmp.eq.s32.totalorder %s31, 1
      %p285 = por %p283, %p284
      %p286 = scmp.ne.s32.totalorder %s275, %s276
      %p287 = scmp.eq.s32.totalorder %s31, 0
      %p288 = por %p286, %p287
      %p289 = scmp.ne.s32.totalorder %s275, %s276
      %p290 = scmp.eq.s32.totalorder %s32, 1
      %p291 = por %p289, %p290
      %p293 = scmp.ne.s32.totalorder %s276, %s292
      %p294 = scmp.eq.s32.totalorder %s32, 0
      %p295 = por %p293, %p294
      %p296 = scmp.le.s32.totalorder 1, %s26
      %p297 = scmp.lt.s32.totalorder %s26, 3
      %p298 = pnand %p296, %p297
      %p299 = pneg %p298
      // Predicated region
      $region9: #{tpu_custom_call.1} parent=5 // pred_check
        _
      $region10: #{tpu_custom_call.1} parent=5 // pred_check_branch
        %301 = sbr.rel (%p298) target = $region12
      $region11: #{tpu_custom_call.1} parent=5 // pred_region
        %s302 = ssub.s32 %s26, 1
        // Predicated region
        $region13: #{tpu_custom_call.1} parent=11 // pred_check
          %p303 = pneg %p73
        $region14: #{tpu_custom_call.1} parent=11 // pred_check_branch
          %305 = sbr.rel (%p303) target = $region16
        $region15: #{tpu_custom_call.1} parent=11 // pred_region
          %s307 = ssub.s32 2048, 2048
          %308 = vsyncadd [#allocation7], %s307
          %s309 = sshll.u32 [#allocation6], 4
          %s310 = int_to_ptr.vmem [resolvable:$true] %s309
          %315 = dma.hbm_to_vmem [thread:$0]  %s1, 2048, %s310, [#allocation7], 128, 128, 8
        $region16: #{tpu_custom_call.1} parent=11 // pred_fallthru
          _
        // Predicated region
        $region17: #{tpu_custom_call.1} parent=11 // pred_check
          %p316 = pneg %p94
        $region18: #{tpu_custom_call.1} parent=11 // pred_check_branch
          %318 = sbr.rel (%p316) target = $region20
        $region19: #{tpu_custom_call.1} parent=11 // pred_region
          _
        $region20: #{tpu_custom_call.1} parent=11 // pred_fallthru
          _
        // Predicated region
        $region21: #{tpu_custom_call.1} parent=11 // pred_check
          %p319 = pneg %p115
        $region22: #{tpu_custom_call.1} parent=11 // pred_check_branch
          %321 = sbr.rel (%p319) target = $region24
        $region23: #{tpu_custom_call.1} parent=11 // pred_region
          _
        $region24: #{tpu_custom_call.1} parent=11 // pred_fallthru
          _
        // Predicated region
        $region25: #{tpu_custom_call.1} parent=11 // pred_check
          %p322 = pneg %p136
        $region26: #{tpu_custom_call.1} parent=11 // pred_check_branch
          %324 = sbr.rel (%p322) target = $region28
        $region27: #{tpu_custom_call.1} parent=11 // pred_region
          _
        $region28: #{tpu_custom_call.1} parent=11 // pred_fallthru
          _
        // Predicated region
        $region29: #{tpu_custom_call.1} parent=11 // pred_check
          %p325 = pneg %p157
        $region30: #{tpu_custom_call.1} parent=11 // pred_check_branch
          %327 = sbr.rel (%p325) target = $region32
        $region31: #{tpu_custom_call.1} parent=11 // pred_region
          %s329 = ssub.s32 2048, 2048
          %330 = vsyncadd [#allocation7], %s329
          %s331 = sshll.u32 [#allocation8], 4
          %s332 = int_to_ptr.vmem [resolvable:$true] %s331
          %337 = dma.hbm_to_vmem [thread:$0]  %s5, 2048, %s332, [#allocation7], 64, 64, 4
        $region32: #{tpu_custom_call.1} parent=11 // pred_fallthru
          _
        // Predicated region
        $region33: #{tpu_custom_call.1} parent=11 // pred_check
          %p338 = pneg %p178
        $region34: #{tpu_custom_call.1} parent=11 // pred_check_branch
          %340 = sbr.rel (%p338) target = $region36
        $region35: #{tpu_custom_call.1} parent=11 // pred_region
          _
        $region36: #{tpu_custom_call.1} parent=11 // pred_fallthru
          _
        // Predicated region
        $region37: #{tpu_custom_call.1} parent=11 // pred_check
          %p341 = pneg %p199
        $region38: #{tpu_custom_call.1} parent=11 // pred_check_branch
          %343 = sbr.rel (%p341) target = $region40
        $region39: #{tpu_custom_call.1} parent=11 // pred_region
          _
        $region40: #{tpu_custom_call.1} parent=11 // pred_fallthru
          _
        // Predicated region
        $region41: #{tpu_custom_call.1} parent=11 // pred_check
          %p344 = pneg %p220
        $region42: #{tpu_custom_call.1} parent=11 // pred_check_branch
          %346 = sbr.rel (%p344) target = $region44
        $region43: #{tpu_custom_call.1} parent=11 // pred_region
          _
        $region44: #{tpu_custom_call.1} parent=11 // pred_fallthru
          _
        // Predicated region
        $region45: #{tpu_custom_call.1} parent=11 // pred_check
          %p347 = pneg %p241
        $region46: #{tpu_custom_call.1} parent=11 // pred_check_branch
          %349 = sbr.rel (%p347) target = $region48
        $region47: #{tpu_custom_call.1} parent=11 // pred_region
          _
        $region48: #{tpu_custom_call.1} parent=11 // pred_fallthru
          _
        // Predicated region
        $region49: #{tpu_custom_call.1} parent=11 // pred_check
          %p350 = pneg %p262
        $region50: #{tpu_custom_call.1} parent=11 // pred_check_branch
          %352 = sbr.rel (%p350) target = $region52
        $region51: #{tpu_custom_call.1} parent=11 // pred_region
          _
        $region52: #{tpu_custom_call.1} parent=11 // pred_fallthru
          _
      $region12: #{tpu_custom_call.1} parent=5 // pred_fallthru
        _
      %p353 = scmp.lt.s32.totalorder %s26, 2
      // Predicated region
      $region53: #{tpu_custom_call.1} parent=5 // pred_check
        %p354 = pneg %p353
      $region54: #{tpu_custom_call.1} parent=5 // pred_check_branch
        %356 = sbr.rel (%p354) target = $region56
      $region55: #{tpu_custom_call.1} parent=5 // pred_region
        // Predicated region
        $region57: #{tpu_custom_call.1} parent=55 // pred_check
          %p357 = pneg %p46
        $region58: #{tpu_custom_call.1} parent=55 // pred_check_branch
          %359 = sbr.rel (%p357) target = $region60
        $region59: #{tpu_custom_call.1} parent=55 // pred_region
          %s360 = sand.u32 %s36, 1
          %s361 = scalar_lea.sflag [#allocation4], %s360
          %s362 = sand.u32 %s36, 1
          %s363 = smul.addr %s362, 256
          %s364 = scalar_lea.vmem [#allocation3], %s363
          %s365 = smul.u32 32, %s26
          %s367 = ssub.s32 4096, 4096
          %368 = vsyncadd %s361, %s367
          %s369 = smul.addr %s365, 128
          %s370 = scalar_lea.hbm %s0, %s369
          %s371 = sshll.u32 %s364, 4
          %s372 = int_to_ptr.vmem [resolvable:$true] %s371
          %377 = dma.hbm_to_vmem [thread:$0]  %s370, 4096, %s372, %s361, 128, 128, 8
        $region60: #{tpu_custom_call.1} parent=55 // pred_fallthru
          _
      $region56: #{tpu_custom_call.1} parent=5 // pred_fallthru
        _
      %p378 = scmp.le.s32.totalorder 1, %s26
      %p379 = scmp.lt.s32.totalorder %s26, 3
      %p380 = pnand %p378, %p379
      %p381 = pneg %p380
      // Predicated region
      $region61: #{tpu_custom_call.1} parent=5 // pred_check
        _
      $region62: #{tpu_custom_call.1} parent=5 // pred_check_branch
        %383 = sbr.rel (%p380) target = $region64
      $region63: #{tpu_custom_call.1} parent=5 // pred_region
        %s384 = ssub.s32 %s26, 1
        %s385 = sand.u32 %s39, 1
        %s386 = scalar_lea.sflag [#allocation4], %s385
        %s387 = sand.u32 %s39, 1
        %s388 = smul.addr %s387, 256
        %s389 = scalar_lea.vmem [#allocation3], %s388
        // Predicated region
        $region65: #{tpu_custom_call.1} parent=63 // pred_check
          %p390 = pneg %p52
        $region66: #{tpu_custom_call.1} parent=63 // pred_check_branch
          %392 = sbr.rel (%p390) target = $region68
        $region67: #{tpu_custom_call.1} parent=63 // pred_region
          %393 = dma.done %s386, 4096
        $region68: #{tpu_custom_call.1} parent=63 // pred_fallthru
          _
        // Predicated region
        $region69: #{tpu_custom_call.1} parent=63 // pred_check
          %p394 = pneg %p73
        $region70: #{tpu_custom_call.1} parent=63 // pred_check_branch
          %396 = sbr.rel (%p394) target = $region72
        $region71: #{tpu_custom_call.1} parent=63 // pred_region
          %397 = dma.done [#allocation7], 2048
        $region72: #{tpu_custom_call.1} parent=63 // pred_fallthru
          _
        // Predicated region
        $region73: #{tpu_custom_call.1} parent=63 // pred_check
          %p398 = pneg %p157
        $region74: #{tpu_custom_call.1} parent=63 // pred_check_branch
          %400 = sbr.rel (%p398) target = $region76
        $region75: #{tpu_custom_call.1} parent=63 // pred_region
          %401 = dma.done [#allocation7], 2048
        $region76: #{tpu_custom_call.1} parent=63 // pred_fallthru
          _
        %s402 = sand.u32 %s39, 1
        %s403 = scalar_lea.sflag [#allocation4], %s402
        %s404 = sand.u32 %s39, 1
        %s405 = smul.addr %s404, 256
        %s406 = scalar_lea.vmem [#allocation3], %s405
        %p407 = pneg %p52
        %p408 = pneg %p49
        %p409 = pneg %p73
        %p410 = pneg %p70
        %p411 = pneg %p94
        %p412 = pneg %p91
        %p413 = pneg %p115
        %p414 = pneg %p112
        %p415 = pneg %p136
        %p416 = pneg %p133
        %p417 = pneg %p157
        %p418 = pneg %p154
        %p419 = pneg %p178
        %p420 = pneg %p175
        %p421 = pneg %p199
        %p422 = pneg %p196
        %p423 = pneg %p220
        %p424 = pneg %p217
        %p425 = pneg %p241
        %p426 = pneg %p238
        %p427 = pneg %p262
        %p428 = pneg %p259
        %p429 = pneg %p288
        %p430 = pneg %p285
        %s431 = sand.u32 %s275, 1
        %s432 = scalar_lea.sflag [#allocation5], %s431
        %s433 = sand.u32 %s275, 1
        %s434 = smul.addr %s433, 2
        %s435 = scalar_lea.vmem [#allocation9], %s434
        %s436 = smul.u32 32, %s31
        %s437 = smul.u32 2, %s31
        %v439 = vld [vmem:[%s389] sm:$0xff]
        %v440 = vld [vmem:[%s389 + $0x8] sm:$0xff]
        %v441 = vld [vmem:[%s389 + $0x10] sm:$0xff]
        %v442 = vld [vmem:[%s389 + $0x18] sm:$0xff]
        %v443 = vld [vmem:[%s389 + $0x20] sm:$0xff]
        %v444 = vld [vmem:[%s389 + $0x28] sm:$0xff]
        %v445 = vld [vmem:[%s389 + $0x30] sm:$0xff]
        %v446 = vld [vmem:[%s389 + $0x38] sm:$0xff]
        %v447 = vld [vmem:[%s389 + $0x40] sm:$0xff]
        %v448 = vld [vmem:[%s389 + $0x48] sm:$0xff]
        %v449 = vld [vmem:[%s389 + $0x50] sm:$0xff]
        %v450 = vld [vmem:[%s389 + $0x58] sm:$0xff]
        %v451 = vld [vmem:[%s389 + $0x60] sm:$0xff]
        %v452 = vld [vmem:[%s389 + $0x68] sm:$0xff]
        %v453 = vld [vmem:[%s389 + $0x70] sm:$0xff]
        %v454 = vld [vmem:[%s389 + $0x78] sm:$0xff]
        %v455 = vld [vmem:[%s389 + $0x80] sm:$0xff]
        %v456 = vld [vmem:[%s389 + $0x88] sm:$0xff]
        %v457 = vld [vmem:[%s389 + $0x90] sm:$0xff]
        %v458 = vld [vmem:[%s389 + $0x98] sm:$0xff]
        %v459 = vld [vmem:[%s389 + $0xa0] sm:$0xff]
        %v460 = vld [vmem:[%s389 + $0xa8] sm:$0xff]
        %v461 = vld [vmem:[%s389 + $0xb0] sm:$0xff]
        %v462 = vld [vmem:[%s389 + $0xb8] sm:$0xff]
        %v463 = vld [vmem:[%s389 + $0xc0] sm:$0xff]
        %v464 = vld [vmem:[%s389 + $0xc8] sm:$0xff]
        %v465 = vld [vmem:[%s389 + $0xd0] sm:$0xff]
        %v466 = vld [vmem:[%s389 + $0xd8] sm:$0xff]
        %v467 = vld [vmem:[%s389 + $0xe0] sm:$0xff]
        %v468 = vld [vmem:[%s389 + $0xe8] sm:$0xff]
        %v469 = vld [vmem:[%s389 + $0xf0] sm:$0xff]
        %v470 = vld [vmem:[%s389 + $0xf8] sm:$0xff]
        %v471 = vpack.c.bf16 %v440, %v439
        %v472 = vpack.c.bf16 %v442, %v441
        %v473 = vpack.c.bf16 %v444, %v443
        %v474 = vpack.c.bf16 %v446, %v445
        %v475 = vpack.c.bf16 %v448, %v447
        %v476 = vpack.c.bf16 %v450, %v449
        %v477 = vpack.c.bf16 %v452, %v451
        %v478 = vpack.c.bf16 %v454, %v453
        %v479 = vpack.c.bf16 %v456, %v455
        %v480 = vpack.c.bf16 %v458, %v457
        %v481 = vpack.c.bf16 %v460, %v459
        %v482 = vpack.c.bf16 %v462, %v461
        %v483 = vpack.c.bf16 %v464, %v463
        %v484 = vpack.c.bf16 %v466, %v465
        %v485 = vpack.c.bf16 %v468, %v467
        %v486 = vpack.c.bf16 %v470, %v469
        %v487 = vld [vmem:[#allocation6] sm:$0xff]
        %v488 = vld [vmem:[#allocation6 + $0x8] sm:$0xff]
        %v489 = vld [vmem:[#allocation6 + $0x10] sm:$0xff]
        %v490 = vld [vmem:[#allocation6 + $0x18] sm:$0xff]
        %v491 = vld [vmem:[#allocation6 + $0x20] sm:$0xff]
        %v492 = vld [vmem:[#allocation6 + $0x28] sm:$0xff]
        %v493 = vld [vmem:[#allocation6 + $0x30] sm:$0xff]
        %v494 = vld [vmem:[#allocation6 + $0x38] sm:$0xff]
        %v495 = vld [vmem:[#allocation6 + $0x40] sm:$0xff]
        %v496 = vld [vmem:[#allocation6 + $0x48] sm:$0xff]
        %v497 = vld [vmem:[#allocation6 + $0x50] sm:$0xff]
        %v498 = vld [vmem:[#allocation6 + $0x58] sm:$0xff]
        %v499 = vld [vmem:[#allocation6 + $0x60] sm:$0xff]
        %v500 = vld [vmem:[#allocation6 + $0x68] sm:$0xff]
        %v501 = vld [vmem:[#allocation6 + $0x70] sm:$0xff]
        %v502 = vld [vmem:[#allocation6 + $0x78] sm:$0xff]
        %v503 = vld [vmem:[%s2] sm:$0x3]
        %v505 = vlaneseq
        %v506 = vshrl.u32 %v505, 7
        %v507 = vsub.s32 0, %v506
        %v508 = vrot.slane %v503, %v507
        %v509 = vlaneseq
        %v510 = vshrl.u32 %v509, 7
        %v511 = vsub.s32 1, %v510
        %v512 = vrot.slane %v503, %v511
        %v531 = vunpack.c.l.b16 %v487
        %v532 = vunpack.c.h.b16 %v487
        %v533 = vunpack.c.l.b16 %v488
        %v534 = vunpack.c.h.b16 %v488
        %v535 = vunpack.c.l.b16 %v489
        %v536 = vunpack.c.h.b16 %v489
        %v537 = vunpack.c.l.b16 %v490
        %v538 = vunpack.c.h.b16 %v490
        %v539 = vunpack.c.l.b16 %v491
        %v540 = vunpack.c.h.b16 %v491
        %v541 = vunpack.c.l.b16 %v492
        %v542 = vunpack.c.h.b16 %v492
        %v543 = vunpack.c.l.b16 %v493
        %v544 = vunpack.c.h.b16 %v493
        %v545 = vunpack.c.l.b16 %v494
        %v546 = vunpack.c.h.b16 %v494
        %v547 = vunpack.c.l.b16 %v495
        %v548 = vunpack.c.h.b16 %v495
        %v549 = vunpack.c.l.b16 %v496
        %v550 = vunpack.c.h.b16 %v496
        %v551 = vunpack.c.l.b16 %v497
        %v552 = vunpack.c.h.b16 %v497
        %v553 = vunpack.c.l.b16 %v498
        %v554 = vunpack.c.h.b16 %v498
        %v555 = vunpack.c.l.b16 %v499
        %v556 = vunpack.c.h.b16 %v499
        %v557 = vunpack.c.l.b16 %v500
        %v558 = vunpack.c.h.b16 %v500
        %v559 = vunpack.c.l.b16 %v501
        %v560 = vunpack.c.h.b16 %v501
        %v561 = vunpack.c.l.b16 %v502
        %v562 = vunpack.c.h.b16 %v502
        %v563 = vpack.c.b16 %v533, %v531
        %v564 = vpack.c.b16 %v534, %v532
        %v565 = vpack.c.b16 %v537, %v535
        %v566 = vpack.c.b16 %v538, %v536
        %v567 = vpack.c.b16 %v541, %v539
        %v568 = vpack.c.b16 %v542, %v540
        %v569 = vpack.c.b16 %v545, %v543
        %v570 = vpack.c.b16 %v546, %v544
        %v571 = vpack.c.b16 %v549, %v547
        %v572 = vpack.c.b16 %v550, %v548
        %v573 = vpack.c.b16 %v553, %v551
        %v574 = vpack.c.b16 %v554, %v552
        %v575 = vpack.c.b16 %v557, %v555
        %v576 = vpack.c.b16 %v558, %v556
        %v577 = vpack.c.b16 %v561, %v559
        %v578 = vpack.c.b16 %v562, %v560
        %595 = vmatprep.subr.bf16.mxu0 %v564
        %596 = vmatpush1.bf16.msra.mxu0 %v563
        %597 = vmatprep.subr.bf16.mxu0 %v566
        %598 = vmatpush1.bf16.msra.mxu0 %v565
        %599 = vmatprep.subr.bf16.mxu0 %v568
        %600 = vmatpush1.bf16.msra.mxu0 %v567
        %601 = vmatprep.subr.bf16.mxu0 %v570
        %602 = vmatpush1.bf16.msra.mxu0 %v569
        %603 = vmatprep.subr.bf16.mxu0 %v572
        %604 = vmatpush1.bf16.msra.mxu0 %v571
        %605 = vmatprep.subr.bf16.mxu0 %v574
        %606 = vmatpush1.bf16.msra.mxu0 %v573
        %607 = vmatprep.subr.bf16.mxu0 %v576
        %608 = vmatpush1.bf16.msra.mxu0 %v575
        %609 = vmatprep.subr.bf16.mxu0 %v578
        %610 = vmatpush1.bf16.msra.mxu0 %v577
        %611 = vmatprep.subr.bf16.mxu0 0
        %612 = vmatpush1.bf16.msra.mxu0 0
        %613 = vmatprep.subr.bf16.mxu0 0
        %614 = vmatpush1.bf16.msra.mxu0 0
        %615 = vmatprep.subr.bf16.mxu0 0
        %616 = vmatpush1.bf16.msra.mxu0 0
        %617 = vmatprep.subr.bf16.mxu0 0
        %618 = vmatpush1.bf16.msra.mxu0 0
        %619 = vmatprep.subr.bf16.mxu0 0
        %620 = vmatpush1.bf16.msra.mxu0 0
        %621 = vmatprep.subr.bf16.mxu0 0
        %622 = vmatpush1.bf16.msra.mxu0 0
        %623 = vmatprep.subr.bf16.mxu0 0
        %624 = vmatpush1.bf16.msra.mxu0 0
        %625 = vmatprep.subr.bf16.mxu0 0
        %626 = vmatpush1.bf16.msra.mxu0 0
        %627 = vmatprep.mubr.bf16.mxu0 0
        %628 = vmatmul.mubr.bf16.gmra.mrb[0].mxu0 %v471
        %v629 = vpop.f32.mrb[0].mxu0
        %v630 = vadd.f32 %v508, %v629
        %v631 = vpop.f32.mrb[0].mxu0
        %v632 = vadd.f32 %v512, %v631
        %v633 = vpop.f32.mrb[0].mxu0
        %v634 = vadd.f32 %v508, %v633
        %v635 = vpop.f32.mrb[0].mxu0
        %v636 = vadd.f32 %v512, %v635
        %637 = vmatprep.mubr.bf16.mxu0 0
        %638 = vmatmul.mubr.bf16.gmra.mrb[0].mxu0 %v472
        %v639 = vpop.f32.mrb[0].mxu0
        %v640 = vadd.f32 %v508, %v639
        %v641 = vpop.f32.mrb[0].mxu0
        %v642 = vadd.f32 %v512, %v641
        %v643 = vpop.f32.mrb[0].mxu0
        %v644 = vadd.f32 %v508, %v643
        %v645 = vpop.f32.mrb[0].mxu0
        %v646 = vadd.f32 %v512, %v645
        %647 = vmatprep.mubr.bf16.mxu0 0
        %648 = vmatmul.mubr.bf16.gmra.mrb[0].mxu0 %v473
        %v649 = vpop.f32.mrb[0].mxu0
        %v650 = vadd.f32 %v508, %v649
        %v651 = vpop.f32.mrb[0].mxu0
        %v652 = vadd.f32 %v512, %v651
        %v653 = vpop.f32.mrb[0].mxu0
        %v654 = vadd.f32 %v508, %v653
        %v655 = vpop.f32.mrb[0].mxu0
        %v656 = vadd.f32 %v512, %v655
        %657 = vmatprep.mubr.bf16.mxu0 0
        %658 = vmatmul.mubr.bf16.gmra.mrb[0].mxu0 %v474
        %v659 = vpop.f32.mrb[0].mxu0
        %v660 = vadd.f32 %v508, %v659
        %v661 = vpop.f32.mrb[0].mxu0
        %v662 = vadd.f32 %v512, %v661
        %v663 = vpop.f32.mrb[0].mxu0
        %v664 = vadd.f32 %v508, %v663
        %v665 = vpop.f32.mrb[0].mxu0
        %v666 = vadd.f32 %v512, %v665
        %667 = vmatprep.mubr.bf16.mxu0 0
        %668 = vmatmul.mubr.bf16.gmra.mrb[0].mxu0 %v475
        %v669 = vpop.f32.mrb[0].mxu0
        %v670 = vadd.f32 %v508, %v669
        %v671 = vpop.f32.mrb[0].mxu0
        %v672 = vadd.f32 %v512, %v671
        %v673 = vpop.f32.mrb[0].mxu0
        %v674 = vadd.f32 %v508, %v673
        %v675 = vpop.f32.mrb[0].mxu0
        %v676 = vadd.f32 %v512, %v675
        %677 = vmatprep.mubr.bf16.mxu0 0
        %678 = vmatmul.mubr.bf16.gmra.mrb[0].mxu0 %v476
        %v679 = vpop.f32.mrb[0].mxu0
        %v680 = vadd.f32 %v508, %v679
        %v681 = vpop.f32.mrb[0].mxu0
        %v682 = vadd.f32 %v512, %v681
        %v683 = vpop.f32.mrb[0].mxu0
        %v684 = vadd.f32 %v508, %v683
        %v685 = vpop.f32.mrb[0].mxu0
        %v686 = vadd.f32 %v512, %v685
        %687 = vmatprep.mubr.bf16.mxu0 0
        %688 = vmatmul.mubr.bf16.gmra.mrb[0].mxu0 %v477
        %v689 = vpop.f32.mrb[0].mxu0
        %v690 = vadd.f32 %v508, %v689
        %v691 = vpop.f32.mrb[0].mxu0
        %v692 = vadd.f32 %v512, %v691
        %v693 = vpop.f32.mrb[0].mxu0
        %v694 = vadd.f32 %v508, %v693
        %v695 = vpop.f32.mrb[0].mxu0
        %v696 = vadd.f32 %v512, %v695
        %697 = vmatprep.mubr.bf16.mxu0 0
        %698 = vmatmul.mubr.bf16.gmra.mrb[0].mxu0 %v478
        %v699 = vpop.f32.mrb[0].mxu0
        %v700 = vadd.f32 %v508, %v699
        %v701 = vpop.f32.mrb[0].mxu0
        %v702 = vadd.f32 %v512, %v701
        %v703 = vpop.f32.mrb[0].mxu0
        %v704 = vadd.f32 %v508, %v703
        %v705 = vpop.f32.mrb[0].mxu0
        %v706 = vadd.f32 %v512, %v705
        %707 = vmatprep.mubr.bf16.mxu0 0
        %708 = vmatmul.mubr.bf16.gmra.mrb[0].mxu0 %v479
        %v709 = vpop.f32.mrb[0].mxu0
        %v710 = vadd.f32 %v508, %v709
        %v711 = vpop.f32.mrb[0].mxu0
        %v712 = vadd.f32 %v512, %v711
        %v713 = vpop.f32.mrb[0].mxu0
        %v714 = vadd.f32 %v508, %v713
        %v715 = vpop.f32.mrb[0].mxu0
        %v716 = vadd.f32 %v512, %v715
        %717 = vmatprep.mubr.bf16.mxu0 0
        %718 = vmatmul.mubr.bf16.gmra.mrb[0].mxu0 %v480
        %v719 = vpop.f32.mrb[0].mxu0
        %v720 = vadd.f32 %v508, %v719
        %v721 = vpop.f32.mrb[0].mxu0
        %v722 = vadd.f32 %v512, %v721
        %v723 = vpop.f32.mrb[0].mxu0
        %v724 = vadd.f32 %v508, %v723
        %v725 = vpop.f32.mrb[0].mxu0
        %v726 = vadd.f32 %v512, %v725
        %727 = vmatprep.mubr.bf16.mxu0 0
        %728 = vmatmul.mubr.bf16.gmra.mrb[0].mxu0 %v481
        %v729 = vpop.f32.mrb[0].mxu0
        %v730 = vadd.f32 %v508, %v729
        %v731 = vpop.f32.mrb[0].mxu0
        %v732 = vadd.f32 %v512, %v731
        %v733 = vpop.f32.mrb[0].mxu0
        %v734 = vadd.f32 %v508, %v733
        %v735 = vpop.f32.mrb[0].mxu0
        %v736 = vadd.f32 %v512, %v735
        %737 = vmatprep.mubr.bf16.mxu0 0
        %738 = vmatmul.mubr.bf16.gmra.mrb[0].mxu0 %v482
        %v739 = vpop.f32.mrb[0].mxu0
        %v740 = vadd.f32 %v508, %v739
        %v741 = vpop.f32.mrb[0].mxu0
        %v742 = vadd.f32 %v512, %v741
        %v743 = vpop.f32.mrb[0].mxu0
        %v744 = vadd.f32 %v508, %v743
        %v745 = vpop.f32.mrb[0].mxu0
        %v746 = vadd.f32 %v512, %v745
        %747 = vmatprep.mubr.bf16.mxu0 0
        %748 = vmatmul.mubr.bf16.gmra.mrb[0].mxu0 %v483
        %v749 = vpop.f32.mrb[0].mxu0
        %v750 = vadd.f32 %v508, %v749
        %v751 = vpop.f32.mrb[0].mxu0
        %v752 = vadd.f32 %v512, %v751
        %v753 = vpop.f32.mrb[0].mxu0
        %v754 = vadd.f32 %v508, %v753
        %v755 = vpop.f32.mrb[0].mxu0
        %v756 = vadd.f32 %v512, %v755
        %757 = vmatprep.mubr.bf16.mxu0 0
        %758 = vmatmul.mubr.bf16.gmra.mrb[0].mxu0 %v484
        %v759 = vpop.f32.mrb[0].mxu0
        %v760 = vadd.f32 %v508, %v759
        %v761 = vpop.f32.mrb[0].mxu0
        %v762 = vadd.f32 %v512, %v761
        %v763 = vpop.f32.mrb[0].mxu0
        %v764 = vadd.f32 %v508, %v763
        %v765 = vpop.f32.mrb[0].mxu0
        %v766 = vadd.f32 %v512, %v765
        %767 = vmatprep.mubr.bf16.mxu0 0
        %768 = vmatmul.mubr.bf16.gmra.mrb[0].mxu0 %v485
        %v769 = vpop.f32.mrb[0].mxu0
        %v770 = vadd.f32 %v508, %v769
        %v771 = vpop.f32.mrb[0].mxu0
        %v772 = vadd.f32 %v512, %v771
        %v773 = vpop.f32.mrb[0].mxu0
        %v774 = vadd.f32 %v508, %v773
        %v775 = vpop.f32.mrb[0].mxu0
        %v776 = vadd.f32 %v512, %v775
        %777 = vmatprep.mubr.bf16.mxu0 0
        %778 = vmatmul.mubr.bf16.gmra.mrb[0].mxu0 %v486
        %v779 = vpop.f32.mrb[0].mxu0
        %v780 = vadd.f32 %v508, %v779
        %v781 = vpop.f32.mrb[0].mxu0
        %v782 = vadd.f32 %v512, %v781
        %v783 = vpop.f32.mrb[0].mxu0
        %v784 = vadd.f32 %v508, %v783
        %v785 = vpop.f32.mrb[0].mxu0
        %v786 = vadd.f32 %v512, %v785
        %787 = vdwg.mxu0
        %v788 = vld [vmem:[%s3] sm:$0x3]
        %v789 = vld [vmem:[%s4] sm:$0x3]
        %v790 = vadd.f32 %v630, %v632
        %791 = vadd.xlane.f32.xlu0 %v790
        %v792 = vpop.xlane.xlu0 %791
        %v793 = vadd.f32 %v634, %v636
        %794 = vadd.xlane.f32.xlu0 %v793
        %v795 = vpop.xlane.xlu0 %794
        %v796 = vadd.f32 %v640, %v642
        %797 = vadd.xlane.f32.xlu0 %v796
        %v798 = vpop.xlane.xlu0 %797
        %v799 = vadd.f32 %v644, %v646
        %800 = vadd.xlane.f32.xlu0 %v799
        %v801 = vpop.xlane.xlu0 %800
        %v802 = vadd.f32 %v650, %v652
        %803 = vadd.xlane.f32.xlu0 %v802
        %v804 = vpop.xlane.xlu0 %803
        %v805 = vadd.f32 %v654, %v656
        %806 = vadd.xlane.f32.xlu0 %v805
        %v807 = vpop.xlane.xlu0 %806
        %v808 = vadd.f32 %v660, %v662
        %809 = vadd.xlane.f32.xlu0 %v808
        %v810 = vpop.xlane.xlu0 %809
        %v811 = vadd.f32 %v664, %v666
        %812 = vadd.xlane.f32.xlu0 %v811
        %v813 = vpop.xlane.xlu0 %812
        %v814 = vadd.f32 %v670, %v672
        %815 = vadd.xlane.f32.xlu0 %v814
        %v816 = vpop.xlane.xlu0 %815
        %v817 = vadd.f32 %v674, %v676
        %818 = vadd.xlane.f32.xlu0 %v817
        %v819 = vpop.xlane.xlu0 %818
        %v820 = vadd.f32 %v680, %v682
        %821 = vadd.xlane.f32.xlu0 %v820
        %v822 = vpop.xlane.xlu0 %821
        %v823 = vadd.f32 %v684, %v686
        %824 = vadd.xlane.f32.xlu0 %v823
        %v825 = vpop.xlane.xlu0 %824
        %v826 = vadd.f32 %v690, %v692
        %827 = vadd.xlane.f32.xlu0 %v826
        %v828 = vpop.xlane.xlu0 %827
        %v829 = vadd.f32 %v694, %v696
        %830 = vadd.xlane.f32.xlu0 %v829
        %v831 = vpop.xlane.xlu0 %830
        %v832 = vadd.f32 %v700, %v702
        %833 = vadd.xlane.f32.xlu0 %v832
        %v834 = vpop.xlane.xlu0 %833
        %v835 = vadd.f32 %v704, %v706
        %836 = vadd.xlane.f32.xlu0 %v835
        %v837 = vpop.xlane.xlu0 %836
        %v838 = vadd.f32 %v710, %v712
        %839 = vadd.xlane.f32.xlu0 %v838
        %v840 = vpop.xlane.xlu0 %839
        %v841 = vadd.f32 %v714, %v716
        %842 = vadd.xlane.f32.xlu0 %v841
        %v843 = vpop.xlane.xlu0 %842
        %v844 = vadd.f32 %v720, %v722
        %845 = vadd.xlane.f32.xlu0 %v844
        %v846 = vpop.xlane.xlu0 %845
        %v847 = vadd.f32 %v724, %v726
        %848 = vadd.xlane.f32.xlu0 %v847
        %v849 = vpop.xlane.xlu0 %848
        %v850 = vadd.f32 %v730, %v732
        %851 = vadd.xlane.f32.xlu0 %v850
        %v852 = vpop.xlane.xlu0 %851
        %v853 = vadd.f32 %v734, %v736
        %854 = vadd.xlane.f32.xlu0 %v853
        %v855 = vpop.xlane.xlu0 %854
        %v856 = vadd.f32 %v740, %v742
        %857 = vadd.xlane.f32.xlu0 %v856
        %v858 = vpop.xlane.xlu0 %857
        %v859 = vadd.f32 %v744, %v746
        %860 = vadd.xlane.f32.xlu0 %v859
        %v861 = vpop.xlane.xlu0 %860
        %v862 = vadd.f32 %v750, %v752
        %863 = vadd.xlane.f32.xlu0 %v862
        %v864 = vpop.xlane.xlu0 %863
        %v865 = vadd.f32 %v754, %v756
        %866 = vadd.xlane.f32.xlu0 %v865
        %v867 = vpop.xlane.xlu0 %866
        %v868 = vadd.f32 %v760, %v762
        %869 = vadd.xlane.f32.xlu0 %v868
        %v870 = vpop.xlane.xlu0 %869
        %v871 = vadd.f32 %v764, %v766
        %872 = vadd.xlane.f32.xlu0 %v871
        %v873 = vpop.xlane.xlu0 %872
        %v874 = vadd.f32 %v770, %v772
        %875 = vadd.xlane.f32.xlu0 %v874
        %v876 = vpop.xlane.xlu0 %875
        %v877 = vadd.f32 %v774, %v776
        %878 = vadd.xlane.f32.xlu0 %v877
        %v879 = vpop.xlane.xlu0 %878
        %v880 = vadd.f32 %v780, %v782
        %881 = vadd.xlane.f32.xlu0 %v880
        %v882 = vpop.xlane.xlu0 %881
        %v883 = vadd.f32 %v784, %v786
        %884 = vadd.xlane.f32.xlu0 %v883
        %v885 = vpop.xlane.xlu0 %884
        %v886 = vrcp.pop 256.0
        %v887 = vmul.f32 %v792, %v886
        %v888 = vmul.f32 %v795, %v886
        %v889 = vmul.f32 %v798, %v886
        %v890 = vmul.f32 %v801, %v886
        %v891 = vmul.f32 %v804, %v886
        %v892 = vmul.f32 %v807, %v886
        %v893 = vmul.f32 %v810, %v886
        %v894 = vmul.f32 %v813, %v886
        %v895 = vmul.f32 %v816, %v886
        %v896 = vmul.f32 %v819, %v886
        %v897 = vmul.f32 %v822, %v886
        %v898 = vmul.f32 %v825, %v886
        %v899 = vmul.f32 %v828, %v886
        %v900 = vmul.f32 %v831, %v886
        %v901 = vmul.f32 %v834, %v886
        %v902 = vmul.f32 %v837, %v886
        %v903 = vmul.f32 %v840, %v886
        %v904 = vmul.f32 %v843, %v886
        %v905 = vmul.f32 %v846, %v886
        %v906 = vmul.f32 %v849, %v886
        %v907 = vmul.f32 %v852, %v886
        %v908 = vmul.f32 %v855, %v886
        %v909 = vmul.f32 %v858, %v886
        %v910 = vmul.f32 %v861, %v886
        %v911 = vmul.f32 %v864, %v886
        %v912 = vmul.f32 %v867, %v886
        %v913 = vmul.f32 %v870, %v886
        %v914 = vmul.f32 %v873, %v886
        %v915 = vmul.f32 %v876, %v886
        %v916 = vmul.f32 %v879, %v886
        %v917 = vmul.f32 %v882, %v886
        %v918 = vmul.f32 %v885, %v886
        %v919 = vsub.f32 %v630, %v887
        %v920 = vsub.f32 %v632, %v887
        %v921 = vsub.f32 %v634, %v888
        %v922 = vsub.f32 %v636, %v888
        %v923 = vsub.f32 %v640, %v889
        %v924 = vsub.f32 %v642, %v889
        %v925 = vsub.f32 %v644, %v890
        %v926 = vsub.f32 %v646, %v890
        %v927 = vsub.f32 %v650, %v891
        %v928 = vsub.f32 %v652, %v891
        %v929 = vsub.f32 %v654, %v892
        %v930 = vsub.f32 %v656, %v892
        %v931 = vsub.f32 %v660, %v893
        %v932 = vsub.f32 %v662, %v893
        %v933 = vsub.f32 %v664, %v894
        %v934 = vsub.f32 %v666, %v894
        %v935 = vsub.f32 %v670, %v895
        %v936 = vsub.f32 %v672, %v895
        %v937 = vsub.f32 %v674, %v896
        %v938 = vsub.f32 %v676, %v896
        %v939 = vsub.f32 %v680, %v897
        %v940 = vsub.f32 %v682, %v897
        %v941 = vsub.f32 %v684, %v898
        %v942 = vsub.f32 %v686, %v898
        %v943 = vsub.f32 %v690, %v899
        %v944 = vsub.f32 %v692, %v899
        %v945 = vsub.f32 %v694, %v900
        %v946 = vsub.f32 %v696, %v900
        %v947 = vsub.f32 %v700, %v901
        %v948 = vsub.f32 %v702, %v901
        %v949 = vsub.f32 %v704, %v902
        %v950 = vsub.f32 %v706, %v902
        %v951 = vsub.f32 %v710, %v903
        %v952 = vsub.f32 %v712, %v903
        %v953 = vsub.f32 %v714, %v904
        %v954 = vsub.f32 %v716, %v904
        %v955 = vsub.f32 %v720, %v905
        %v956 = vsub.f32 %v722, %v905
        %v957 = vsub.f32 %v724, %v906
        %v958 = vsub.f32 %v726, %v906
        %v959 = vsub.f32 %v730, %v907
        %v960 = vsub.f32 %v732, %v907
        %v961 = vsub.f32 %v734, %v908
        %v962 = vsub.f32 %v736, %v908
        %v963 = vsub.f32 %v740, %v909
        %v964 = vsub.f32 %v742, %v909
        %v965 = vsub.f32 %v744, %v910
        %v966 = vsub.f32 %v746, %v910
        %v967 = vsub.f32 %v750, %v911
        %v968 = vsub.f32 %v752, %v911
        %v969 = vsub.f32 %v754, %v912
        %v970 = vsub.f32 %v756, %v912
        %v971 = vsub.f32 %v760, %v913
        %v972 = vsub.f32 %v762, %v913
        %v973 = vsub.f32 %v764, %v914
        %v974 = vsub.f32 %v766, %v914
        %v975 = vsub.f32 %v770, %v915
        %v976 = vsub.f32 %v772, %v915
        %v977 = vsub.f32 %v774, %v916
        %v978 = vsub.f32 %v776, %v916
        %v979 = vsub.f32 %v780, %v917
        %v980 = vsub.f32 %v782, %v917
        %v981 = vsub.f32 %v784, %v918
        %v982 = vsub.f32 %v786, %v918
        %v983 = vmul.f32 %v919, %v919
        %v984 = vmul.f32 %v920, %v920
        %v985 = vmul.f32 %v921, %v921
        %v986 = vmul.f32 %v922, %v922
        %v987 = vmul.f32 %v923, %v923
        %v988 = vmul.f32 %v924, %v924
        %v989 = vmul.f32 %v925, %v925
        %v990 = vmul.f32 %v926, %v926
        %v991 = vmul.f32 %v927, %v927
        %v992 = vmul.f32 %v928, %v928
        %v993 = vmul.f32 %v929, %v929
        %v994 = vmul.f32 %v930, %v930
        %v995 = vmul.f32 %v931, %v931
        %v996 = vmul.f32 %v932, %v932
        %v997 = vmul.f32 %v933, %v933
        %v998 = vmul.f32 %v934, %v934
        %v999 = vmul.f32 %v935, %v935
        %v1000 = vmul.f32 %v936, %v936
        %v1001 = vmul.f32 %v937, %v937
        %v1002 = vmul.f32 %v938, %v938
        %v1003 = vmul.f32 %v939, %v939
        %v1004 = vmul.f32 %v940, %v940
        %v1005 = vmul.f32 %v941, %v941
        %v1006 = vmul.f32 %v942, %v942
        %v1007 = vmul.f32 %v943, %v943
        %v1008 = vmul.f32 %v944, %v944
        %v1009 = vmul.f32 %v945, %v945
        %v1010 = vmul.f32 %v946, %v946
        %v1011 = vmul.f32 %v947, %v947
        %v1012 = vmul.f32 %v948, %v948
        %v1013 = vmul.f32 %v949, %v949
        %v1014 = vmul.f32 %v950, %v950
        %v1015 = vmul.f32 %v951, %v951
        %v1016 = vmul.f32 %v952, %v952
        %v1017 = vmul.f32 %v953, %v953
        %v1018 = vmul.f32 %v954, %v954
        %v1019 = vmul.f32 %v955, %v955
        %v1020 = vmul.f32 %v956, %v956
        %v1021 = vmul.f32 %v957, %v957
        %v1022 = vmul.f32 %v958, %v958
        %v1023 = vmul.f32 %v959, %v959
        %v1024 = vmul.f32 %v960, %v960
        %v1025 = vmul.f32 %v961, %v961
        %v1026 = vmul.f32 %v962, %v962
        %v1027 = vmul.f32 %v963, %v963
        %v1028 = vmul.f32 %v964, %v964
        %v1029 = vmul.f32 %v965, %v965
        %v1030 = vmul.f32 %v966, %v966
        %v1031 = vmul.f32 %v967, %v967
        %v1032 = vmul.f32 %v968, %v968
        %v1033 = vmul.f32 %v969, %v969
        %v1034 = vmul.f32 %v970, %v970
        %v1035 = vmul.f32 %v971, %v971
        %v1036 = vmul.f32 %v972, %v972
        %v1037 = vmul.f32 %v973, %v973
        %v1038 = vmul.f32 %v974, %v974
        %v1039 = vmul.f32 %v975, %v975
        %v1040 = vmul.f32 %v976, %v976
        %v1041 = vmul.f32 %v977, %v977
        %v1042 = vmul.f32 %v978, %v978
        %v1043 = vmul.f32 %v979, %v979
        %v1044 = vmul.f32 %v980, %v980
        %v1045 = vmul.f32 %v981, %v981
        %v1046 = vmul.f32 %v982, %v982
        %v1047 = vadd.f32 %v983, %v984
        %1048 = vadd.xlane.f32.xlu0 %v1047
        %v1049 = vpop.xlane.xlu0 %1048
        %v1050 = vadd.f32 %v985, %v986
        %1051 = vadd.xlane.f32.xlu0 %v1050
        %v1052 = vpop.xlane.xlu0 %1051
        %v1053 = vadd.f32 %v987, %v988
        %1054 = vadd.xlane.f32.xlu0 %v1053
        %v1055 = vpop.xlane.xlu0 %1054
        %v1056 = vadd.f32 %v989, %v990
        %1057 = vadd.xlane.f32.xlu0 %v1056
        %v1058 = vpop.xlane.xlu0 %1057
        %v1059 = vadd.f32 %v991, %v992
        %1060 = vadd.xlane.f32.xlu0 %v1059
        %v1061 = vpop.xlane.xlu0 %1060
        %v1062 = vadd.f32 %v993, %v994
        %1063 = vadd.xlane.f32.xlu0 %v1062
        %v1064 = vpop.xlane.xlu0 %1063
        %v1065 = vadd.f32 %v995, %v996
        %1066 = vadd.xlane.f32.xlu0 %v1065
        %v1067 = vpop.xlane.xlu0 %1066
        %v1068 = vadd.f32 %v997, %v998
        %1069 = vadd.xlane.f32.xlu0 %v1068
        %v1070 = vpop.xlane.xlu0 %1069
        %v1071 = vadd.f32 %v999, %v1000
        %1072 = vadd.xlane.f32.xlu0 %v1071
        %v1073 = vpop.xlane.xlu0 %1072
        %v1074 = vadd.f32 %v1001, %v1002
        %1075 = vadd.xlane.f32.xlu0 %v1074
        %v1076 = vpop.xlane.xlu0 %1075
        %v1077 = vadd.f32 %v1003, %v1004
        %1078 = vadd.xlane.f32.xlu0 %v1077
        %v1079 = vpop.xlane.xlu0 %1078
        %v1080 = vadd.f32 %v1005, %v1006
        %1081 = vadd.xlane.f32.xlu0 %v1080
        %v1082 = vpop.xlane.xlu0 %1081
        %v1083 = vadd.f32 %v1007, %v1008
        %1084 = vadd.xlane.f32.xlu0 %v1083
        %v1085 = vpop.xlane.xlu0 %1084
        %v1086 = vadd.f32 %v1009, %v1010
        %1087 = vadd.xlane.f32.xlu0 %v1086
        %v1088 = vpop.xlane.xlu0 %1087
        %v1089 = vadd.f32 %v1011, %v1012
        %1090 = vadd.xlane.f32.xlu0 %v1089
        %v1091 = vpop.xlane.xlu0 %1090
        %v1092 = vadd.f32 %v1013, %v1014
        %1093 = vadd.xlane.f32.xlu0 %v1092
        %v1094 = vpop.xlane.xlu0 %1093
        %v1095 = vadd.f32 %v1015, %v1016
        %1096 = vadd.xlane.f32.xlu0 %v1095
        %v1097 = vpop.xlane.xlu0 %1096
        %v1098 = vadd.f32 %v1017, %v1018
        %1099 = vadd.xlane.f32.xlu0 %v1098
        %v1100 = vpop.xlane.xlu0 %1099
        %v1101 = vadd.f32 %v1019, %v1020
        %1102 = vadd.xlane.f32.xlu0 %v1101
        %v1103 = vpop.xlane.xlu0 %1102
        %v1104 = vadd.f32 %v1021, %v1022
        %1105 = vadd.xlane.f32.xlu0 %v1104
        %v1106 = vpop.xlane.xlu0 %1105
        %v1107 = vadd.f32 %v1023, %v1024
        %1108 = vadd.xlane.f32.xlu0 %v1107
        %v1109 = vpop.xlane.xlu0 %1108
        %v1110 = vadd.f32 %v1025, %v1026
        %1111 = vadd.xlane.f32.xlu0 %v1110
        %v1112 = vpop.xlane.xlu0 %1111
        %v1113 = vadd.f32 %v1027, %v1028
        %1114 = vadd.xlane.f32.xlu0 %v1113
        %v1115 = vpop.xlane.xlu0 %1114
        %v1116 = vadd.f32 %v1029, %v1030
        %1117 = vadd.xlane.f32.xlu0 %v1116
        %v1118 = vpop.xlane.xlu0 %1117
        %v1119 = vadd.f32 %v1031, %v1032
        %1120 = vadd.xlane.f32.xlu0 %v1119
        %v1121 = vpop.xlane.xlu0 %1120
        %v1122 = vadd.f32 %v1033, %v1034
        %1123 = vadd.xlane.f32.xlu0 %v1122
        %v1124 = vpop.xlane.xlu0 %1123
        %v1125 = vadd.f32 %v1035, %v1036
        %1126 = vadd.xlane.f32.xlu0 %v1125
        %v1127 = vpop.xlane.xlu0 %1126
        %v1128 = vadd.f32 %v1037, %v1038
        %1129 = vadd.xlane.f32.xlu0 %v1128
        %v1130 = vpop.xlane.xlu0 %1129
        %v1131 = vadd.f32 %v1039, %v1040
        %1132 = vadd.xlane.f32.xlu0 %v1131
        %v1133 = vpop.xlane.xlu0 %1132
        %v1134 = vadd.f32 %v1041, %v1042
        %1135 = vadd.xlane.f32.xlu0 %v1134
        %v1136 = vpop.xlane.xlu0 %1135
        %v1137 = vadd.f32 %v1043, %v1044
        %1138 = vadd.xlane.f32.xlu0 %v1137
        %v1139 = vpop.xlane.xlu0 %1138
        %v1140 = vadd.f32 %v1045, %v1046
        %1141 = vadd.xlane.f32.xlu0 %v1140
        %v1142 = vpop.xlane.xlu0 %1141
        %v1143 = vmul.f32 %v1049, %v886
        %v1144 = vmul.f32 %v1052, %v886
        %v1145 = vmul.f32 %v1055, %v886
        %v1146 = vmul.f32 %v1058, %v886
        %v1147 = vmul.f32 %v1061, %v886
        %v1148 = vmul.f32 %v1064, %v886
        %v1149 = vmul.f32 %v1067, %v886
        %v1150 = vmul.f32 %v1070, %v886
        %v1151 = vmul.f32 %v1073, %v886
        %v1152 = vmul.f32 %v1076, %v886
        %v1153 = vmul.f32 %v1079, %v886
        %v1154 = vmul.f32 %v1082, %v886
        %v1155 = vmul.f32 %v1085, %v886
        %v1156 = vmul.f32 %v1088, %v886
        %v1157 = vmul.f32 %v1091, %v886
        %v1158 = vmul.f32 %v1094, %v886
        %v1159 = vmul.f32 %v1097, %v886
        %v1160 = vmul.f32 %v1100, %v886
        %v1161 = vmul.f32 %v1103, %v886
        %v1162 = vmul.f32 %v1106, %v886
        %v1163 = vmul.f32 %v1109, %v886
        %v1164 = vmul.f32 %v1112, %v886
        %v1165 = vmul.f32 %v1115, %v886
        %v1166 = vmul.f32 %v1118, %v886
        %v1167 = vmul.f32 %v1121, %v886
        %v1168 = vmul.f32 %v1124, %v886
        %v1169 = vmul.f32 %v1127, %v886
        %v1170 = vmul.f32 %v1130, %v886
        %v1171 = vmul.f32 %v1133, %v886
        %v1172 = vmul.f32 %v1136, %v886
        %v1173 = vmul.f32 %v1139, %v886
        %v1174 = vmul.f32 %v1142, %v886
        %v1175 = vadd.f32 %v1143, 1e-05
        %v1176 = vadd.f32 %v1144, 1e-05
        %v1177 = vadd.f32 %v1145, 1e-05
        %v1178 = vadd.f32 %v1146, 1e-05
        %v1179 = vadd.f32 %v1147, 1e-05
        %v1180 = vadd.f32 %v1148, 1e-05
        %v1181 = vadd.f32 %v1149, 1e-05
        %v1182 = vadd.f32 %v1150, 1e-05
        %v1183 = vadd.f32 %v1151, 1e-05
        %v1184 = vadd.f32 %v1152, 1e-05
        %v1185 = vadd.f32 %v1153, 1e-05
        %v1186 = vadd.f32 %v1154, 1e-05
        %v1187 = vadd.f32 %v1155, 1e-05
        %v1188 = vadd.f32 %v1156, 1e-05
        %v1189 = vadd.f32 %v1157, 1e-05
        %v1190 = vadd.f32 %v1158, 1e-05
        %v1191 = vadd.f32 %v1159, 1e-05
        %v1192 = vadd.f32 %v1160, 1e-05
        %v1193 = vadd.f32 %v1161, 1e-05
        %v1194 = vadd.f32 %v1162, 1e-05
        %v1195 = vadd.f32 %v1163, 1e-05
        %v1196 = vadd.f32 %v1164, 1e-05
        %v1197 = vadd.f32 %v1165, 1e-05
        %v1198 = vadd.f32 %v1166, 1e-05
        %v1199 = vadd.f32 %v1167, 1e-05
        %v1200 = vadd.f32 %v1168, 1e-05
        %v1201 = vadd.f32 %v1169, 1e-05
        %v1202 = vadd.f32 %v1170, 1e-05
        %v1203 = vadd.f32 %v1171, 1e-05
        %v1204 = vadd.f32 %v1172, 1e-05
        %v1205 = vadd.f32 %v1173, 1e-05
        %v1206 = vadd.f32 %v1174, 1e-05
        %v1207 = vrsqrt.pop %v1175
        %v1208 = vrsqrt.pop %v1176
        %v1209 = vrsqrt.pop %v1177
        %v1210 = vrsqrt.pop %v1178
        %v1211 = vrsqrt.pop %v1179
        %v1212 = vrsqrt.pop %v1180
        %v1213 = vrsqrt.pop %v1181
        %v1214 = vrsqrt.pop %v1182
        %v1215 = vrsqrt.pop %v1183
        %v1216 = vrsqrt.pop %v1184
        %v1217 = vrsqrt.pop %v1185
        %v1218 = vrsqrt.pop %v1186
        %v1219 = vrsqrt.pop %v1187
        %v1220 = vrsqrt.pop %v1188
        %v1221 = vrsqrt.pop %v1189
        %v1222 = vrsqrt.pop %v1190
        %v1223 = vrsqrt.pop %v1191
        %v1224 = vrsqrt.pop %v1192
        %v1225 = vrsqrt.pop %v1193
        %v1226 = vrsqrt.pop %v1194
        %v1227 = vrsqrt.pop %v1195
        %v1228 = vrsqrt.pop %v1196
        %v1229 = vrsqrt.pop %v1197
        %v1230 = vrsqrt.pop %v1198
        %v1231 = vrsqrt.pop %v1199
        %v1232 = vrsqrt.pop %v1200
        %v1233 = vrsqrt.pop %v1201
        %v1234 = vrsqrt.pop %v1202
        %v1235 = vrsqrt.pop %v1203
        %v1236 = vrsqrt.pop %v1204
        %v1237 = vrsqrt.pop %v1205
        %v1238 = vrsqrt.pop %v1206
        %v1239 = vmul.f32 %v919, %v1207
        %v1240 = vmul.f32 %v920, %v1207
        %v1241 = vmul.f32 %v921, %v1208
        %v1242 = vmul.f32 %v922, %v1208
        %v1243 = vmul.f32 %v923, %v1209
        %v1244 = vmul.f32 %v924, %v1209
        %v1245 = vmul.f32 %v925, %v1210
        %v1246 = vmul.f32 %v926, %v1210
        %v1247 = vmul.f32 %v927, %v1211
        %v1248 = vmul.f32 %v928, %v1211
        %v1249 = vmul.f32 %v929, %v1212
        %v1250 = vmul.f32 %v930, %v1212
        %v1251 = vmul.f32 %v931, %v1213
        %v1252 = vmul.f32 %v932, %v1213
        %v1253 = vmul.f32 %v933, %v1214
        %v1254 = vmul.f32 %v934, %v1214
        %v1255 = vmul.f32 %v935, %v1215
        %v1256 = vmul.f32 %v936, %v1215
        %v1257 = vmul.f32 %v937, %v1216
        %v1258 = vmul.f32 %v938, %v1216
        %v1259 = vmul.f32 %v939, %v1217
        %v1260 = vmul.f32 %v940, %v1217
        %v1261 = vmul.f32 %v941, %v1218
        %v1262 = vmul.f32 %v942, %v1218
        %v1263 = vmul.f32 %v943, %v1219
        %v1264 = vmul.f32 %v944, %v1219
        %v1265 = vmul.f32 %v945, %v1220
        %v1266 = vmul.f32 %v946, %v1220
        %v1267 = vmul.f32 %v947, %v1221
        %v1268 = vmul.f32 %v948, %v1221
        %v1269 = vmul.f32 %v949, %v1222
        %v1270 = vmul.f32 %v950, %v1222
        %v1271 = vmul.f32 %v951, %v1223
        %v1272 = vmul.f32 %v952, %v1223
        %v1273 = vmul.f32 %v953, %v1224
        %v1274 = vmul.f32 %v954, %v1224
        %v1275 = vmul.f32 %v955, %v1225
        %v1276 = vmul.f32 %v956, %v1225
        %v1277 = vmul.f32 %v957, %v1226
        %v1278 = vmul.f32 %v958, %v1226
        %v1279 = vmul.f32 %v959, %v1227
        %v1280 = vmul.f32 %v960, %v1227
        %v1281 = vmul.f32 %v961, %v1228
        %v1282 = vmul.f32 %v962, %v1228
        %v1283 = vmul.f32 %v963, %v1229
        %v1284 = vmul.f32 %v964, %v1229
        %v1285 = vmul.f32 %v965, %v1230
        %v1286 = vmul.f32 %v966, %v1230
        %v1287 = vmul.f32 %v967, %v1231
        %v1288 = vmul.f32 %v968, %v1231
        %v1289 = vmul.f32 %v969, %v1232
        %v1290 = vmul.f32 %v970, %v1232
        %v1291 = vmul.f32 %v971, %v1233
        %v1292 = vmul.f32 %v972, %v1233
        %v1293 = vmul.f32 %v973, %v1234
        %v1294 = vmul.f32 %v974, %v1234
        %v1295 = vmul.f32 %v975, %v1235
        %v1296 = vmul.f32 %v976, %v1235
        %v1297 = vmul.f32 %v977, %v1236
        %v1298 = vmul.f32 %v978, %v1236
        %v1299 = vmul.f32 %v979, %v1237
        %v1300 = vmul.f32 %v980, %v1237
        %v1301 = vmul.f32 %v981, %v1238
        %v1302 = vmul.f32 %v982, %v1238
        %v1304 = vlaneseq
        %v1305 = vshrl.u32 %v1304, 7
        %v1306 = vsub.s32 0, %v1305
        %v1307 = vrot.slane %v788, %v1306
        %v1308 = vlaneseq
        %v1309 = vshrl.u32 %v1308, 7
        %v1310 = vsub.s32 1, %v1309
        %v1311 = vrot.slane %v788, %v1310
        %v1314 = vmul.f32 %v1239, %v1307
        %v1315 = vmul.f32 %v1240, %v1311
        %v1316 = vmul.f32 %v1241, %v1307
        %v1317 = vmul.f32 %v1242, %v1311
        %v1318 = vmul.f32 %v1243, %v1307
        %v1319 = vmul.f32 %v1244, %v1311
        %v1320 = vmul.f32 %v1245, %v1307
        %v1321 = vmul.f32 %v1246, %v1311
        %v1322 = vmul.f32 %v1247, %v1307
        %v1323 = vmul.f32 %v1248, %v1311
        %v1324 = vmul.f32 %v1249, %v1307
        %v1325 = vmul.f32 %v1250, %v1311
        %v1326 = vmul.f32 %v1251, %v1307
        %v1327 = vmul.f32 %v1252, %v1311
        %v1328 = vmul.f32 %v1253, %v1307
        %v1329 = vmul.f32 %v1254, %v1311
        %v1330 = vmul.f32 %v1255, %v1307
        %v1331 = vmul.f32 %v1256, %v1311
        %v1332 = vmul.f32 %v1257, %v1307
        %v1333 = vmul.f32 %v1258, %v1311
        %v1334 = vmul.f32 %v1259, %v1307
        %v1335 = vmul.f32 %v1260, %v1311
        %v1336 = vmul.f32 %v1261, %v1307
        %v1337 = vmul.f32 %v1262, %v1311
        %v1338 = vmul.f32 %v1263, %v1307
        %v1339 = vmul.f32 %v1264, %v1311
        %v1340 = vmul.f32 %v1265, %v1307
        %v1341 = vmul.f32 %v1266, %v1311
        %v1342 = vmul.f32 %v1267, %v1307
        %v1343 = vmul.f32 %v1268, %v1311
        %v1344 = vmul.f32 %v1269, %v1307
        %v1345 = vmul.f32 %v1270, %v1311
        %v1346 = vmul.f32 %v1271, %v1307
        %v1347 = vmul.f32 %v1272, %v1311
        %v1348 = vmul.f32 %v1273, %v1307
        %v1349 = vmul.f32 %v1274, %v1311
        %v1350 = vmul.f32 %v1275, %v1307
        %v1351 = vmul.f32 %v1276, %v1311
        %v1352 = vmul.f32 %v1277, %v1307
        %v1353 = vmul.f32 %v1278, %v1311
        %v1354 = vmul.f32 %v1279, %v1307
        %v1355 = vmul.f32 %v1280, %v1311
        %v1356 = vmul.f32 %v1281, %v1307
        %v1357 = vmul.f32 %v1282, %v1311
        %v1358 = vmul.f32 %v1283, %v1307
        %v1359 = vmul.f32 %v1284, %v1311
        %v1360 = vmul.f32 %v1285, %v1307
        %v1361 = vmul.f32 %v1286, %v1311
        %v1362 = vmul.f32 %v1287, %v1307
        %v1363 = vmul.f32 %v1288, %v1311
        %v1364 = vmul.f32 %v1289, %v1307
        %v1365 = vmul.f32 %v1290, %v1311
        %v1366 = vmul.f32 %v1291, %v1307
        %v1367 = vmul.f32 %v1292, %v1311
        %v1368 = vmul.f32 %v1293, %v1307
        %v1369 = vmul.f32 %v1294, %v1311
        %v1370 = vmul.f32 %v1295, %v1307
        %v1371 = vmul.f32 %v1296, %v1311
        %v1372 = vmul.f32 %v1297, %v1307
        %v1373 = vmul.f32 %v1298, %v1311
        %v1374 = vmul.f32 %v1299, %v1307
        %v1375 = vmul.f32 %v1300, %v1311
        %v1376 = vmul.f32 %v1301, %v1307
        %v1377 = vmul.f32 %v1302, %v1311
        %v1379 = vlaneseq
        %v1380 = vshrl.u32 %v1379, 7
        %v1381 = vsub.s32 0, %v1380
        %v1382 = vrot.slane %v789, %v1381
        %v1383 = vlaneseq
        %v1384 = vshrl.u32 %v1383, 7
        %v1385 = vsub.s32 1, %v1384
        %v1386 = vrot.slane %v789, %v1385
        %v1389 = vadd.f32 %v1314, %v1382
        %v1390 = vadd.f32 %v1315, %v1386
        %v1391 = vadd.f32 %v1316, %v1382
        %v1392 = vadd.f32 %v1317, %v1386
        %v1393 = vadd.f32 %v1318, %v1382
        %v1394 = vadd.f32 %v1319, %v1386
        %v1395 = vadd.f32 %v1320, %v1382
        %v1396 = vadd.f32 %v1321, %v1386
        %v1397 = vadd.f32 %v1322, %v1382
        %v1398 = vadd.f32 %v1323, %v1386
        %v1399 = vadd.f32 %v1324, %v1382
        %v1400 = vadd.f32 %v1325, %v1386
        %v1401 = vadd.f32 %v1326, %v1382
        %v1402 = vadd.f32 %v1327, %v1386
        %v1403 = vadd.f32 %v1328, %v1382
        %v1404 = vadd.f32 %v1329, %v1386
        %v1405 = vadd.f32 %v1330, %v1382
        %v1406 = vadd.f32 %v1331, %v1386
        %v1407 = vadd.f32 %v1332, %v1382
        %v1408 = vadd.f32 %v1333, %v1386
        %v1409 = vadd.f32 %v1334, %v1382
        %v1410 = vadd.f32 %v1335, %v1386
        %v1411 = vadd.f32 %v1336, %v1382
        %v1412 = vadd.f32 %v1337, %v1386
        %v1413 = vadd.f32 %v1338, %v1382
        %v1414 = vadd.f32 %v1339, %v1386
        %v1415 = vadd.f32 %v1340, %v1382
        %v1416 = vadd.f32 %v1341, %v1386
        %v1417 = vadd.f32 %v1342, %v1382
        %v1418 = vadd.f32 %v1343, %v1386
        %v1419 = vadd.f32 %v1344, %v1382
        %v1420 = vadd.f32 %v1345, %v1386
        %v1421 = vadd.f32 %v1346, %v1382
        %v1422 = vadd.f32 %v1347, %v1386
        %v1423 = vadd.f32 %v1348, %v1382
        %v1424 = vadd.f32 %v1349, %v1386
        %v1425 = vadd.f32 %v1350, %v1382
        %v1426 = vadd.f32 %v1351, %v1386
        %v1427 = vadd.f32 %v1352, %v1382
        %v1428 = vadd.f32 %v1353, %v1386
        %v1429 = vadd.f32 %v1354, %v1382
        %v1430 = vadd.f32 %v1355, %v1386
        %v1431 = vadd.f32 %v1356, %v1382
        %v1432 = vadd.f32 %v1357, %v1386
        %v1433 = vadd.f32 %v1358, %v1382
        %v1434 = vadd.f32 %v1359, %v1386
        %v1435 = vadd.f32 %v1360, %v1382
        %v1436 = vadd.f32 %v1361, %v1386
        %v1437 = vadd.f32 %v1362, %v1382
        %v1438 = vadd.f32 %v1363, %v1386
        %v1439 = vadd.f32 %v1364, %v1382
        %v1440 = vadd.f32 %v1365, %v1386
        %v1441 = vadd.f32 %v1366, %v1382
        %v1442 = vadd.f32 %v1367, %v1386
        %v1443 = vadd.f32 %v1368, %v1382
        %v1444 = vadd.f32 %v1369, %v1386
        %v1445 = vadd.f32 %v1370, %v1382
        %v1446 = vadd.f32 %v1371, %v1386
        %v1447 = vadd.f32 %v1372, %v1382
        %v1448 = vadd.f32 %v1373, %v1386
        %v1449 = vadd.f32 %v1374, %v1382
        %v1450 = vadd.f32 %v1375, %v1386
        %v1451 = vadd.f32 %v1376, %v1382
        %v1452 = vadd.f32 %v1377, %v1386
        %v1453 = vmul.f32 %v1389, 0.5
        %v1454 = vmul.f32 %v1390, 0.5
        %v1455 = vmul.f32 %v1391, 0.5
        %v1456 = vmul.f32 %v1392, 0.5
        %v1457 = vmul.f32 %v1393, 0.5
        %v1458 = vmul.f32 %v1394, 0.5
        %v1459 = vmul.f32 %v1395, 0.5
        %v1460 = vmul.f32 %v1396, 0.5
        %v1461 = vmul.f32 %v1397, 0.5
        %v1462 = vmul.f32 %v1398, 0.5
        %v1463 = vmul.f32 %v1399, 0.5
        %v1464 = vmul.f32 %v1400, 0.5
        %v1465 = vmul.f32 %v1401, 0.5
        %v1466 = vmul.f32 %v1402, 0.5
        %v1467 = vmul.f32 %v1403, 0.5
        %v1468 = vmul.f32 %v1404, 0.5
        %v1469 = vmul.f32 %v1405, 0.5
        %v1470 = vmul.f32 %v1406, 0.5
        %v1471 = vmul.f32 %v1407, 0.5
        %v1472 = vmul.f32 %v1408, 0.5
        %v1473 = vmul.f32 %v1409, 0.5
        %v1474 = vmul.f32 %v1410, 0.5
        %v1475 = vmul.f32 %v1411, 0.5
        %v1476 = vmul.f32 %v1412, 0.5
        %v1477 = vmul.f32 %v1413, 0.5
        %v1478 = vmul.f32 %v1414, 0.5
        %v1479 = vmul.f32 %v1415, 0.5
        %v1480 = vmul.f32 %v1416, 0.5
        %v1481 = vmul.f32 %v1417, 0.5
        %v1482 = vmul.f32 %v1418, 0.5
        %v1483 = vmul.f32 %v1419, 0.5
        %v1484 = vmul.f32 %v1420, 0.5
        %v1485 = vmul.f32 %v1421, 0.5
        %v1486 = vmul.f32 %v1422, 0.5
        %v1487 = vmul.f32 %v1423, 0.5
        %v1488 = vmul.f32 %v1424, 0.5
        %v1489 = vmul.f32 %v1425, 0.5
        %v1490 = vmul.f32 %v1426, 0.5
        %v1491 = vmul.f32 %v1427, 0.5
        %v1492 = vmul.f32 %v1428, 0.5
        %v1493 = vmul.f32 %v1429, 0.5
        %v1494 = vmul.f32 %v1430, 0.5
        %v1495 = vmul.f32 %v1431, 0.5
        %v1496 = vmul.f32 %v1432, 0.5
        %v1497 = vmul.f32 %v1433, 0.5
        %v1498 = vmul.f32 %v1434, 0.5
        %v1499 = vmul.f32 %v1435, 0.5
        %v1500 = vmul.f32 %v1436, 0.5
        %v1501 = vmul.f32 %v1437, 0.5
        %v1502 = vmul.f32 %v1438, 0.5
        %v1503 = vmul.f32 %v1439, 0.5
        %v1504 = vmul.f32 %v1440, 0.5
        %v1505 = vmul.f32 %v1441, 0.5
        %v1506 = vmul.f32 %v1442, 0.5
        %v1507 = vmul.f32 %v1443, 0.5
        %v1508 = vmul.f32 %v1444, 0.5
        %v1509 = vmul.f32 %v1445, 0.5
        %v1510 = vmul.f32 %v1446, 0.5
        %v1511 = vmul.f32 %v1447, 0.5
        %v1512 = vmul.f32 %v1448, 0.5
        %v1513 = vmul.f32 %v1449, 0.5
        %v1514 = vmul.f32 %v1450, 0.5
        %v1515 = vmul.f32 %v1451, 0.5
        %v1516 = vmul.f32 %v1452, 0.5
        %v1517 = vmul.f32 %v1389, 0.70710677
        %v1518 = vmul.f32 %v1390, 0.70710677
        %v1519 = vmul.f32 %v1391, 0.70710677
        %v1520 = vmul.f32 %v1392, 0.70710677
        %v1521 = vmul.f32 %v1393, 0.70710677
        %v1522 = vmul.f32 %v1394, 0.70710677
        %v1523 = vmul.f32 %v1395, 0.70710677
        %v1524 = vmul.f32 %v1396, 0.70710677
        %v1525 = vmul.f32 %v1397, 0.70710677
        %v1526 = vmul.f32 %v1398, 0.70710677
        %v1527 = vmul.f32 %v1399, 0.70710677
        %v1528 = vmul.f32 %v1400, 0.70710677
        %v1529 = vmul.f32 %v1401, 0.70710677
        %v1530 = vmul.f32 %v1402, 0.70710677
        %v1531 = vmul.f32 %v1403, 0.70710677
        %v1532 = vmul.f32 %v1404, 0.70710677
        %v1533 = vmul.f32 %v1405, 0.70710677
        %v1534 = vmul.f32 %v1406, 0.70710677
        %v1535 = vmul.f32 %v1407, 0.70710677
        %v1536 = vmul.f32 %v1408, 0.70710677
        %v1537 = vmul.f32 %v1409, 0.70710677
        %v1538 = vmul.f32 %v1410, 0.70710677
        %v1539 = vmul.f32 %v1411, 0.70710677
        %v1540 = vmul.f32 %v1412, 0.70710677
        %v1541 = vmul.f32 %v1413, 0.70710677
        %v1542 = vmul.f32 %v1414, 0.70710677
        %v1543 = vmul.f32 %v1415, 0.70710677
        %v1544 = vmul.f32 %v1416, 0.70710677
        %v1545 = vmul.f32 %v1417, 0.70710677
        %v1546 = vmul.f32 %v1418, 0.70710677
        %v1547 = vmul.f32 %v1419, 0.70710677
        %v1548 = vmul.f32 %v1420, 0.70710677
        %v1549 = vmul.f32 %v1421, 0.70710677
        %v1550 = vmul.f32 %v1422, 0.70710677
        %v1551 = vmul.f32 %v1423, 0.70710677
        %v1552 = vmul.f32 %v1424, 0.70710677
        %v1553 = vmul.f32 %v1425, 0.70710677
        %v1554 = vmul.f32 %v1426, 0.70710677
        %v1555 = vmul.f32 %v1427, 0.70710677
        %v1556 = vmul.f32 %v1428, 0.70710677
        %v1557 = vmul.f32 %v1429, 0.70710677
        %v1558 = vmul.f32 %v1430, 0.70710677
        %v1559 = vmul.f32 %v1431, 0.70710677
        %v1560 = vmul.f32 %v1432, 0.70710677
        %v1561 = vmul.f32 %v1433, 0.70710677
        %v1562 = vmul.f32 %v1434, 0.70710677
        %v1563 = vmul.f32 %v1435, 0.70710677
        %v1564 = vmul.f32 %v1436, 0.70710677
        %v1565 = vmul.f32 %v1437, 0.70710677
        %v1566 = vmul.f32 %v1438, 0.70710677
        %v1567 = vmul.f32 %v1439, 0.70710677
        %v1568 = vmul.f32 %v1440, 0.70710677
        %v1569 = vmul.f32 %v1441, 0.70710677
        %v1570 = vmul.f32 %v1442, 0.70710677
        %v1571 = vmul.f32 %v1443, 0.70710677
        %v1572 = vmul.f32 %v1444, 0.70710677
        %v1573 = vmul.f32 %v1445, 0.70710677
        %v1574 = vmul.f32 %v1446, 0.70710677
        %v1575 = vmul.f32 %v1447, 0.70710677
        %v1576 = vmul.f32 %v1448, 0.70710677
        %v1577 = vmul.f32 %v1449, 0.70710677
        %v1578 = vmul.f32 %v1450, 0.70710677
        %v1579 = vmul.f32 %v1451, 0.70710677
        %v1580 = vmul.f32 %v1452, 0.70710677
        %v1581 = verf.f32.pop %v1517
        %v1582 = verf.f32.pop %v1518
        %v1583 = verf.f32.pop %v1519
        %v1584 = verf.f32.pop %v1520
        %v1585 = verf.f32.pop %v1521
        %v1586 = verf.f32.pop %v1522
        %v1587 = verf.f32.pop %v1523
        %v1588 = verf.f32.pop %v1524
        %v1589 = verf.f32.pop %v1525
        %v1590 = verf.f32.pop %v1526
        %v1591 = verf.f32.pop %v1527
        %v1592 = verf.f32.pop %v1528
        %v1593 = verf.f32.pop %v1529
        %v1594 = verf.f32.pop %v1530
        %v1595 = verf.f32.pop %v1531
        %v1596 = verf.f32.pop %v1532
        %v1597 = verf.f32.pop %v1533
        %v1598 = verf.f32.pop %v1534
        %v1599 = verf.f32.pop %v1535
        %v1600 = verf.f32.pop %v1536
        %v1601 = verf.f32.pop %v1537
        %v1602 = verf.f32.pop %v1538
        %v1603 = verf.f32.pop %v1539
        %v1604 = verf.f32.pop %v1540
        %v1605 = verf.f32.pop %v1541
        %v1606 = verf.f32.pop %v1542
        %v1607 = verf.f32.pop %v1543
        %v1608 = verf.f32.pop %v1544
        %v1609 = verf.f32.pop %v1545
        %v1610 = verf.f32.pop %v1546
        %v1611 = verf.f32.pop %v1547
        %v1612 = verf.f32.pop %v1548
        %v1613 = verf.f32.pop %v1549
        %v1614 = verf.f32.pop %v1550
        %v1615 = verf.f32.pop %v1551
        %v1616 = verf.f32.pop %v1552
        %v1617 = verf.f32.pop %v1553
        %v1618 = verf.f32.pop %v1554
        %v1619 = verf.f32.pop %v1555
        %v1620 = verf.f32.pop %v1556
        %v1621 = verf.f32.pop %v1557
        %v1622 = verf.f32.pop %v1558
        %v1623 = verf.f32.pop %v1559
        %v1624 = verf.f32.pop %v1560
        %v1625 = verf.f32.pop %v1561
        %v1626 = verf.f32.pop %v1562
        %v1627 = verf.f32.pop %v1563
        %v1628 = verf.f32.pop %v1564
        %v1629 = verf.f32.pop %v1565
        %v1630 = verf.f32.pop %v1566
        %v1631 = verf.f32.pop %v1567
        %v1632 = verf.f32.pop %v1568
        %v1633 = verf.f32.pop %v1569
        %v1634 = verf.f32.pop %v1570
        %v1635 = verf.f32.pop %v1571
        %v1636 = verf.f32.pop %v1572
        %v1637 = verf.f32.pop %v1573
        %v1638 = verf.f32.pop %v1574
        %v1639 = verf.f32.pop %v1575
        %v1640 = verf.f32.pop %v1576
        %v1641 = verf.f32.pop %v1577
        %v1642 = verf.f32.pop %v1578
        %v1643 = verf.f32.pop %v1579
        %v1644 = verf.f32.pop %v1580
        %v1645 = vadd.f32 %v1581, 1.0
        %v1646 = vadd.f32 %v1582, 1.0
        %v1647 = vadd.f32 %v1583, 1.0
        %v1648 = vadd.f32 %v1584, 1.0
        %v1649 = vadd.f32 %v1585, 1.0
        %v1650 = vadd.f32 %v1586, 1.0
        %v1651 = vadd.f32 %v1587, 1.0
        %v1652 = vadd.f32 %v1588, 1.0
        %v1653 = vadd.f32 %v1589, 1.0
        %v1654 = vadd.f32 %v1590, 1.0
        %v1655 = vadd.f32 %v1591, 1.0
        %v1656 = vadd.f32 %v1592, 1.0
        %v1657 = vadd.f32 %v1593, 1.0
        %v1658 = vadd.f32 %v1594, 1.0
        %v1659 = vadd.f32 %v1595, 1.0
        %v1660 = vadd.f32 %v1596, 1.0
        %v1661 = vadd.f32 %v1597, 1.0
        %v1662 = vadd.f32 %v1598, 1.0
        %v1663 = vadd.f32 %v1599, 1.0
        %v1664 = vadd.f32 %v1600, 1.0
        %v1665 = vadd.f32 %v1601, 1.0
        %v1666 = vadd.f32 %v1602, 1.0
        %v1667 = vadd.f32 %v1603, 1.0
        %v1668 = vadd.f32 %v1604, 1.0
        %v1669 = vadd.f32 %v1605, 1.0
        %v1670 = vadd.f32 %v1606, 1.0
        %v1671 = vadd.f32 %v1607, 1.0
        %v1672 = vadd.f32 %v1608, 1.0
        %v1673 = vadd.f32 %v1609, 1.0
        %v1674 = vadd.f32 %v1610, 1.0
        %v1675 = vadd.f32 %v1611, 1.0
        %v1676 = vadd.f32 %v1612, 1.0
        %v1677 = vadd.f32 %v1613, 1.0
        %v1678 = vadd.f32 %v1614, 1.0
        %v1679 = vadd.f32 %v1615, 1.0
        %v1680 = vadd.f32 %v1616, 1.0
        %v1681 = vadd.f32 %v1617, 1.0
        %v1682 = vadd.f32 %v1618, 1.0
        %v1683 = vadd.f32 %v1619, 1.0
        %v1684 = vadd.f32 %v1620, 1.0
        %v1685 = vadd.f32 %v1621, 1.0
        %v1686 = vadd.f32 %v1622, 1.0
        %v1687 = vadd.f32 %v1623, 1.0
        %v1688 = vadd.f32 %v1624, 1.0
        %v1689 = vadd.f32 %v1625, 1.0
        %v1690 = vadd.f32 %v1626, 1.0
        %v1691 = vadd.f32 %v1627, 1.0
        %v1692 = vadd.f32 %v1628, 1.0
        %v1693 = vadd.f32 %v1629, 1.0
        %v1694 = vadd.f32 %v1630, 1.0
        %v1695 = vadd.f32 %v1631, 1.0
        %v1696 = vadd.f32 %v1632, 1.0
        %v1697 = vadd.f32 %v1633, 1.0
        %v1698 = vadd.f32 %v1634, 1.0
        %v1699 = vadd.f32 %v1635, 1.0
        %v1700 = vadd.f32 %v1636, 1.0
        %v1701 = vadd.f32 %v1637, 1.0
        %v1702 = vadd.f32 %v1638, 1.0
        %v1703 = vadd.f32 %v1639, 1.0
        %v1704 = vadd.f32 %v1640, 1.0
        %v1705 = vadd.f32 %v1641, 1.0
        %v1706 = vadd.f32 %v1642, 1.0
        %v1707 = vadd.f32 %v1643, 1.0
        %v1708 = vadd.f32 %v1644, 1.0
        %v1709 = vmul.f32 %v1453, %v1645
        %v1710 = vmul.f32 %v1454, %v1646
        %v1711 = vmul.f32 %v1455, %v1647
        %v1712 = vmul.f32 %v1456, %v1648
        %v1713 = vmul.f32 %v1457, %v1649
        %v1714 = vmul.f32 %v1458, %v1650
        %v1715 = vmul.f32 %v1459, %v1651
        %v1716 = vmul.f32 %v1460, %v1652
        %v1717 = vmul.f32 %v1461, %v1653
        %v1718 = vmul.f32 %v1462, %v1654
        %v1719 = vmul.f32 %v1463, %v1655
        %v1720 = vmul.f32 %v1464, %v1656
        %v1721 = vmul.f32 %v1465, %v1657
        %v1722 = vmul.f32 %v1466, %v1658
        %v1723 = vmul.f32 %v1467, %v1659
        %v1724 = vmul.f32 %v1468, %v1660
        %v1725 = vmul.f32 %v1469, %v1661
        %v1726 = vmul.f32 %v1470, %v1662
        %v1727 = vmul.f32 %v1471, %v1663
        %v1728 = vmul.f32 %v1472, %v1664
        %v1729 = vmul.f32 %v1473, %v1665
        %v1730 = vmul.f32 %v1474, %v1666
        %v1731 = vmul.f32 %v1475, %v1667
        %v1732 = vmul.f32 %v1476, %v1668
        %v1733 = vmul.f32 %v1477, %v1669
        %v1734 = vmul.f32 %v1478, %v1670
        %v1735 = vmul.f32 %v1479, %v1671
        %v1736 = vmul.f32 %v1480, %v1672
        %v1737 = vmul.f32 %v1481, %v1673
        %v1738 = vmul.f32 %v1482, %v1674
        %v1739 = vmul.f32 %v1483, %v1675
        %v1740 = vmul.f32 %v1484, %v1676
        %v1741 = vmul.f32 %v1485, %v1677
        %v1742 = vmul.f32 %v1486, %v1678
        %v1743 = vmul.f32 %v1487, %v1679
        %v1744 = vmul.f32 %v1488, %v1680
        %v1745 = vmul.f32 %v1489, %v1681
        %v1746 = vmul.f32 %v1490, %v1682
        %v1747 = vmul.f32 %v1491, %v1683
        %v1748 = vmul.f32 %v1492, %v1684
        %v1749 = vmul.f32 %v1493, %v1685
        %v1750 = vmul.f32 %v1494, %v1686
        %v1751 = vmul.f32 %v1495, %v1687
        %v1752 = vmul.f32 %v1496, %v1688
        %v1753 = vmul.f32 %v1497, %v1689
        %v1754 = vmul.f32 %v1498, %v1690
        %v1755 = vmul.f32 %v1499, %v1691
        %v1756 = vmul.f32 %v1500, %v1692
        %v1757 = vmul.f32 %v1501, %v1693
        %v1758 = vmul.f32 %v1502, %v1694
        %v1759 = vmul.f32 %v1503, %v1695
        %v1760 = vmul.f32 %v1504, %v1696
        %v1761 = vmul.f32 %v1505, %v1697
        %v1762 = vmul.f32 %v1506, %v1698
        %v1763 = vmul.f32 %v1507, %v1699
        %v1764 = vmul.f32 %v1508, %v1700
        %v1765 = vmul.f32 %v1509, %v1701
        %v1766 = vmul.f32 %v1510, %v1702
        %v1767 = vmul.f32 %v1511, %v1703
        %v1768 = vmul.f32 %v1512, %v1704
        %v1769 = vmul.f32 %v1513, %v1705
        %v1770 = vmul.f32 %v1514, %v1706
        %v1771 = vmul.f32 %v1515, %v1707
        %v1772 = vmul.f32 %v1516, %v1708
        %v1773 = vpack.c.bf16 %v1711, %v1709
        %v1774 = vpack.c.bf16 %v1712, %v1710
        %v1775 = vpack.c.bf16 %v1715, %v1713
        %v1776 = vpack.c.bf16 %v1716, %v1714
        %v1777 = vpack.c.bf16 %v1719, %v1717
        %v1778 = vpack.c.bf16 %v1720, %v1718
        %v1779 = vpack.c.bf16 %v1723, %v1721
        %v1780 = vpack.c.bf16 %v1724, %v1722
        %v1781 = vpack.c.bf16 %v1727, %v1725
        %v1782 = vpack.c.bf16 %v1728, %v1726
        %v1783 = vpack.c.bf16 %v1731, %v1729
        %v1784 = vpack.c.bf16 %v1732, %v1730
        %v1785 = vpack.c.bf16 %v1735, %v1733
        %v1786 = vpack.c.bf16 %v1736, %v1734
        %v1787 = vpack.c.bf16 %v1739, %v1737
        %v1788 = vpack.c.bf16 %v1740, %v1738
        %v1789 = vpack.c.bf16 %v1743, %v1741
        %v1790 = vpack.c.bf16 %v1744, %v1742
        %v1791 = vpack.c.bf16 %v1747, %v1745
        %v1792 = vpack.c.bf16 %v1748, %v1746
        %v1793 = vpack.c.bf16 %v1751, %v1749
        %v1794 = vpack.c.bf16 %v1752, %v1750
        %v1795 = vpack.c.bf16 %v1755, %v1753
        %v1796 = vpack.c.bf16 %v1756, %v1754
        %v1797 = vpack.c.bf16 %v1759, %v1757
        %v1798 = vpack.c.bf16 %v1760, %v1758
        %v1799 = vpack.c.bf16 %v1763, %v1761
        %v1800 = vpack.c.bf16 %v1764, %v1762
        %v1801 = vpack.c.bf16 %v1767, %v1765
        %v1802 = vpack.c.bf16 %v1768, %v1766
        %v1803 = vpack.c.bf16 %v1771, %v1769
        %v1804 = vpack.c.bf16 %v1772, %v1770
        %v1805 = vld [vmem:[#allocation8] sm:$0xf]
        %v1806 = vld [vmem:[#allocation8 + $0x4] sm:$0xf]
        %v1807 = vld [vmem:[#allocation8 + $0x8] sm:$0xf]
        %v1808 = vld [vmem:[#allocation8 + $0xc] sm:$0xf]
        %v1809 = vld [vmem:[#allocation8 + $0x10] sm:$0xf]
        %v1810 = vld [vmem:[#allocation8 + $0x14] sm:$0xf]
        %v1811 = vld [vmem:[#allocation8 + $0x18] sm:$0xf]
        %v1812 = vld [vmem:[#allocation8 + $0x1c] sm:$0xf]
        %v1813 = vld [vmem:[#allocation8 + $0x20] sm:$0xf]
        %v1814 = vld [vmem:[#allocation8 + $0x24] sm:$0xf]
        %v1815 = vld [vmem:[#allocation8 + $0x28] sm:$0xf]
        %v1816 = vld [vmem:[#allocation8 + $0x2c] sm:$0xf]
        %v1817 = vld [vmem:[#allocation8 + $0x30] sm:$0xf]
        %v1818 = vld [vmem:[#allocation8 + $0x34] sm:$0xf]
        %v1819 = vld [vmem:[#allocation8 + $0x38] sm:$0xf]
        %v1820 = vld [vmem:[#allocation8 + $0x3c] sm:$0xf]
        %v1821 = vld [vmem:[#allocation8 + $0x40] sm:$0xf]
        %v1822 = vld [vmem:[#allocation8 + $0x44] sm:$0xf]
        %v1823 = vld [vmem:[#allocation8 + $0x48] sm:$0xf]
        %v1824 = vld [vmem:[#allocation8 + $0x4c] sm:$0xf]
        %v1825 = vld [vmem:[#allocation8 + $0x50] sm:$0xf]
        %v1826 = vld [vmem:[#allocation8 + $0x54] sm:$0xf]
        %v1827 = vld [vmem:[#allocation8 + $0x58] sm:$0xf]
        %v1828 = vld [vmem:[#allocation8 + $0x5c] sm:$0xf]
        %v1829 = vld [vmem:[#allocation8 + $0x60] sm:$0xf]
        %v1830 = vld [vmem:[#allocation8 + $0x64] sm:$0xf]
        %v1831 = vld [vmem:[#allocation8 + $0x68] sm:$0xf]
        %v1832 = vld [vmem:[#allocation8 + $0x6c] sm:$0xf]
        %v1833 = vld [vmem:[#allocation8 + $0x70] sm:$0xf]
        %v1834 = vld [vmem:[#allocation8 + $0x74] sm:$0xf]
        %v1835 = vld [vmem:[#allocation8 + $0x78] sm:$0xf]
        %v1836 = vld [vmem:[#allocation8 + $0x7c] sm:$0xf]
        %v1837 = vld [vmem:[%s6] sm:$0x1]
        %v1839 = vlaneseq
        %v1840 = vshrl.u32 %v1839, 7
        %v1841 = vsub.s32 0, %v1840
        %v1842 = vrot.slane %v1837, %v1841
        %v1876 = vunpack.c.l.b16 %v1805
        %v1877 = vunpack.c.l.b16 %v1806
        %v1878 = vunpack.c.l.b16 %v1807
        %v1879 = vunpack.c.l.b16 %v1808
        %v1880 = vunpack.c.l.b16 %v1809
        %v1881 = vunpack.c.l.b16 %v1810
        %v1882 = vunpack.c.l.b16 %v1811
        %v1883 = vunpack.c.l.b16 %v1812
        %v1884 = vunpack.c.l.b16 %v1813
        %v1885 = vunpack.c.l.b16 %v1814
        %v1886 = vunpack.c.l.b16 %v1815
        %v1887 = vunpack.c.l.b16 %v1816
        %v1888 = vunpack.c.l.b16 %v1817
        %v1889 = vunpack.c.l.b16 %v1818
        %v1890 = vunpack.c.l.b16 %v1819
        %v1891 = vunpack.c.l.b16 %v1820
        %v1892 = vunpack.c.l.b16 %v1821
        %v1893 = vunpack.c.l.b16 %v1822
        %v1894 = vunpack.c.l.b16 %v1823
        %v1895 = vunpack.c.l.b16 %v1824
        %v1896 = vunpack.c.l.b16 %v1825
        %v1897 = vunpack.c.l.b16 %v1826
        %v1898 = vunpack.c.l.b16 %v1827
        %v1899 = vunpack.c.l.b16 %v1828
        %v1900 = vunpack.c.l.b16 %v1829
        %v1901 = vunpack.c.l.b16 %v1830
        %v1902 = vunpack.c.l.b16 %v1831
        %v1903 = vunpack.c.l.b16 %v1832
        %v1904 = vunpack.c.l.b16 %v1833
        %v1905 = vunpack.c.l.b16 %v1834
        %v1906 = vunpack.c.l.b16 %v1835
        %v1907 = vunpack.c.l.b16 %v1836
        %v1908 = vpack.c.b16 %v1877, %v1876
        %v1909 = vpack.c.b16 %v1879, %v1878
        %v1910 = vpack.c.b16 %v1881, %v1880
        %v1911 = vpack.c.b16 %v1883, %v1882
        %v1912 = vpack.c.b16 %v1885, %v1884
        %v1913 = vpack.c.b16 %v1887, %v1886
        %v1914 = vpack.c.b16 %v1889, %v1888
        %v1915 = vpack.c.b16 %v1891, %v1890
        %v1916 = vpack.c.b16 %v1893, %v1892
        %v1917 = vpack.c.b16 %v1895, %v1894
        %v1918 = vpack.c.b16 %v1897, %v1896
        %v1919 = vpack.c.b16 %v1899, %v1898
        %v1920 = vpack.c.b16 %v1901, %v1900
        %v1921 = vpack.c.b16 %v1903, %v1902
        %v1922 = vpack.c.b16 %v1905, %v1904
        %v1923 = vpack.c.b16 %v1907, %v1906
        %1940 = vmatprep.subr.bf16.mxu0 0
        %1941 = vmatpush1.bf16.msra.mxu0 %v1908
        %1942 = vmatprep.subr.bf16.mxu0 0
        %1943 = vmatpush1.bf16.msra.mxu0 %v1909
        %1944 = vmatprep.subr.bf16.mxu0 0
        %1945 = vmatpush1.bf16.msra.mxu0 %v1910
        %1946 = vmatprep.subr.bf16.mxu0 0
        %1947 = vmatpush1.bf16.msra.mxu0 %v1911
        %1948 = vmatprep.subr.bf16.mxu0 0
        %1949 = vmatpush1.bf16.msra.mxu0 %v1912
        %1950 = vmatprep.subr.bf16.mxu0 0
        %1951 = vmatpush1.bf16.msra.mxu0 %v1913
        %1952 = vmatprep.subr.bf16.mxu0 0
        %1953 = vmatpush1.bf16.msra.mxu0 %v1914
        %1954 = vmatprep.subr.bf16.mxu0 0
        %1955 = vmatpush1.bf16.msra.mxu0 %v1915
        %1956 = vmatprep.subr.bf16.mxu0 0
        %1957 = vmatpush1.bf16.msra.mxu0 %v1916
        %1958 = vmatprep.subr.bf16.mxu0 0
        %1959 = vmatpush1.bf16.msra.mxu0 %v1917
        %1960 = vmatprep.subr.bf16.mxu0 0
        %1961 = vmatpush1.bf16.msra.mxu0 %v1918
        %1962 = vmatprep.subr.bf16.mxu0 0
        %1963 = vmatpush1.bf16.msra.mxu0 %v1919
        %1964 = vmatprep.subr.bf16.mxu0 0
        %1965 = vmatpush1.bf16.msra.mxu0 %v1920
        %1966 = vmatprep.subr.bf16.mxu0 0
        %1967 = vmatpush1.bf16.msra.mxu0 %v1921
        %1968 = vmatprep.subr.bf16.mxu0 0
        %1969 = vmatpush1.bf16.msra.mxu0 %v1922
        %1970 = vmatprep.subr.bf16.mxu0 0
        %1971 = vmatpush1.bf16.msra.mxu0 %v1923
        %1972 = vmatprep.mubr.bf16.mxu0 %v1774
        %1973 = vmatmul.mubr.bf16.gmra.mrb[0].mxu0 %v1773
        %v1974 = vpop.f32.mrb[0].mxu0
        %v1975 = vadd.f32 %v1842, %v1974
        %v1976 = vpop.f32.mrb[0].mxu0
        %v1977 = vpop.f32.mrb[0].mxu0
        %v1978 = vadd.f32 %v1842, %v1977
        %v1979 = vpop.f32.mrb[0].mxu0
        %1980 = vmatprep.mubr.bf16.mxu0 %v1776
        %1981 = vmatmul.mubr.bf16.gmra.mrb[0].mxu0 %v1775
        %v1982 = vpop.f32.mrb[0].mxu0
        %v1983 = vadd.f32 %v1842, %v1982
        %v1984 = vpop.f32.mrb[0].mxu0
        %v1985 = vpop.f32.mrb[0].mxu0
        %v1986 = vadd.f32 %v1842, %v1985
        %v1987 = vpop.f32.mrb[0].mxu0
        %1988 = vmatprep.mubr.bf16.mxu0 %v1778
        %1989 = vmatmul.mubr.bf16.gmra.mrb[0].mxu0 %v1777
        %v1990 = vpop.f32.mrb[0].mxu0
        %v1991 = vadd.f32 %v1842, %v1990
        %v1992 = vpop.f32.mrb[0].mxu0
        %v1993 = vpop.f32.mrb[0].mxu0
        %v1994 = vadd.f32 %v1842, %v1993
        %v1995 = vpop.f32.mrb[0].mxu0
        %1996 = vmatprep.mubr.bf16.mxu0 %v1780
        %1997 = vmatmul.mubr.bf16.gmra.mrb[0].mxu0 %v1779
        %v1998 = vpop.f32.mrb[0].mxu0
        %v1999 = vadd.f32 %v1842, %v1998
        %v2000 = vpop.f32.mrb[0].mxu0
        %v2001 = vpop.f32.mrb[0].mxu0
        %v2002 = vadd.f32 %v1842, %v2001
        %v2003 = vpop.f32.mrb[0].mxu0
        %2004 = vmatprep.mubr.bf16.mxu0 %v1782
        %2005 = vmatmul.mubr.bf16.gmra.mrb[0].mxu0 %v1781
        %v2006 = vpop.f32.mrb[0].mxu0
        %v2007 = vadd.f32 %v1842, %v2006
        %v2008 = vpop.f32.mrb[0].mxu0
        %v2009 = vpop.f32.mrb[0].mxu0
        %v2010 = vadd.f32 %v1842, %v2009
        %v2011 = vpop.f32.mrb[0].mxu0
        %2012 = vmatprep.mubr.bf16.mxu0 %v1784
        %2013 = vmatmul.mubr.bf16.gmra.mrb[0].mxu0 %v1783
        %v2014 = vpop.f32.mrb[0].mxu0
        %v2015 = vadd.f32 %v1842, %v2014
        %v2016 = vpop.f32.mrb[0].mxu0
        %v2017 = vpop.f32.mrb[0].mxu0
        %v2018 = vadd.f32 %v1842, %v2017
        %v2019 = vpop.f32.mrb[0].mxu0
        %2020 = vmatprep.mubr.bf16.mxu0 %v1786
        %2021 = vmatmul.mubr.bf16.gmra.mrb[0].mxu0 %v1785
        %v2022 = vpop.f32.mrb[0].mxu0
        %v2023 = vadd.f32 %v1842, %v2022
        %v2024 = vpop.f32.mrb[0].mxu0
        %v2025 = vpop.f32.mrb[0].mxu0
        %v2026 = vadd.f32 %v1842, %v2025
        %v2027 = vpop.f32.mrb[0].mxu0
        %2028 = vmatprep.mubr.bf16.mxu0 %v1788
        %2029 = vmatmul.mubr.bf16.gmra.mrb[0].mxu0 %v1787
        %v2030 = vpop.f32.mrb[0].mxu0
        %v2031 = vadd.f32 %v1842, %v2030
        %v2032 = vpop.f32.mrb[0].mxu0
        %v2033 = vpop.f32.mrb[0].mxu0
        %v2034 = vadd.f32 %v1842, %v2033
        %v2035 = vpop.f32.mrb[0].mxu0
        %2036 = vmatprep.mubr.bf16.mxu0 %v1790
        %2037 = vmatmul.mubr.bf16.gmra.mrb[0].mxu0 %v1789
        %v2038 = vpop.f32.mrb[0].mxu0
        %v2039 = vadd.f32 %v1842, %v2038
        %v2040 = vpop.f32.mrb[0].mxu0
        %v2041 = vpop.f32.mrb[0].mxu0
        %v2042 = vadd.f32 %v1842, %v2041
        %v2043 = vpop.f32.mrb[0].mxu0
        %2044 = vmatprep.mubr.bf16.mxu0 %v1792
        %2045 = vmatmul.mubr.bf16.gmra.mrb[0].mxu0 %v1791
        %v2046 = vpop.f32.mrb[0].mxu0
        %v2047 = vadd.f32 %v1842, %v2046
        %v2048 = vpop.f32.mrb[0].mxu0
        %v2049 = vpop.f32.mrb[0].mxu0
        %v2050 = vadd.f32 %v1842, %v2049
        %v2051 = vpop.f32.mrb[0].mxu0
        %2052 = vmatprep.mubr.bf16.mxu0 %v1794
        %2053 = vmatmul.mubr.bf16.gmra.mrb[0].mxu0 %v1793
        %v2054 = vpop.f32.mrb[0].mxu0
        %v2055 = vadd.f32 %v1842, %v2054
        %v2056 = vpop.f32.mrb[0].mxu0
        %v2057 = vpop.f32.mrb[0].mxu0
        %v2058 = vadd.f32 %v1842, %v2057
        %v2059 = vpop.f32.mrb[0].mxu0
        %2060 = vmatprep.mubr.bf16.mxu0 %v1796
        %2061 = vmatmul.mubr.bf16.gmra.mrb[0].mxu0 %v1795
        %v2062 = vpop.f32.mrb[0].mxu0
        %v2063 = vadd.f32 %v1842, %v2062
        %v2064 = vpop.f32.mrb[0].mxu0
        %v2065 = vpop.f32.mrb[0].mxu0
        %v2066 = vadd.f32 %v1842, %v2065
        %v2067 = vpop.f32.mrb[0].mxu0
        %2068 = vmatprep.mubr.bf16.mxu0 %v1798
        %2069 = vmatmul.mubr.bf16.gmra.mrb[0].mxu0 %v1797
        %v2070 = vpop.f32.mrb[0].mxu0
        %v2071 = vadd.f32 %v1842, %v2070
        %v2072 = vpop.f32.mrb[0].mxu0
        %v2073 = vpop.f32.mrb[0].mxu0
        %v2074 = vadd.f32 %v1842, %v2073
        %v2075 = vpop.f32.mrb[0].mxu0
        %2076 = vmatprep.mubr.bf16.mxu0 %v1800
        %2077 = vmatmul.mubr.bf16.gmra.mrb[0].mxu0 %v1799
        %v2078 = vpop.f32.mrb[0].mxu0
        %v2079 = vadd.f32 %v1842, %v2078
        %v2080 = vpop.f32.mrb[0].mxu0
        %v2081 = vpop.f32.mrb[0].mxu0
        %v2082 = vadd.f32 %v1842, %v2081
        %v2083 = vpop.f32.mrb[0].mxu0
        %2084 = vmatprep.mubr.bf16.mxu0 %v1802
        %2085 = vmatmul.mubr.bf16.gmra.mrb[0].mxu0 %v1801
        %v2086 = vpop.f32.mrb[0].mxu0
        %v2087 = vadd.f32 %v1842, %v2086
        %v2088 = vpop.f32.mrb[0].mxu0
        %v2089 = vpop.f32.mrb[0].mxu0
        %v2090 = vadd.f32 %v1842, %v2089
        %v2091 = vpop.f32.mrb[0].mxu0
        %2092 = vmatprep.mubr.bf16.mxu0 %v1804
        %2093 = vmatmul.mubr.bf16.gmra.mrb[0].mxu0 %v1803
        %v2094 = vpop.f32.mrb[0].mxu0
        %v2095 = vadd.f32 %v1842, %v2094
        %v2096 = vpop.f32.mrb[0].mxu0
        %v2097 = vpop.f32.mrb[0].mxu0
        %v2098 = vadd.f32 %v1842, %v2097
        %v2099 = vpop.f32.mrb[0].mxu0
        %2100 = vdwg.mxu0
        %v2101 = vld [vmem:[%s7] sm:$0x1]
        %v2102 = vld [vmem:[%s8] sm:$0x1]
        %2103 = vadd.xlane.f32.xlu0 %v1975
        %v2104 = vpop.xlane.xlu0 %2103
        %2105 = vadd.xlane.f32.xlu0 %v1978
        %v2106 = vpop.xlane.xlu0 %2105
        %2107 = vadd.xlane.f32.xlu0 %v1983
        %v2108 = vpop.xlane.xlu0 %2107
        %2109 = vadd.xlane.f32.xlu0 %v1986
        %v2110 = vpop.xlane.xlu0 %2109
        %2111 = vadd.xlane.f32.xlu0 %v1991
        %v2112 = vpop.xlane.xlu0 %2111
        %2113 = vadd.xlane.f32.xlu0 %v1994
        %v2114 = vpop.xlane.xlu0 %2113
        %2115 = vadd.xlane.f32.xlu0 %v1999
        %v2116 = vpop.xlane.xlu0 %2115
        %2117 = vadd.xlane.f32.xlu0 %v2002
        %v2118 = vpop.xlane.xlu0 %2117
        %2119 = vadd.xlane.f32.xlu0 %v2007
        %v2120 = vpop.xlane.xlu0 %2119
        %2121 = vadd.xlane.f32.xlu0 %v2010
        %v2122 = vpop.xlane.xlu0 %2121
        %2123 = vadd.xlane.f32.xlu0 %v2015
        %v2124 = vpop.xlane.xlu0 %2123
        %2125 = vadd.xlane.f32.xlu0 %v2018
        %v2126 = vpop.xlane.xlu0 %2125
        %2127 = vadd.xlane.f32.xlu0 %v2023
        %v2128 = vpop.xlane.xlu0 %2127
        %2129 = vadd.xlane.f32.xlu0 %v2026
        %v2130 = vpop.xlane.xlu0 %2129
        %2131 = vadd.xlane.f32.xlu0 %v2031
        %v2132 = vpop.xlane.xlu0 %2131
        %2133 = vadd.xlane.f32.xlu0 %v2034
        %v2134 = vpop.xlane.xlu0 %2133
        %2135 = vadd.xlane.f32.xlu0 %v2039
        %v2136 = vpop.xlane.xlu0 %2135
        %2137 = vadd.xlane.f32.xlu0 %v2042
        %v2138 = vpop.xlane.xlu0 %2137
        %2139 = vadd.xlane.f32.xlu0 %v2047
        %v2140 = vpop.xlane.xlu0 %2139
        %2141 = vadd.xlane.f32.xlu0 %v2050
        %v2142 = vpop.xlane.xlu0 %2141
        %2143 = vadd.xlane.f32.xlu0 %v2055
        %v2144 = vpop.xlane.xlu0 %2143
        %2145 = vadd.xlane.f32.xlu0 %v2058
        %v2146 = vpop.xlane.xlu0 %2145
        %2147 = vadd.xlane.f32.xlu0 %v2063
        %v2148 = vpop.xlane.xlu0 %2147
        %2149 = vadd.xlane.f32.xlu0 %v2066
        %v2150 = vpop.xlane.xlu0 %2149
        %2151 = vadd.xlane.f32.xlu0 %v2071
        %v2152 = vpop.xlane.xlu0 %2151
        %2153 = vadd.xlane.f32.xlu0 %v2074
        %v2154 = vpop.xlane.xlu0 %2153
        %2155 = vadd.xlane.f32.xlu0 %v2079
        %v2156 = vpop.xlane.xlu0 %2155
        %2157 = vadd.xlane.f32.xlu0 %v2082
        %v2158 = vpop.xlane.xlu0 %2157
        %2159 = vadd.xlane.f32.xlu0 %v2087
        %v2160 = vpop.xlane.xlu0 %2159
        %2161 = vadd.xlane.f32.xlu0 %v2090
        %v2162 = vpop.xlane.xlu0 %2161
        %2163 = vadd.xlane.f32.xlu0 %v2095
        %v2164 = vpop.xlane.xlu0 %2163
        %2165 = vadd.xlane.f32.xlu0 %v2098
        %v2166 = vpop.xlane.xlu0 %2165
        %v2167 = vrcp.pop 128.0
        %v2168 = vmul.f32 %v2104, %v2167
        %v2169 = vmul.f32 %v2106, %v2167
        %v2170 = vmul.f32 %v2108, %v2167
        %v2171 = vmul.f32 %v2110, %v2167
        %v2172 = vmul.f32 %v2112, %v2167
        %v2173 = vmul.f32 %v2114, %v2167
        %v2174 = vmul.f32 %v2116, %v2167
        %v2175 = vmul.f32 %v2118, %v2167
        %v2176 = vmul.f32 %v2120, %v2167
        %v2177 = vmul.f32 %v2122, %v2167
        %v2178 = vmul.f32 %v2124, %v2167
        %v2179 = vmul.f32 %v2126, %v2167
        %v2180 = vmul.f32 %v2128, %v2167
        %v2181 = vmul.f32 %v2130, %v2167
        %v2182 = vmul.f32 %v2132, %v2167
        %v2183 = vmul.f32 %v2134, %v2167
        %v2184 = vmul.f32 %v2136, %v2167
        %v2185 = vmul.f32 %v2138, %v2167
        %v2186 = vmul.f32 %v2140, %v2167
        %v2187 = vmul.f32 %v2142, %v2167
        %v2188 = vmul.f32 %v2144, %v2167
        %v2189 = vmul.f32 %v2146, %v2167
        %v2190 = vmul.f32 %v2148, %v2167
        %v2191 = vmul.f32 %v2150, %v2167
        %v2192 = vmul.f32 %v2152, %v2167
        %v2193 = vmul.f32 %v2154, %v2167
        %v2194 = vmul.f32 %v2156, %v2167
        %v2195 = vmul.f32 %v2158, %v2167
        %v2196 = vmul.f32 %v2160, %v2167
        %v2197 = vmul.f32 %v2162, %v2167
        %v2198 = vmul.f32 %v2164, %v2167
        %v2199 = vmul.f32 %v2166, %v2167
        %v2200 = vsub.f32 %v1975, %v2168
        %v2201 = vsub.f32 %v1978, %v2169
        %v2202 = vsub.f32 %v1983, %v2170
        %v2203 = vsub.f32 %v1986, %v2171
        %v2204 = vsub.f32 %v1991, %v2172
        %v2205 = vsub.f32 %v1994, %v2173
        %v2206 = vsub.f32 %v1999, %v2174
        %v2207 = vsub.f32 %v2002, %v2175
        %v2208 = vsub.f32 %v2007, %v2176
        %v2209 = vsub.f32 %v2010, %v2177
        %v2210 = vsub.f32 %v2015, %v2178
        %v2211 = vsub.f32 %v2018, %v2179
        %v2212 = vsub.f32 %v2023, %v2180
        %v2213 = vsub.f32 %v2026, %v2181
        %v2214 = vsub.f32 %v2031, %v2182
        %v2215 = vsub.f32 %v2034, %v2183
        %v2216 = vsub.f32 %v2039, %v2184
        %v2217 = vsub.f32 %v2042, %v2185
        %v2218 = vsub.f32 %v2047, %v2186
        %v2219 = vsub.f32 %v2050, %v2187
        %v2220 = vsub.f32 %v2055, %v2188
        %v2221 = vsub.f32 %v2058, %v2189
        %v2222 = vsub.f32 %v2063, %v2190
        %v2223 = vsub.f32 %v2066, %v2191
        %v2224 = vsub.f32 %v2071, %v2192
        %v2225 = vsub.f32 %v2074, %v2193
        %v2226 = vsub.f32 %v2079, %v2194
        %v2227 = vsub.f32 %v2082, %v2195
        %v2228 = vsub.f32 %v2087, %v2196
        %v2229 = vsub.f32 %v2090, %v2197
        %v2230 = vsub.f32 %v2095, %v2198
        %v2231 = vsub.f32 %v2098, %v2199
        %v2232 = vmul.f32 %v2200, %v2200
        %v2233 = vmul.f32 %v2201, %v2201
        %v2234 = vmul.f32 %v2202, %v2202
        %v2235 = vmul.f32 %v2203, %v2203
        %v2236 = vmul.f32 %v2204, %v2204
        %v2237 = vmul.f32 %v2205, %v2205
        %v2238 = vmul.f32 %v2206, %v2206
        %v2239 = vmul.f32 %v2207, %v2207
        %v2240 = vmul.f32 %v2208, %v2208
        %v2241 = vmul.f32 %v2209, %v2209
        %v2242 = vmul.f32 %v2210, %v2210
        %v2243 = vmul.f32 %v2211, %v2211
        %v2244 = vmul.f32 %v2212, %v2212
        %v2245 = vmul.f32 %v2213, %v2213
        %v2246 = vmul.f32 %v2214, %v2214
        %v2247 = vmul.f32 %v2215, %v2215
        %v2248 = vmul.f32 %v2216, %v2216
        %v2249 = vmul.f32 %v2217, %v2217
        %v2250 = vmul.f32 %v2218, %v2218
        %v2251 = vmul.f32 %v2219, %v2219
        %v2252 = vmul.f32 %v2220, %v2220
        %v2253 = vmul.f32 %v2221, %v2221
        %v2254 = vmul.f32 %v2222, %v2222
        %v2255 = vmul.f32 %v2223, %v2223
        %v2256 = vmul.f32 %v2224, %v2224
        %v2257 = vmul.f32 %v2225, %v2225
        %v2258 = vmul.f32 %v2226, %v2226
        %v2259 = vmul.f32 %v2227, %v2227
        %v2260 = vmul.f32 %v2228, %v2228
        %v2261 = vmul.f32 %v2229, %v2229
        %v2262 = vmul.f32 %v2230, %v2230
        %v2263 = vmul.f32 %v2231, %v2231
        %2264 = vadd.xlane.f32.xlu0 %v2232
        %v2265 = vpop.xlane.xlu0 %2264
        %2266 = vadd.xlane.f32.xlu0 %v2233
        %v2267 = vpop.xlane.xlu0 %2266
        %2268 = vadd.xlane.f32.xlu0 %v2234
        %v2269 = vpop.xlane.xlu0 %2268
        %2270 = vadd.xlane.f32.xlu0 %v2235
        %v2271 = vpop.xlane.xlu0 %2270
        %2272 = vadd.xlane.f32.xlu0 %v2236
        %v2273 = vpop.xlane.xlu0 %2272
        %2274 = vadd.xlane.f32.xlu0 %v2237
        %v2275 = vpop.xlane.xlu0 %2274
        %2276 = vadd.xlane.f32.xlu0 %v2238
        %v2277 = vpop.xlane.xlu0 %2276
        %2278 = vadd.xlane.f32.xlu0 %v2239
        %v2279 = vpop.xlane.xlu0 %2278
        %2280 = vadd.xlane.f32.xlu0 %v2240
        %v2281 = vpop.xlane.xlu0 %2280
        %2282 = vadd.xlane.f32.xlu0 %v2241
        %v2283 = vpop.xlane.xlu0 %2282
        %2284 = vadd.xlane.f32.xlu0 %v2242
        %v2285 = vpop.xlane.xlu0 %2284
        %2286 = vadd.xlane.f32.xlu0 %v2243
        %v2287 = vpop.xlane.xlu0 %2286
        %2288 = vadd.xlane.f32.xlu0 %v2244
        %v2289 = vpop.xlane.xlu0 %2288
        %2290 = vadd.xlane.f32.xlu0 %v2245
        %v2291 = vpop.xlane.xlu0 %2290
        %2292 = vadd.xlane.f32.xlu0 %v2246
        %v2293 = vpop.xlane.xlu0 %2292
        %2294 = vadd.xlane.f32.xlu0 %v2247
        %v2295 = vpop.xlane.xlu0 %2294
        %2296 = vadd.xlane.f32.xlu0 %v2248
        %v2297 = vpop.xlane.xlu0 %2296
        %2298 = vadd.xlane.f32.xlu0 %v2249
        %v2299 = vpop.xlane.xlu0 %2298
        %2300 = vadd.xlane.f32.xlu0 %v2250
        %v2301 = vpop.xlane.xlu0 %2300
        %2302 = vadd.xlane.f32.xlu0 %v2251
        %v2303 = vpop.xlane.xlu0 %2302
        %2304 = vadd.xlane.f32.xlu0 %v2252
        %v2305 = vpop.xlane.xlu0 %2304
        %2306 = vadd.xlane.f32.xlu0 %v2253
        %v2307 = vpop.xlane.xlu0 %2306
        %2308 = vadd.xlane.f32.xlu0 %v2254
        %v2309 = vpop.xlane.xlu0 %2308
        %2310 = vadd.xlane.f32.xlu0 %v2255
        %v2311 = vpop.xlane.xlu0 %2310
        %2312 = vadd.xlane.f32.xlu0 %v2256
        %v2313 = vpop.xlane.xlu0 %2312
        %2314 = vadd.xlane.f32.xlu0 %v2257
        %v2315 = vpop.xlane.xlu0 %2314
        %2316 = vadd.xlane.f32.xlu0 %v2258
        %v2317 = vpop.xlane.xlu0 %2316
        %2318 = vadd.xlane.f32.xlu0 %v2259
        %v2319 = vpop.xlane.xlu0 %2318
        %2320 = vadd.xlane.f32.xlu0 %v2260
        %v2321 = vpop.xlane.xlu0 %2320
        %2322 = vadd.xlane.f32.xlu0 %v2261
        %v2323 = vpop.xlane.xlu0 %2322
        %2324 = vadd.xlane.f32.xlu0 %v2262
        %v2325 = vpop.xlane.xlu0 %2324
        %2326 = vadd.xlane.f32.xlu0 %v2263
        %v2327 = vpop.xlane.xlu0 %2326
        %v2328 = vmul.f32 %v2265, %v2167
        %v2329 = vmul.f32 %v2267, %v2167
        %v2330 = vmul.f32 %v2269, %v2167
        %v2331 = vmul.f32 %v2271, %v2167
        %v2332 = vmul.f32 %v2273, %v2167
        %v2333 = vmul.f32 %v2275, %v2167
        %v2334 = vmul.f32 %v2277, %v2167
        %v2335 = vmul.f32 %v2279, %v2167
        %v2336 = vmul.f32 %v2281, %v2167
        %v2337 = vmul.f32 %v2283, %v2167
        %v2338 = vmul.f32 %v2285, %v2167
        %v2339 = vmul.f32 %v2287, %v2167
        %v2340 = vmul.f32 %v2289, %v2167
        %v2341 = vmul.f32 %v2291, %v2167
        %v2342 = vmul.f32 %v2293, %v2167
        %v2343 = vmul.f32 %v2295, %v2167
        %v2344 = vmul.f32 %v2297, %v2167
        %v2345 = vmul.f32 %v2299, %v2167
        %v2346 = vmul.f32 %v2301, %v2167
        %v2347 = vmul.f32 %v2303, %v2167
        %v2348 = vmul.f32 %v2305, %v2167
        %v2349 = vmul.f32 %v2307, %v2167
        %v2350 = vmul.f32 %v2309, %v2167
        %v2351 = vmul.f32 %v2311, %v2167
        %v2352 = vmul.f32 %v2313, %v2167
        %v2353 = vmul.f32 %v2315, %v2167
        %v2354 = vmul.f32 %v2317, %v2167
        %v2355 = vmul.f32 %v2319, %v2167
        %v2356 = vmul.f32 %v2321, %v2167
        %v2357 = vmul.f32 %v2323, %v2167
        %v2358 = vmul.f32 %v2325, %v2167
        %v2359 = vmul.f32 %v2327, %v2167
        %v2360 = vadd.f32 %v2328, 1e-05
        %v2361 = vadd.f32 %v2329, 1e-05
        %v2362 = vadd.f32 %v2330, 1e-05
        %v2363 = vadd.f32 %v2331, 1e-05
        %v2364 = vadd.f32 %v2332, 1e-05
        %v2365 = vadd.f32 %v2333, 1e-05
        %v2366 = vadd.f32 %v2334, 1e-05
        %v2367 = vadd.f32 %v2335, 1e-05
        %v2368 = vadd.f32 %v2336, 1e-05
        %v2369 = vadd.f32 %v2337, 1e-05
        %v2370 = vadd.f32 %v2338, 1e-05
        %v2371 = vadd.f32 %v2339, 1e-05
        %v2372 = vadd.f32 %v2340, 1e-05
        %v2373 = vadd.f32 %v2341, 1e-05
        %v2374 = vadd.f32 %v2342, 1e-05
        %v2375 = vadd.f32 %v2343, 1e-05
        %v2376 = vadd.f32 %v2344, 1e-05
        %v2377 = vadd.f32 %v2345, 1e-05
        %v2378 = vadd.f32 %v2346, 1e-05
        %v2379 = vadd.f32 %v2347, 1e-05
        %v2380 = vadd.f32 %v2348, 1e-05
        %v2381 = vadd.f32 %v2349, 1e-05
        %v2382 = vadd.f32 %v2350, 1e-05
        %v2383 = vadd.f32 %v2351, 1e-05
        %v2384 = vadd.f32 %v2352, 1e-05
        %v2385 = vadd.f32 %v2353, 1e-05
        %v2386 = vadd.f32 %v2354, 1e-05
        %v2387 = vadd.f32 %v2355, 1e-05
        %v2388 = vadd.f32 %v2356, 1e-05
        %v2389 = vadd.f32 %v2357, 1e-05
        %v2390 = vadd.f32 %v2358, 1e-05
        %v2391 = vadd.f32 %v2359, 1e-05
        %v2392 = vrsqrt.pop %v2360
        %v2393 = vrsqrt.pop %v2361
        %v2394 = vrsqrt.pop %v2362
        %v2395 = vrsqrt.pop %v2363
        %v2396 = vrsqrt.pop %v2364
        %v2397 = vrsqrt.pop %v2365
        %v2398 = vrsqrt.pop %v2366
        %v2399 = vrsqrt.pop %v2367
        %v2400 = vrsqrt.pop %v2368
        %v2401 = vrsqrt.pop %v2369
        %v2402 = vrsqrt.pop %v2370
        %v2403 = vrsqrt.pop %v2371
        %v2404 = vrsqrt.pop %v2372
        %v2405 = vrsqrt.pop %v2373
        %v2406 = vrsqrt.pop %v2374
        %v2407 = vrsqrt.pop %v2375
        %v2408 = vrsqrt.pop %v2376
        %v2409 = vrsqrt.pop %v2377
        %v2410 = vrsqrt.pop %v2378
        %v2411 = vrsqrt.pop %v2379
        %v2412 = vrsqrt.pop %v2380
        %v2413 = vrsqrt.pop %v2381
        %v2414 = vrsqrt.pop %v2382
        %v2415 = vrsqrt.pop %v2383
        %v2416 = vrsqrt.pop %v2384
        %v2417 = vrsqrt.pop %v2385
        %v2418 = vrsqrt.pop %v2386
        %v2419 = vrsqrt.pop %v2387
        %v2420 = vrsqrt.pop %v2388
        %v2421 = vrsqrt.pop %v2389
        %v2422 = vrsqrt.pop %v2390
        %v2423 = vrsqrt.pop %v2391
        %v2424 = vmul.f32 %v2200, %v2392
        %v2425 = vmul.f32 %v2201, %v2393
        %v2426 = vmul.f32 %v2202, %v2394
        %v2427 = vmul.f32 %v2203, %v2395
        %v2428 = vmul.f32 %v2204, %v2396
        %v2429 = vmul.f32 %v2205, %v2397
        %v2430 = vmul.f32 %v2206, %v2398
        %v2431 = vmul.f32 %v2207, %v2399
        %v2432 = vmul.f32 %v2208, %v2400
        %v2433 = vmul.f32 %v2209, %v2401
        %v2434 = vmul.f32 %v2210, %v2402
        %v2435 = vmul.f32 %v2211, %v2403
        %v2436 = vmul.f32 %v2212, %v2404
        %v2437 = vmul.f32 %v2213, %v2405
        %v2438 = vmul.f32 %v2214, %v2406
        %v2439 = vmul.f32 %v2215, %v2407
        %v2440 = vmul.f32 %v2216, %v2408
        %v2441 = vmul.f32 %v2217, %v2409
        %v2442 = vmul.f32 %v2218, %v2410
        %v2443 = vmul.f32 %v2219, %v2411
        %v2444 = vmul.f32 %v2220, %v2412
        %v2445 = vmul.f32 %v2221, %v2413
        %v2446 = vmul.f32 %v2222, %v2414
        %v2447 = vmul.f32 %v2223, %v2415
        %v2448 = vmul.f32 %v2224, %v2416
        %v2449 = vmul.f32 %v2225, %v2417
        %v2450 = vmul.f32 %v2226, %v2418
        %v2451 = vmul.f32 %v2227, %v2419
        %v2452 = vmul.f32 %v2228, %v2420
        %v2453 = vmul.f32 %v2229, %v2421
        %v2454 = vmul.f32 %v2230, %v2422
        %v2455 = vmul.f32 %v2231, %v2423
        %v2457 = vlaneseq
        %v2458 = vshrl.u32 %v2457, 7
        %v2459 = vsub.s32 0, %v2458
        %v2460 = vrot.slane %v2101, %v2459
        %v2462 = vmul.f32 %v2424, %v2460
        %v2463 = vmul.f32 %v2425, %v2460
        %v2464 = vmul.f32 %v2426, %v2460
        %v2465 = vmul.f32 %v2427, %v2460
        %v2466 = vmul.f32 %v2428, %v2460
        %v2467 = vmul.f32 %v2429, %v2460
        %v2468 = vmul.f32 %v2430, %v2460
        %v2469 = vmul.f32 %v2431, %v2460
        %v2470 = vmul.f32 %v2432, %v2460
        %v2471 = vmul.f32 %v2433, %v2460
        %v2472 = vmul.f32 %v2434, %v2460
        %v2473 = vmul.f32 %v2435, %v2460
        %v2474 = vmul.f32 %v2436, %v2460
        %v2475 = vmul.f32 %v2437, %v2460
        %v2476 = vmul.f32 %v2438, %v2460
        %v2477 = vmul.f32 %v2439, %v2460
        %v2478 = vmul.f32 %v2440, %v2460
        %v2479 = vmul.f32 %v2441, %v2460
        %v2480 = vmul.f32 %v2442, %v2460
        %v2481 = vmul.f32 %v2443, %v2460
        %v2482 = vmul.f32 %v2444, %v2460
        %v2483 = vmul.f32 %v2445, %v2460
        %v2484 = vmul.f32 %v2446, %v2460
        %v2485 = vmul.f32 %v2447, %v2460
        %v2486 = vmul.f32 %v2448, %v2460
        %v2487 = vmul.f32 %v2449, %v2460
        %v2488 = vmul.f32 %v2450, %v2460
        %v2489 = vmul.f32 %v2451, %v2460
        %v2490 = vmul.f32 %v2452, %v2460
        %v2491 = vmul.f32 %v2453, %v2460
        %v2492 = vmul.f32 %v2454, %v2460
        %v2493 = vmul.f32 %v2455, %v2460
        %v2495 = vlaneseq
        %v2496 = vshrl.u32 %v2495, 7
        %v2497 = vsub.s32 0, %v2496
        %v2498 = vrot.slane %v2102, %v2497
        %v2500 = vadd.f32 %v2462, %v2498
        %v2501 = vadd.f32 %v2463, %v2498
        %v2502 = vadd.f32 %v2464, %v2498
        %v2503 = vadd.f32 %v2465, %v2498
        %v2504 = vadd.f32 %v2466, %v2498
        %v2505 = vadd.f32 %v2467, %v2498
        %v2506 = vadd.f32 %v2468, %v2498
        %v2507 = vadd.f32 %v2469, %v2498
        %v2508 = vadd.f32 %v2470, %v2498
        %v2509 = vadd.f32 %v2471, %v2498
        %v2510 = vadd.f32 %v2472, %v2498
        %v2511 = vadd.f32 %v2473, %v2498
        %v2512 = vadd.f32 %v2474, %v2498
        %v2513 = vadd.f32 %v2475, %v2498
        %v2514 = vadd.f32 %v2476, %v2498
        %v2515 = vadd.f32 %v2477, %v2498
        %v2516 = vadd.f32 %v2478, %v2498
        %v2517 = vadd.f32 %v2479, %v2498
        %v2518 = vadd.f32 %v2480, %v2498
        %v2519 = vadd.f32 %v2481, %v2498
        %v2520 = vadd.f32 %v2482, %v2498
        %v2521 = vadd.f32 %v2483, %v2498
        %v2522 = vadd.f32 %v2484, %v2498
        %v2523 = vadd.f32 %v2485, %v2498
        %v2524 = vadd.f32 %v2486, %v2498
        %v2525 = vadd.f32 %v2487, %v2498
        %v2526 = vadd.f32 %v2488, %v2498
        %v2527 = vadd.f32 %v2489, %v2498
        %v2528 = vadd.f32 %v2490, %v2498
        %v2529 = vadd.f32 %v2491, %v2498
        %v2530 = vadd.f32 %v2492, %v2498
        %v2531 = vadd.f32 %v2493, %v2498
        %v2532 = vmul.f32 %v2500, 0.5
        %v2533 = vmul.f32 %v2501, 0.5
        %v2534 = vmul.f32 %v2502, 0.5
        %v2535 = vmul.f32 %v2503, 0.5
        %v2536 = vmul.f32 %v2504, 0.5
        %v2537 = vmul.f32 %v2505, 0.5
        %v2538 = vmul.f32 %v2506, 0.5
        %v2539 = vmul.f32 %v2507, 0.5
        %v2540 = vmul.f32 %v2508, 0.5
        %v2541 = vmul.f32 %v2509, 0.5
        %v2542 = vmul.f32 %v2510, 0.5
        %v2543 = vmul.f32 %v2511, 0.5
        %v2544 = vmul.f32 %v2512, 0.5
        %v2545 = vmul.f32 %v2513, 0.5
        %v2546 = vmul.f32 %v2514, 0.5
        %v2547 = vmul.f32 %v2515, 0.5
        %v2548 = vmul.f32 %v2516, 0.5
        %v2549 = vmul.f32 %v2517, 0.5
        %v2550 = vmul.f32 %v2518, 0.5
        %v2551 = vmul.f32 %v2519, 0.5
        %v2552 = vmul.f32 %v2520, 0.5
        %v2553 = vmul.f32 %v2521, 0.5
        %v2554 = vmul.f32 %v2522, 0.5
        %v2555 = vmul.f32 %v2523, 0.5
        %v2556 = vmul.f32 %v2524, 0.5
        %v2557 = vmul.f32 %v2525, 0.5
        %v2558 = vmul.f32 %v2526, 0.5
        %v2559 = vmul.f32 %v2527, 0.5
        %v2560 = vmul.f32 %v2528, 0.5
        %v2561 = vmul.f32 %v2529, 0.5
        %v2562 = vmul.f32 %v2530, 0.5
        %v2563 = vmul.f32 %v2531, 0.5
        %v2564 = vmul.f32 %v2500, 0.70710677
        %v2565 = vmul.f32 %v2501, 0.70710677
        %v2566 = vmul.f32 %v2502, 0.70710677
        %v2567 = vmul.f32 %v2503, 0.70710677
        %v2568 = vmul.f32 %v2504, 0.70710677
        %v2569 = vmul.f32 %v2505, 0.70710677
        %v2570 = vmul.f32 %v2506, 0.70710677
        %v2571 = vmul.f32 %v2507, 0.70710677
        %v2572 = vmul.f32 %v2508, 0.70710677
        %v2573 = vmul.f32 %v2509, 0.70710677
        %v2574 = vmul.f32 %v2510, 0.70710677
        %v2575 = vmul.f32 %v2511, 0.70710677
        %v2576 = vmul.f32 %v2512, 0.70710677
        %v2577 = vmul.f32 %v2513, 0.70710677
        %v2578 = vmul.f32 %v2514, 0.70710677
        %v2579 = vmul.f32 %v2515, 0.70710677
        %v2580 = vmul.f32 %v2516, 0.70710677
        %v2581 = vmul.f32 %v2517, 0.70710677
        %v2582 = vmul.f32 %v2518, 0.70710677
        %v2583 = vmul.f32 %v2519, 0.70710677
        %v2584 = vmul.f32 %v2520, 0.70710677
        %v2585 = vmul.f32 %v2521, 0.70710677
        %v2586 = vmul.f32 %v2522, 0.70710677
        %v2587 = vmul.f32 %v2523, 0.70710677
        %v2588 = vmul.f32 %v2524, 0.70710677
        %v2589 = vmul.f32 %v2525, 0.70710677
        %v2590 = vmul.f32 %v2526, 0.70710677
        %v2591 = vmul.f32 %v2527, 0.70710677
        %v2592 = vmul.f32 %v2528, 0.70710677
        %v2593 = vmul.f32 %v2529, 0.70710677
        %v2594 = vmul.f32 %v2530, 0.70710677
        %v2595 = vmul.f32 %v2531, 0.70710677
        %v2596 = verf.f32.pop %v2564
        %v2597 = verf.f32.pop %v2565
        %v2598 = verf.f32.pop %v2566
        %v2599 = verf.f32.pop %v2567
        %v2600 = verf.f32.pop %v2568
        %v2601 = verf.f32.pop %v2569
        %v2602 = verf.f32.pop %v2570
        %v2603 = verf.f32.pop %v2571
        %v2604 = verf.f32.pop %v2572
        %v2605 = verf.f32.pop %v2573
        %v2606 = verf.f32.pop %v2574
        %v2607 = verf.f32.pop %v2575
        %v2608 = verf.f32.pop %v2576
        %v2609 = verf.f32.pop %v2577
        %v2610 = verf.f32.pop %v2578
        %v2611 = verf.f32.pop %v2579
        %v2612 = verf.f32.pop %v2580
        %v2613 = verf.f32.pop %v2581
        %v2614 = verf.f32.pop %v2582
        %v2615 = verf.f32.pop %v2583
        %v2616 = verf.f32.pop %v2584
        %v2617 = verf.f32.pop %v2585
        %v2618 = verf.f32.pop %v2586
        %v2619 = verf.f32.pop %v2587
        %v2620 = verf.f32.pop %v2588
        %v2621 = verf.f32.pop %v2589
        %v2622 = verf.f32.pop %v2590
        %v2623 = verf.f32.pop %v2591
        %v2624 = verf.f32.pop %v2592
        %v2625 = verf.f32.pop %v2593
        %v2626 = verf.f32.pop %v2594
        %v2627 = verf.f32.pop %v2595
        %v2628 = vadd.f32 %v2596, 1.0
        %v2629 = vadd.f32 %v2597, 1.0
        %v2630 = vadd.f32 %v2598, 1.0
        %v2631 = vadd.f32 %v2599, 1.0
        %v2632 = vadd.f32 %v2600, 1.0
        %v2633 = vadd.f32 %v2601, 1.0
        %v2634 = vadd.f32 %v2602, 1.0
        %v2635 = vadd.f32 %v2603, 1.0
        %v2636 = vadd.f32 %v2604, 1.0
        %v2637 = vadd.f32 %v2605, 1.0
        %v2638 = vadd.f32 %v2606, 1.0
        %v2639 = vadd.f32 %v2607, 1.0
        %v2640 = vadd.f32 %v2608, 1.0
        %v2641 = vadd.f32 %v2609, 1.0
        %v2642 = vadd.f32 %v2610, 1.0
        %v2643 = vadd.f32 %v2611, 1.0
        %v2644 = vadd.f32 %v2612, 1.0
        %v2645 = vadd.f32 %v2613, 1.0
        %v2646 = vadd.f32 %v2614, 1.0
        %v2647 = vadd.f32 %v2615, 1.0
        %v2648 = vadd.f32 %v2616, 1.0
        %v2649 = vadd.f32 %v2617, 1.0
        %v2650 = vadd.f32 %v2618, 1.0
        %v2651 = vadd.f32 %v2619, 1.0
        %v2652 = vadd.f32 %v2620, 1.0
        %v2653 = vadd.f32 %v2621, 1.0
        %v2654 = vadd.f32 %v2622, 1.0
        %v2655 = vadd.f32 %v2623, 1.0
        %v2656 = vadd.f32 %v2624, 1.0
        %v2657 = vadd.f32 %v2625, 1.0
        %v2658 = vadd.f32 %v2626, 1.0
        %v2659 = vadd.f32 %v2627, 1.0
        %v2660 = vmul.f32 %v2532, %v2628
        %v2661 = vmul.f32 %v2533, %v2629
        %v2662 = vmul.f32 %v2534, %v2630
        %v2663 = vmul.f32 %v2535, %v2631
        %v2664 = vmul.f32 %v2536, %v2632
        %v2665 = vmul.f32 %v2537, %v2633
        %v2666 = vmul.f32 %v2538, %v2634
        %v2667 = vmul.f32 %v2539, %v2635
        %v2668 = vmul.f32 %v2540, %v2636
        %v2669 = vmul.f32 %v2541, %v2637
        %v2670 = vmul.f32 %v2542, %v2638
        %v2671 = vmul.f32 %v2543, %v2639
        %v2672 = vmul.f32 %v2544, %v2640
        %v2673 = vmul.f32 %v2545, %v2641
        %v2674 = vmul.f32 %v2546, %v2642
        %v2675 = vmul.f32 %v2547, %v2643
        %v2676 = vmul.f32 %v2548, %v2644
        %v2677 = vmul.f32 %v2549, %v2645
        %v2678 = vmul.f32 %v2550, %v2646
        %v2679 = vmul.f32 %v2551, %v2647
        %v2680 = vmul.f32 %v2552, %v2648
        %v2681 = vmul.f32 %v2553, %v2649
        %v2682 = vmul.f32 %v2554, %v2650
        %v2683 = vmul.f32 %v2555, %v2651
        %v2684 = vmul.f32 %v2556, %v2652
        %v2685 = vmul.f32 %v2557, %v2653
        %v2686 = vmul.f32 %v2558, %v2654
        %v2687 = vmul.f32 %v2559, %v2655
        %v2688 = vmul.f32 %v2560, %v2656
        %v2689 = vmul.f32 %v2561, %v2657
        %v2690 = vmul.f32 %v2562, %v2658
        %v2691 = vmul.f32 %v2563, %v2659
        %v2692 = vld [vmem:[%s9] sm:$0xff]
        %2693 = vmatprep.subr.mxu0 0.0
        %2694 = vmatpush1.xpose.msra.mxu0 %v2660
        %2695 = vmatprep.subr.mxu0 0.0
        %2696 = vmatpush1.xpose.msra.mxu0 %v2661
        %2697 = vmatprep.subr.mxu0 0.0
        %2698 = vmatpush1.xpose.msra.mxu0 %v2662
        %2699 = vmatprep.subr.mxu0 0.0
        %2700 = vmatpush1.xpose.msra.mxu0 %v2663
        %2701 = vmatprep.subr.mxu0 0.0
        %2702 = vmatpush1.xpose.msra.mxu0 %v2664
        %2703 = vmatprep.subr.mxu0 0.0
        %2704 = vmatpush1.xpose.msra.mxu0 %v2665
        %2705 = vmatprep.subr.mxu0 0.0
        %2706 = vmatpush1.xpose.msra.mxu0 %v2666
        %2707 = vmatprep.subr.mxu0 0.0
        %2708 = vmatpush1.xpose.msra.mxu0 %v2667
        %2709 = vmatprep.subr.mxu0 0.0
        %2710 = vmatpush1.xpose.msra.mxu0 %v2668
        %2711 = vmatprep.subr.mxu0 0.0
        %2712 = vmatpush1.xpose.msra.mxu0 %v2669
        %2713 = vmatprep.subr.mxu0 0.0
        %2714 = vmatpush1.xpose.msra.mxu0 %v2670
        %2715 = vmatprep.subr.mxu0 0.0
        %2716 = vmatpush1.xpose.msra.mxu0 %v2671
        %2717 = vmatprep.subr.mxu0 0.0
        %2718 = vmatpush1.xpose.msra.mxu0 %v2672
        %2719 = vmatprep.subr.mxu0 0.0
        %2720 = vmatpush1.xpose.msra.mxu0 %v2673
        %2721 = vmatprep.subr.mxu0 0.0
        %2722 = vmatpush1.xpose.msra.mxu0 %v2674
        %2723 = vmatprep.subr.mxu0 0.0
        %2724 = vmatpush1.xpose.msra.mxu0 %v2675
        %2725 = vmatprep.subr.mxu0 0.0
        %2726 = vmatpush1.xpose.msra.mxu0 %v2676
        %2727 = vmatprep.subr.mxu0 0.0
        %2728 = vmatpush1.xpose.msra.mxu0 %v2677
        %2729 = vmatprep.subr.mxu0 0.0
        %2730 = vmatpush1.xpose.msra.mxu0 %v2678
        %2731 = vmatprep.subr.mxu0 0.0
        %2732 = vmatpush1.xpose.msra.mxu0 %v2679
        %2733 = vmatprep.subr.mxu0 0.0
        %2734 = vmatpush1.xpose.msra.mxu0 %v2680
        %2735 = vmatprep.subr.mxu0 0.0
        %2736 = vmatpush1.xpose.msra.mxu0 %v2681
        %2737 = vmatprep.subr.mxu0 0.0
        %2738 = vmatpush1.xpose.msra.mxu0 %v2682
        %2739 = vmatprep.subr.mxu0 0.0
        %2740 = vmatpush1.xpose.msra.mxu0 %v2683
        %2741 = vmatprep.subr.mxu0 0.0
        %2742 = vmatpush1.xpose.msra.mxu0 %v2684
        %2743 = vmatprep.subr.mxu0 0.0
        %2744 = vmatpush1.xpose.msra.mxu0 %v2685
        %2745 = vmatprep.subr.mxu0 0.0
        %2746 = vmatpush1.xpose.msra.mxu0 %v2686
        %2747 = vmatprep.subr.mxu0 0.0
        %2748 = vmatpush1.xpose.msra.mxu0 %v2687
        %2749 = vmatprep.subr.mxu0 0.0
        %2750 = vmatpush1.xpose.msra.mxu0 %v2688
        %2751 = vmatprep.subr.mxu0 0.0
        %2752 = vmatpush1.xpose.msra.mxu0 %v2689
        %2753 = vmatprep.subr.mxu0 0.0
        %2754 = vmatpush1.xpose.msra.mxu0 %v2690
        %2755 = vmatprep.subr.mxu0 0.0
        %2756 = vmatpush1.xpose.msra.mxu0 %v2691
        %2757 = vmatprep.mubr.f32.mxu0 0.0
        %2758 = vmatmul.mubr.f32.gmra.mrb[0].mxu0 %v2692
        %v2759 = vpop.f32.mrb[0].mxu0
        %v2760 = vadd.f32 0.0, %v2759
        %v2761 = vpop.f32.mrb[0].mxu0
        %v2762 = vadd.f32 0.0, %v2761
        %2763 = vdwg.mxu0
        %v2764 = vld [vmem:[#allocation2] sm:$0x1]
        %2766 = vset.pattern.permute.xlu0 0
        %2767 = vperm.xlu0 %2766, %v2764
        %v2768 = vpop.permute.xlu0 %2767
        %v2770 = vlaneseq
        %v2771 = vshrl.u32 %v2770, 7
        %v2772 = vsub.s32 0, %v2771
        %v2773 = vrot.slane %v2768, %v2772
        %v2774 = vadd.f32 %v2760, %v2773
        %v2775 = vadd.f32 %v2762, %v2773
        %v2778 = vcombine.low %v2774, %v2775
        %v2780 = vunpack.c.l.s4 1966171168
        %v2781 = vunpack.c.0.s8 %v2780
        %v2782 = vlaneseq
        %v2783 = vshrl.u32 %v2782, 7
        %v2784 = vsub.s32 %v2781, %v2783
        %v2785 = vrot.slane %v2778, %v2784
        %v2787 = vunpack.c.l.s4 1966171168
        %v2788 = vunpack.c.0.s8 %v2787
        %v2789 = vlaneseq
        %v2790 = vshrl.u32 %v2789, 7
        %v2791 = vsub.s32 %v2788, %v2790
        %v2792 = vrot.slane %v2785, %v2791
        %v2794 = vlaneseq
        %vm2795 = vcmp.ge.s32.totalorder %v2794, 0
        %vm2796 = vcmp.lt.s32.totalorder %v2794, 256
        %vm2797 = vmand %vm2795, %vm2796
        %2798 = vst.msk [vmem:[%s435] sm:$0x3] %vm2797, %v2792
        %s2799 = sand.u32 %s275, 1
        %s2800 = scalar_lea.sflag [#allocation5], %s2799
        %s2801 = sand.u32 %s275, 1
        %s2802 = smul.addr %s2801, 2
        %s2803 = scalar_lea.vmem [#allocation9], %s2802
        // Predicated region
        $region77: #{tpu_custom_call.1} parent=63 // pred_check
          %p2804 = pneg %p285
        $region78: #{tpu_custom_call.1} parent=63 // pred_check_branch
          %2806 = sbr.rel (%p2804) target = $region80
        $region79: #{tpu_custom_call.1} parent=63 // pred_region
          %s2807 = smul.u32 2, %s31
          %s2809 = ssub.s32 32, 32
          %2810 = vsyncadd %s2800, %s2809
          %s2811 = smul.addr %s2807, 16
          %s2812 = scalar_lea.hbm %s11, %s2811
          %s2814 = sshll.u32 %s2803, 4
          %s2815 = int_to_ptr.vmem [resolvable:$true] %s2814
          %2817 = dma.vmem_to_hbm [thread:$0]  %s2815, 32, %s2812, %s2800
        $region80: #{tpu_custom_call.1} parent=63 // pred_fallthru
          _
      $region64: #{tpu_custom_call.1} parent=5 // pred_fallthru
        _
      %p2818 = scmp.le.s32.totalorder 2, %s26
      // Predicated region
      $region81: #{tpu_custom_call.1} parent=5 // pred_check
        %p2819 = pneg %p2818
      $region82: #{tpu_custom_call.1} parent=5 // pred_check_branch
        %2821 = sbr.rel (%p2819) target = $region84
      $region83: #{tpu_custom_call.1} parent=5 // pred_region
        %s2822 = ssub.s32 %s26, 2
        // Predicated region
        $region85: #{tpu_custom_call.1} parent=83 // pred_check
          %p2823 = pneg %p291
        $region86: #{tpu_custom_call.1} parent=83 // pred_check_branch
          %2825 = sbr.rel (%p2823) target = $region88
        $region87: #{tpu_custom_call.1} parent=83 // pred_region
          %s2826 = sand.u32 %s276, 1
          %s2827 = scalar_lea.sflag [#allocation5], %s2826
          %s2828 = sand.u32 %s276, 1
          %s2829 = smul.addr %s2828, 2
          %s2830 = scalar_lea.vmem [#allocation9], %s2829
          %2831 = dma.done %s2827, 32
        $region88: #{tpu_custom_call.1} parent=83 // pred_fallthru
          _
      $region84: #{tpu_custom_call.1} parent=5 // pred_fallthru
        _
    $region6: #{tpu_custom_call.1} parent=1 // loop_footer
      %s30 = sadd.s32 1, %s26
    $region7: #{tpu_custom_call.1} parent=1 // loop_footer_branch
      %25 = sbr.rel target = $region3
    $region8: #{tpu_custom_call.1} parent=1 // loop_exit
      _
    %2832 = vsyncpa [#allocation4], 1
    %s2833 = scalar_lea.sflag [#allocation4], 1
    %2834 = vsyncpa %s2833, 1
    %2835 = vsyncpa [#allocation7], 1
    %2836 = vsyncpa [#allocation5], 1
    %s2837 = scalar_lea.sflag [#allocation5], 1
    %2838 = vsyncpa %s2837, 1

// kernel: tpu_custom_call.1
$region0: #{tpu_custom_call.1}
  #allocation0 [shape = 'u32[]', space=smem, size = 0x4, offset = 0x4, fixed_abs, tag = 'smem constant byte address 0x4 - core index']
  #allocation1 [shape = 'u32[144,128]{1,0:T(1,128)}', space=vmem, size = 0x12000, scoped, tag = 'internal scratch']
  #allocation2 [shape = 'f32[1,1]{1,0:T(1,128)S(1)}', space=vmem, size = 0x200, scoped, tag = 'scoped memory for tpu_custom_call.1']
  %s0 = inlined_call_operand.hbm [shape: f32[512,128], index: 0, kind: input, shape index: {}]
  %s1 = inlined_call_operand.hbm [shape: bf16[128,256], index: 1, kind: input, shape index: {}]
  %s2 = inlined_call_operand.vmem [shape: f32[1,256], index: 2, kind: input, shape index: {}]
  %s3 = inlined_call_operand.vmem [shape: f32[1,256], index: 3, kind: input, shape index: {}]
  %s4 = inlined_call_operand.vmem [shape: f32[1,256], index: 4, kind: input, shape index: {}]
  %s5 = inlined_call_operand.hbm [shape: bf16[256,128], index: 5, kind: input, shape index: {}]
  %s6 = inlined_call_operand.vmem [shape: f32[1,128], index: 6, kind: input, shape index: {}]
  %s7 = inlined_call_operand.vmem [shape: f32[1,128], index: 7, kind: input, shape index: {}]
  %s8 = inlined_call_operand.vmem [shape: f32[1,128], index: 8, kind: input, shape index: {}]
  %s9 = inlined_call_operand.vmem [shape: f32[8,128], index: 9, kind: input, shape index: {}]
  %s10 = inlined_call_operand.<no memory space> [shape: f32[1,1], index: 10, kind: input, shape index: {}]
  %s11 = inlined_call_operand.hbm [shape: f32[1,512], index: 11, kind: output, shape index: {}]
  %s12 = sld [smem:[#allocation0]]
  $region89: #{tpu_custom_call.1} parent=0
    _
  %s14 = ssub.s32 1, %s12
  %s15 = scalar_select 0, %s14, %s12
  %v16 = vstv %s10
  %17 = vst [vmem:[#allocation2] sm:$0x1] %v16
  $region1: #{tpu_custom_call.1} parent=0
    #allocation3 [shape = 'u8[262144]{0}', space=vmem, size = 0x40000, scoped, tag = 'input window, operand 0']
    #allocation4 [shape = 's32[2]{0}', space=sflag, size = 0x8, scoped, tag = 'scoped memory for tpu_custom_call.1']
    #allocation5 [shape = 's32[2]{0}', space=sflag, size = 0x8, scoped, tag = 'scoped memory for tpu_custom_call.1']
    #allocation6 [shape = 'u8[65536]{0}', space=vmem, size = 0x10000, scoped, tag = 'input window, operand 1, single buffered']
    #allocation7 [shape = 's32[1]{0}', space=sflag, size = 0x4, scoped, tag = 'scoped memory for tpu_custom_call.1']
    #allocation8 [shape = 'u8[65536]{0}', space=vmem, size = 0x10000, scoped, tag = 'input window, operand 5, single buffered']
    #allocation9 [shape = 'u8[2048]{0}', space=vmem, size = 0x800, scoped, tag = 'output window, operand 0']
    %18 = vsyncpa [#allocation4], 0
    %s19 = scalar_lea.sflag [#allocation4], 1
    %20 = vsyncpa %s19, 0
    %21 = vsyncpa [#allocation7], 0
    %22 = vsyncpa [#allocation5], 0
    %s23 = scalar_lea.sflag [#allocation5], 1
    %24 = vsyncpa %s23, 0
    loop: start=0, step=1, limit=4
    $region2: #{tpu_custom_call.1} parent=1 // loop_pre_header
      _
    $region3: #{tpu_custom_call.1} parent=1 // loop_header
      %s26 = sphi 0, %s30
      %p27 = scmp.ge.s32.totalorder %s26, 4
      %s36 = sphi 0, %s38
      %s39 = sphi 0, %s36
      %s40 = sphi 0, %s39
      %s56 = sphi 0, %s40
      %s60 = sphi 0, %s60
      %s62 = sphi 0, %s60
      %s63 = sphi 0, %s62
      %s77 = sphi 0, %s63
      %s81 = sphi 0, %s81
      %s83 = sphi 0, %s81
      %s84 = sphi 0, %s83
      %s98 = sphi 0, %s84
      %s102 = sphi 0, %s102
      %s104 = sphi 0, %s102
      %s105 = sphi 0, %s104
      %s119 = sphi 0, %s105
      %s123 = sphi 0, %s123
      %s125 = sphi 0, %s123
      %s126 = sphi 0, %s125
      %s140 = sphi 0, %s126
      %s144 = sphi 0, %s144
      %s146 = sphi 0, %s144
      %s147 = sphi 0, %s146
      %s161 = sphi 0, %s147
      %s165 = sphi 0, %s165
      %s167 = sphi 0, %s165
      %s168 = sphi 0, %s167
      %s182 = sphi 0, %s168
      %s186 = sphi 0, %s186
      %s188 = sphi 0, %s186
      %s189 = sphi 0, %s188
      %s203 = sphi 0, %s189
      %s207 = sphi 0, %s207
      %s209 = sphi 0, %s207
      %s210 = sphi 0, %s209
      %s224 = sphi 0, %s210
      %s228 = sphi 0, %s228
      %s230 = sphi 0, %s228
      %s231 = sphi 0, %s230
      %s245 = sphi 0, %s231
      %s249 = sphi 0, %s249
      %s251 = sphi 0, %s249
      %s252 = sphi 0, %s251
      %s266 = sphi 0, %s252
      %s272 = sphi 0, %s274
      %s275 = sphi 0, %s272
      %s276 = sphi 0, %s275
      %s292 = sphi 0, %s276
    $region4: #{tpu_custom_call.1} parent=1 // loop_header_branch
      %29 = sbr.rel (%p27) target = $region8
    $region5: #{tpu_custom_call.1} parent=1 // loop_body
      %s31 = ssub.s32 %s26, 1
      %s32 = ssub.s32 %s26, 2
      %s33 = sadd.s32 %s26, 1
      %s34 = ssub.s32 %s26, %s33
      %p35 = scmp.eq.s32.totalorder %s34, 0
      %s37 = sadd.s32 %s36, 1
      %s38 = scalar_select %p35, %s36, %s37
      %p41 = pneg %p35
      %p42 = scmp.eq.s32.totalorder %s26, 1
      %p43 = por %p41, %p42
      %p44 = scmp.ne.s32.totalorder %s36, %s39
      %p45 = scmp.eq.s32.totalorder %s26, 0
      %p46 = por %p44, %p45
      %p47 = scmp.ne.s32.totalorder %s36, %s39
      %p48 = scmp.eq.s32.totalorder %s31, 1
      %p49 = por %p47, %p48
      %p50 = scmp.ne.s32.totalorder %s39, %s40
      %p51 = scmp.eq.s32.totalorder %s31, 0
      %p52 = por %p50, %p51
      %p53 = scmp.ne.s32.totalorder %s39, %s40
      %p54 = scmp.eq.s32.totalorder %s32, 1
      %p55 = por %p53, %p54
      %p57 = scmp.ne.s32.totalorder %s40, %s56
      %p58 = scmp.eq.s32.totalorder %s32, 0
      %p59 = por %p57, %p58
      %s61 = sadd.s32 %s60, 1
      %p64 = scmp.eq.s32.totalorder %s26, 1
      %p65 = scmp.ne.s32.totalorder %s60, %s62
      %p66 = scmp.eq.s32.totalorder %s26, 0
      %p67 = por %p65, %p66
      %p68 = scmp.ne.s32.totalorder %s60, %s62
      %p69 = scmp.eq.s32.totalorder %s31, 1
      %p70 = por %p68, %p69
      %p71 = scmp.ne.s32.totalorder %s62, %s63
      %p72 = scmp.eq.s32.totalorder %s31, 0
      %p73 = por %p71, %p72
      %p74 = scmp.ne.s32.totalorder %s62, %s63
      %p75 = scmp.eq.s32.totalorder %s32, 1
      %p76 = por %p74, %p75
      %p78 = scmp.ne.s32.totalorder %s63, %s77
      %p79 = scmp.eq.s32.totalorder %s32, 0
      %p80 = por %p78, %p79
      %s82 = sadd.s32 %s81, 1
      %p85 = scmp.eq.s32.totalorder %s26, 1
      %p86 = scmp.ne.s32.totalorder %s81, %s83
      %p87 = scmp.eq.s32.totalorder %s26, 0
      %p88 = por %p86, %p87
      %p89 = scmp.ne.s32.totalorder %s81, %s83
      %p90 = scmp.eq.s32.totalorder %s31, 1
      %p91 = por %p89, %p90
      %p92 = scmp.ne.s32.totalorder %s83, %s84
      %p93 = scmp.eq.s32.totalorder %s31, 0
      %p94 = por %p92, %p93
      %p95 = scmp.ne.s32.totalorder %s83, %s84
      %p96 = scmp.eq.s32.totalorder %s32, 1
      %p97 = por %p95, %p96
      %p99 = scmp.ne.s32.totalorder %s84, %s98
      %p100 = scmp.eq.s32.totalorder %s32, 0
      %p101 = por %p99, %p100
      %s103 = sadd.s32 %s102, 1
      %p106 = scmp.eq.s32.totalorder %s26, 1
      %p107 = scmp.ne.s32.totalorder %s102, %s104
      %p108 = scmp.eq.s32.totalorder %s26, 0
      %p109 = por %p107, %p108
      %p110 = scmp.ne.s32.totalorder %s102, %s104
      %p111 = scmp.eq.s32.totalorder %s31, 1
      %p112 = por %p110, %p111
      %p113 = scmp.ne.s32.totalorder %s104, %s105
      %p114 = scmp.eq.s32.totalorder %s31, 0
      %p115 = por %p113, %p114
      %p116 = scmp.ne.s32.totalorder %s104, %s105
      %p117 = scmp.eq.s32.totalorder %s32, 1
      %p118 = por %p116, %p117
      %p120 = scmp.ne.s32.totalorder %s105, %s119
      %p121 = scmp.eq.s32.totalorder %s32, 0
      %p122 = por %p120, %p121
      %s124 = sadd.s32 %s123, 1
      %p127 = scmp.eq.s32.totalorder %s26, 1
      %p128 = scmp.ne.s32.totalorder %s123, %s125
      %p129 = scmp.eq.s32.totalorder %s26, 0
      %p130 = por %p128, %p129
      %p131 = scmp.ne.s32.totalorder %s123, %s125
      %p132 = scmp.eq.s32.totalorder %s31, 1
      %p133 = por %p131, %p132
      %p134 = scmp.ne.s32.totalorder %s125, %s126
      %p135 = scmp.eq.s32.totalorder %s31, 0
      %p136 = por %p134, %p135
      %p137 = scmp.ne.s32.totalorder %s125, %s126
      %p138 = scmp.eq.s32.totalorder %s32, 1
      %p139 = por %p137, %p138
      %p141 = scmp.ne.s32.totalorder %s126, %s140
      %p142 = scmp.eq.s32.totalorder %s32, 0
      %p143 = por %p141, %p142
      %s145 = sadd.s32 %s144, 1
      %p148 = scmp.eq.s32.totalorder %s26, 1
      %p149 = scmp.ne.s32.totalorder %s144, %s146
      %p150 = scmp.eq.s32.totalorder %s26, 0
      %p151 = por %p149, %p150
      %p152 = scmp.ne.s32.totalorder %s144, %s146
      %p153 = scmp.eq.s32.totalorder %s31, 1
      %p154 = por %p152, %p153
      %p155 = scmp.ne.s32.totalorder %s146, %s147
      %p156 = scmp.eq.s32.totalorder %s31, 0
      %p157 = por %p155, %p156
      %p158 = scmp.ne.s32.totalorder %s146, %s147
      %p159 = scmp.eq.s32.totalorder %s32, 1
      %p160 = por %p158, %p159
      %p162 = scmp.ne.s32.totalorder %s147, %s161
      %p163 = scmp.eq.s32.totalorder %s32, 0
      %p164 = por %p162, %p163
      %s166 = sadd.s32 %s165, 1
      %p169 = scmp.eq.s32.totalorder %s26, 1
      %p170 = scmp.ne.s32.totalorder %s165, %s167
      %p171 = scmp.eq.s32.totalorder %s26, 0
      %p172 = por %p170, %p171
      %p173 = scmp.ne.s32.totalorder %s165, %s167
      %p174 = scmp.eq.s32.totalorder %s31, 1
      %p175 = por %p173, %p174
      %p176 = scmp.ne.s32.totalorder %s167, %s168
      %p177 = scmp.eq.s32.totalorder %s31, 0
      %p178 = por %p176, %p177
      %p179 = scmp.ne.s32.totalorder %s167, %s168
      %p180 = scmp.eq.s32.totalorder %s32, 1
      %p181 = por %p179, %p180
      %p183 = scmp.ne.s32.totalorder %s168, %s182
      %p184 = scmp.eq.s32.totalorder %s32, 0
      %p185 = por %p183, %p184
      %s187 = sadd.s32 %s186, 1
      %p190 = scmp.eq.s32.totalorder %s26, 1
      %p191 = scmp.ne.s32.totalorder %s186, %s188
      %p192 = scmp.eq.s32.totalorder %s26, 0
      %p193 = por %p191, %p192
      %p194 = scmp.ne.s32.totalorder %s186, %s188
      %p195 = scmp.eq.s32.totalorder %s31, 1
      %p196 = por %p194, %p195
      %p197 = scmp.ne.s32.totalorder %s188, %s189
      %p198 = scmp.eq.s32.totalorder %s31, 0
      %p199 = por %p197, %p198
      %p200 = scmp.ne.s32.totalorder %s188, %s189
      %p201 = scmp.eq.s32.totalorder %s32, 1
      %p202 = por %p200, %p201
      %p204 = scmp.ne.s32.totalorder %s189, %s203
      %p205 = scmp.eq.s32.totalorder %s32, 0
      %p206 = por %p204, %p205
      %s208 = sadd.s32 %s207, 1
      %p211 = scmp.eq.s32.totalorder %s26, 1
      %p212 = scmp.ne.s32.totalorder %s207, %s209
      %p213 = scmp.eq.s32.totalorder %s26, 0
      %p214 = por %p212, %p213
      %p215 = scmp.ne.s32.totalorder %s207, %s209
      %p216 = scmp.eq.s32.totalorder %s31, 1
      %p217 = por %p215, %p216
      %p218 = scmp.ne.s32.totalorder %s209, %s210
      %p219 = scmp.eq.s32.totalorder %s31, 0
      %p220 = por %p218, %p219
      %p221 = scmp.ne.s32.totalorder %s209, %s210
      %p222 = scmp.eq.s32.totalorder %s32, 1
      %p223 = por %p221, %p222
      %p225 = scmp.ne.s32.totalorder %s210, %s224
      %p226 = scmp.eq.s32.totalorder %s32, 0
      %p227 = por %p225, %p226
      %s229 = sadd.s32 %s228, 1
      %p232 = scmp.eq.s32.totalorder %s26, 1
      %p233 = scmp.ne.s32.totalorder %s228, %s230
      %p234 = scmp.eq.s32.totalorder %s26, 0
      %p235 = por %p233, %p234
      %p236 = scmp.ne.s32.totalorder %s228, %s230
      %p237 = scmp.eq.s32.totalorder %s31, 1
      %p238 = por %p236, %p237
      %p239 = scmp.ne.s32.totalorder %s230, %s231
      %p240 = scmp.eq.s32.totalorder %s31, 0
      %p241 = por %p239, %p240
      %p242 = scmp.ne.s32.totalorder %s230, %s231
      %p243 = scmp.eq.s32.totalorder %s32, 1
      %p244 = por %p242, %p243
      %p246 = scmp.ne.s32.totalorder %s231, %s245
      %p247 = scmp.eq.s32.totalorder %s32, 0
      %p248 = por %p246, %p247
      %s250 = sadd.s32 %s249, 1
      %p253 = scmp.eq.s32.totalorder %s26, 1
      %p254 = scmp.ne.s32.totalorder %s249, %s251
      %p255 = scmp.eq.s32.totalorder %s26, 0
      %p256 = por %p254, %p255
      %p257 = scmp.ne.s32.totalorder %s249, %s251
      %p258 = scmp.eq.s32.totalorder %s31, 1
      %p259 = por %p257, %p258
      %p260 = scmp.ne.s32.totalorder %s251, %s252
      %p261 = scmp.eq.s32.totalorder %s31, 0
      %p262 = por %p260, %p261
      %p263 = scmp.ne.s32.totalorder %s251, %s252
      %p264 = scmp.eq.s32.totalorder %s32, 1
      %p265 = por %p263, %p264
      %p267 = scmp.ne.s32.totalorder %s252, %s266
      %p268 = scmp.eq.s32.totalorder %s32, 0
      %p269 = por %p267, %p268
      %s270 = ssub.s32 %s26, %s33
      %p271 = scmp.eq.s32.totalorder %s270, 0
      %s273 = sadd.s32 %s272, 1
      %s274 = scalar_select %p271, %s272, %s273
      %p277 = pneg %p271
      %p278 = scmp.eq.s32.totalorder %s26, 1
      %p279 = por %p277, %p278
      %p280 = scmp.ne.s32.totalorder %s272, %s275
      %p281 = scmp.eq.s32.totalorder %s26, 0
      %p282 = por %p280, %p281
      %p283 = scmp.ne.s32.totalorder %s272, %s275
      %p284 = scmp.eq.s32.totalorder %s31, 1
      %p285 = por %p283, %p284
      %p286 = scmp.ne.s32.totalorder %s275, %s276
      %p287 = scmp.eq.s32.totalorder %s31, 0
      %p288 = por %p286, %p287
      %p289 = scmp.ne.s32.totalorder %s275, %s276
      %p290 = scmp.eq.s32.totalorder %s32, 1
      %p291 = por %p289, %p290
      %p293 = scmp.ne.s32.totalorder %s276, %s292
      %p294 = scmp.eq.s32.totalorder %s32, 0
      %p295 = por %p293, %p294
      %p296 = scmp.le.s32.totalorder 1, %s26
      %p297 = scmp.lt.s32.totalorder %s26, 3
      %p298 = pnand %p296, %p297
      %p299 = pneg %p298
      // Predicated region
      $region9: #{tpu_custom_call.1} parent=5 // pred_check
        _
      $region10: #{tpu_custom_call.1} parent=5 // pred_check_branch
        %301 = sbr.rel (%p298) target = $region12
      $region11: #{tpu_custom_call.1} parent=5 // pred_region
        %s302 = ssub.s32 %s26, 1
        // Predicated region
        $region13: #{tpu_custom_call.1} parent=11 // pred_check
          %p303 = pneg %p73
        $region14: #{tpu_custom_call.1} parent=11 // pred_check_branch
          %305 = sbr.rel (%p303) target = $region16
        $region15: #{tpu_custom_call.1} parent=11 // pred_region
          %s307 = ssub.s32 2048, 2048
          %308 = vsyncadd [#allocation7], %s307
          %s309 = sshll.u32 [#allocation6], 4
          %s310 = int_to_ptr.vmem [resolvable:$true] %s309
          %315 = dma.hbm_to_vmem [thread:$0]  %s1, 2048, %s310, [#allocation7], 128, 128, 8
        $region16: #{tpu_custom_call.1} parent=11 // pred_fallthru
          _
        // Predicated region
        $region17: #{tpu_custom_call.1} parent=11 // pred_check
          %p316 = pneg %p94
        $region18: #{tpu_custom_call.1} parent=11 // pred_check_branch
          %318 = sbr.rel (%p316) target = $region20
        $region19: #{tpu_custom_call.1} parent=11 // pred_region
          _
        $region20: #{tpu_custom_call.1} parent=11 // pred_fallthru
          _
        // Predicated region
        $region21: #{tpu_custom_call.1} parent=11 // pred_check
          %p319 = pneg %p115
        $region22: #{tpu_custom_call.1} parent=11 // pred_check_branch
          %321 = sbr.rel (%p319) target = $region24
        $region23: #{tpu_custom_call.1} parent=11 // pred_region
          _
        $region24: #{tpu_custom_call.1} parent=11 // pred_fallthru
          _
        // Predicated region
        $region25: #{tpu_custom_call.1} parent=11 // pred_check
          %p322 = pneg %p136
        $region26: #{tpu_custom_call.1} parent=11 // pred_check_branch
          %324 = sbr.rel (%p322) target = $region28
        $region27: #{tpu_custom_call.1} parent=11 // pred_region
          _
        $region28: #{tpu_custom_call.1} parent=11 // pred_fallthru
          _
        // Predicated region
        $region29: #{tpu_custom_call.1} parent=11 // pred_check
          %p325 = pneg %p157
        $region30: #{tpu_custom_call.1} parent=11 // pred_check_branch
          %327 = sbr.rel (%p325) target = $region32
        $region31: #{tpu_custom_call.1} parent=11 // pred_region
          %s329 = ssub.s32 2048, 2048
          %330 = vsyncadd [#allocation7], %s329
          %s331 = sshll.u32 [#allocation8], 4
          %s332 = int_to_ptr.vmem [resolvable:$true] %s331
          %337 = dma.hbm_to_vmem [thread:$0]  %s5, 2048, %s332, [#allocation7], 64, 64, 4
        $region32: #{tpu_custom_call.1} parent=11 // pred_fallthru
          _
        // Predicated region
        $region33: #{tpu_custom_call.1} parent=11 // pred_check
          %p338 = pneg %p178
        $region34: #{tpu_custom_call.1} parent=11 // pred_check_branch
          %340 = sbr.rel (%p338) target = $region36
        $region35: #{tpu_custom_call.1} parent=11 // pred_region
          _
        $region36: #{tpu_custom_call.1} parent=11 // pred_fallthru
          _
        // Predicated region
        $region37: #{tpu_custom_call.1} parent=11 // pred_check
          %p341 = pneg %p199
        $region38: #{tpu_custom_call.1} parent=11 // pred_check_branch
          %343 = sbr.rel (%p341) target = $region40
        $region39: #{tpu_custom_call.1} parent=11 // pred_region
          _
        $region40: #{tpu_custom_call.1} parent=11 // pred_fallthru
          _
        // Predicated region
        $region41: #{tpu_custom_call.1} parent=11 // pred_check
          %p344 = pneg %p220
        $region42: #{tpu_custom_call.1} parent=11 // pred_check_branch
          %346 = sbr.rel (%p344) target = $region44
        $region43: #{tpu_custom_call.1} parent=11 // pred_region
          _
        $region44: #{tpu_custom_call.1} parent=11 // pred_fallthru
          _
        // Predicated region
        $region45: #{tpu_custom_call.1} parent=11 // pred_check
          %p347 = pneg %p241
        $region46: #{tpu_custom_call.1} parent=11 // pred_check_branch
          %349 = sbr.rel (%p347) target = $region48
        $region47: #{tpu_custom_call.1} parent=11 // pred_region
          _
        $region48: #{tpu_custom_call.1} parent=11 // pred_fallthru
          _
        // Predicated region
        $region49: #{tpu_custom_call.1} parent=11 // pred_check
          %p350 = pneg %p262
        $region50: #{tpu_custom_call.1} parent=11 // pred_check_branch
          %352 = sbr.rel (%p350) target = $region52
        $region51: #{tpu_custom_call.1} parent=11 // pred_region
          _
        $region52: #{tpu_custom_call.1} parent=11 // pred_fallthru
          _
      $region12: #{tpu_custom_call.1} parent=5 // pred_fallthru
        _
      %p353 = scmp.lt.s32.totalorder %s26, 2
      // Predicated region
      $region53: #{tpu_custom_call.1} parent=5 // pred_check
        %p354 = pneg %p353
      $region54: #{tpu_custom_call.1} parent=5 // pred_check_branch
        %356 = sbr.rel (%p354) target = $region56
      $region55: #{tpu_custom_call.1} parent=5 // pred_region
        // Predicated region
        $region57: #{tpu_custom_call.1} parent=55 // pred_check
          %p357 = pneg %p46
        $region58: #{tpu_custom_call.1} parent=55 // pred_check_branch
          %359 = sbr.rel (%p357) target = $region60
        $region59: #{tpu_custom_call.1} parent=55 // pred_region
          %s360 = sand.u32 %s36, 1
          %s361 = scalar_lea.sflag [#allocation4], %s360
          %s362 = sand.u32 %s36, 1
          %s363 = smul.addr %s362, 256
          %s364 = scalar_lea.vmem [#allocation3], %s363
          %s365 = smul.u32 32, %s26
          %s367 = ssub.s32 4096, 4096
          %368 = vsyncadd %s361, %s367
          %s369 = smul.addr %s365, 128
          %s370 = scalar_lea.hbm %s0, %s369
          %s371 = sshll.u32 %s364, 4
          %s372 = int_to_ptr.vmem [resolvable:$true] %s371
          %377 = dma.hbm_to_vmem [thread:$0]  %s370, 4096, %s372, %s361, 128, 128, 8
        $region60: #{tpu_custom_call.1} parent=55 // pred_fallthru
          _
      $region56: #{tpu_custom_call.1} parent=5 // pred_fallthru
        _
      %p378 = scmp.le.s32.totalorder 1, %s26
      %p379 = scmp.lt.s32.totalorder %s26, 3
      %p380 = pnand %p378, %p379
      %p381 = pneg %p380
      // Predicated region
      $region61: #{tpu_custom_call.1} parent=5 // pred_check
        _
      $region62: #{tpu_custom_call.1} parent=5 // pred_check_branch
        %383 = sbr.rel (%p380) target = $region64
      $region63: #{tpu_custom_call.1} parent=5 // pred_region
        %s384 = ssub.s32 %s26, 1
        %s385 = sand.u32 %s39, 1
        %s386 = scalar_lea.sflag [#allocation4], %s385
        %s387 = sand.u32 %s39, 1
        %s388 = smul.addr %s387, 256
        %s389 = scalar_lea.vmem [#allocation3], %s388
        // Predicated region
        $region65: #{tpu_custom_call.1} parent=63 // pred_check
          %p390 = pneg %p52
        $region66: #{tpu_custom_call.1} parent=63 // pred_check_branch
          %392 = sbr.rel (%p390) target = $region68
        $region67: #{tpu_custom_call.1} parent=63 // pred_region
          %393 = dma.done %s386, 4096
        $region68: #{tpu_custom_call.1} parent=63 // pred_fallthru
          _
        // Predicated region
        $region69: #{tpu_custom_call.1} parent=63 // pred_check
          %p394 = pneg %p73
        $region70: #{tpu_custom_call.1} parent=63 // pred_check_branch
          %396 = sbr.rel (%p394) target = $region72
        $region71: #{tpu_custom_call.1} parent=63 // pred_region
          %397 = dma.done [#allocation7], 2048
        $region72: #{tpu_custom_call.1} parent=63 // pred_fallthru
          _
        // Predicated region
        $region73: #{tpu_custom_call.1} parent=63 // pred_check
          %p398 = pneg %p157
        $region74: #{tpu_custom_call.1} parent=63 // pred_check_branch
          %400 = sbr.rel (%p398) target = $region76
        $region75: #{tpu_custom_call.1} parent=63 // pred_region
          %401 = dma.done [#allocation7], 2048
        $region76: #{tpu_custom_call.1} parent=63 // pred_fallthru
          _
        %s402 = sand.u32 %s39, 1
        %s403 = scalar_lea.sflag [#allocation4], %s402
        %s404 = sand.u32 %s39, 1
        %s405 = smul.addr %s404, 256
        %s406 = scalar_lea.vmem [#allocation3], %s405
        %p407 = pneg %p52
        %p408 = pneg %p49
        %p409 = pneg %p73
        %p410 = pneg %p70
        %p411 = pneg %p94
        %p412 = pneg %p91
        %p413 = pneg %p115
        %p414 = pneg %p112
        %p415 = pneg %p136
        %p416 = pneg %p133
        %p417 = pneg %p157
        %p418 = pneg %p154
        %p419 = pneg %p178
        %p420 = pneg %p175
        %p421 = pneg %p199
        %p422 = pneg %p196
        %p423 = pneg %p220
        %p424 = pneg %p217
        %p425 = pneg %p241
        %p426 = pneg %p238
        %p427 = pneg %p262
        %p428 = pneg %p259
        %p429 = pneg %p288
        %p430 = pneg %p285
        %s431 = sand.u32 %s275, 1
        %s432 = scalar_lea.sflag [#allocation5], %s431
        %s433 = sand.u32 %s275, 1
        %s434 = smul.addr %s433, 2
        %s435 = scalar_lea.vmem [#allocation9], %s434
        %s436 = smul.u32 32, %s31
        %s437 = smul.u32 2, %s31
        %v439 = vld [vmem:[%s389] sm:$0xff]
        %v440 = vld [vmem:[%s389 + $0x8] sm:$0xff]
        %v441 = vld [vmem:[%s389 + $0x10] sm:$0xff]
        %v442 = vld [vmem:[%s389 + $0x18] sm:$0xff]
        %v443 = vld [vmem:[%s389 + $0x20] sm:$0xff]
        %v444 = vld [vmem:[%s389 + $0x28] sm:$0xff]
        %v445 = vld [vmem:[%s389 + $0x30] sm:$0xff]
        %v446 = vld [vmem:[%s389 + $0x38] sm:$0xff]
        %v447 = vld [vmem:[%s389 + $0x40] sm:$0xff]
        %v448 = vld [vmem:[%s389 + $0x48] sm:$0xff]
        %v449 = vld [vmem:[%s389 + $0x50] sm:$0xff]
        %v450 = vld [vmem:[%s389 + $0x58] sm:$0xff]
        %v451 = vld [vmem:[%s389 + $0x60] sm:$0xff]
        %v452 = vld [vmem:[%s389 + $0x68] sm:$0xff]
        %v453 = vld [vmem:[%s389 + $0x70] sm:$0xff]
        %v454 = vld [vmem:[%s389 + $0x78] sm:$0xff]
        %v455 = vld [vmem:[%s389 + $0x80] sm:$0xff]
        %v456 = vld [vmem:[%s389 + $0x88] sm:$0xff]
        %v457 = vld [vmem:[%s389 + $0x90] sm:$0xff]
        %v458 = vld [vmem:[%s389 + $0x98] sm:$0xff]
        %v459 = vld [vmem:[%s389 + $0xa0] sm:$0xff]
        %v460 = vld [vmem:[%s389 + $0xa8] sm:$0xff]
        %v461 = vld [vmem:[%s389 + $0xb0] sm:$0xff]
        %v462 = vld [vmem:[%s389 + $0xb8] sm:$0xff]
        %v463 = vld [vmem:[%s389 + $0xc0] sm:$0xff]
        %v464 = vld [vmem:[%s389 + $0xc8] sm:$0xff]
        %v465 = vld [vmem:[%s389 + $0xd0] sm:$0xff]
        %v466 = vld [vmem:[%s389 + $0xd8] sm:$0xff]
        %v467 = vld [vmem:[%s389 + $0xe0] sm:$0xff]
        %v468 = vld [vmem:[%s389 + $0xe8] sm:$0xff]
        %v469 = vld [vmem:[%s389 + $0xf0] sm:$0xff]
        %v470 = vld [vmem:[%s389 + $0xf8] sm:$0xff]
        %v471 = vpack.c.bf16 %v440, %v439
        %v472 = vpack.c.bf16 %v442, %v441
        %v473 = vpack.c.bf16 %v444, %v443
        %v474 = vpack.c.bf16 %v446, %v445
        %v475 = vpack.c.bf16 %v448, %v447
        %v476 = vpack.c.bf16 %v450, %v449
        %v477 = vpack.c.bf16 %v452, %v451
        %v478 = vpack.c.bf16 %v454, %v453
        %v479 = vpack.c.bf16 %v456, %v455
        %v480 = vpack.c.bf16 %v458, %v457
        %v481 = vpack.c.bf16 %v460, %v459
        %v482 = vpack.c.bf16 %v462, %v461
        %v483 = vpack.c.bf16 %v464, %v463
        %v484 = vpack.c.bf16 %v466, %v465
        %v485 = vpack.c.bf16 %v468, %v467
        %v486 = vpack.c.bf16 %v470, %v469
        %v487 = vld [vmem:[#allocation6] sm:$0xff]
        %v488 = vld [vmem:[#allocation6 + $0x8] sm:$0xff]
        %v489 = vld [vmem:[#allocation6 + $0x10] sm:$0xff]
        %v490 = vld [vmem:[#allocation6 + $0x18] sm:$0xff]
        %v491 = vld [vmem:[#allocation6 + $0x20] sm:$0xff]
        %v492 = vld [vmem:[#allocation6 + $0x28] sm:$0xff]
        %v493 = vld [vmem:[#allocation6 + $0x30] sm:$0xff]
        %v494 = vld [vmem:[#allocation6 + $0x38] sm:$0xff]
        %v495 = vld [vmem:[#allocation6 + $0x40] sm:$0xff]
        %v496 = vld [vmem:[#allocation6 + $0x48] sm:$0xff]
        %v497 = vld [vmem:[#allocation6 + $0x50] sm:$0xff]
        %v498 = vld [vmem:[#allocation6 + $0x58] sm:$0xff]
        %v499 = vld [vmem:[#allocation6 + $0x60] sm:$0xff]
        %v500 = vld [vmem:[#allocation6 + $0x68] sm:$0xff]
        %v501 = vld [vmem:[#allocation6 + $0x70] sm:$0xff]
        %v502 = vld [vmem:[#allocation6 + $0x78] sm:$0xff]
        %v503 = vld [vmem:[%s2] sm:$0x3]
        %v505 = vlaneseq
        %v506 = vshrl.u32 %v505, 7
        %v507 = vsub.s32 0, %v506
        %v508 = vrot.slane %v503, %v507
        %v509 = vlaneseq
        %v510 = vshrl.u32 %v509, 7
        %v511 = vsub.s32 1, %v510
        %v512 = vrot.slane %v503, %v511
        %v531 = vunpack.c.l.b16 %v487
        %v532 = vunpack.c.h.b16 %v487
        %v533 = vunpack.c.l.b16 %v488
        %v534 = vunpack.c.h.b16 %v488
        %v535 = vunpack.c.l.b16 %v489
        %v536 = vunpack.c.h.b16 %v489
        %v537 = vunpack.c.l.b16 %v490
        %v538 = vunpack.c.h.b16 %v490
        %v539 = vunpack.c.l.b16 %v491
        %v540 = vunpack.c.h.b16 %v491
        %v541 = vunpack.c.l.b16 %v492
        %v542 = vunpack.c.h.b16 %v492
        %v543 = vunpack.c.l.b16 %v493
        %v544 = vunpack.c.h.b16 %v493
        %v545 = vunpack.c.l.b16 %v494
        %v546 = vunpack.c.h.b16 %v494
        %v547 = vunpack.c.l.b16 %v495
        %v548 = vunpack.c.h.b16 %v495
        %v549 = vunpack.c.l.b16 %v496
        %v550 = vunpack.c.h.b16 %v496
        %v551 = vunpack.c.l.b16 %v497
        %v552 = vunpack.c.h.b16 %v497
        %v553 = vunpack.c.l.b16 %v498
        %v554 = vunpack.c.h.b16 %v498
        %v555 = vunpack.c.l.b16 %v499
        %v556 = vunpack.c.h.b16 %v499
        %v557 = vunpack.c.l.b16 %v500
        %v558 = vunpack.c.h.b16 %v500
        %v559 = vunpack.c.l.b16 %v501
        %v560 = vunpack.c.h.b16 %v501
        %v561 = vunpack.c.l.b16 %v502
        %v562 = vunpack.c.h.b16 %v502
        %v563 = vpack.c.b16 %v533, %v531
        %v564 = vpack.c.b16 %v534, %v532
        %v565 = vpack.c.b16 %v537, %v535
        %v566 = vpack.c.b16 %v538, %v536
        %v567 = vpack.c.b16 %v541, %v539
        %v568 = vpack.c.b16 %v542, %v540
        %v569 = vpack.c.b16 %v545, %v543
        %v570 = vpack.c.b16 %v546, %v544
        %v571 = vpack.c.b16 %v549, %v547
        %v572 = vpack.c.b16 %v550, %v548
        %v573 = vpack.c.b16 %v553, %v551
        %v574 = vpack.c.b16 %v554, %v552
        %v575 = vpack.c.b16 %v557, %v555
        %v576 = vpack.c.b16 %v558, %v556
        %v577 = vpack.c.b16 %v561, %v559
        %v578 = vpack.c.b16 %v562, %v560
        %595 = vmatprep.subr.bf16.mxu0 %v564
        %596 = vmatpush1.bf16.msra.mxu0 %v563
        %597 = vmatprep.subr.bf16.mxu0 %v566
        %598 = vmatpush1.bf16.msra.mxu0 %v565
        %599 = vmatprep.subr.bf16.mxu0 %v568
        %600 = vmatpush1.bf16.msra.mxu0 %v567
        %601 = vmatprep.subr.bf16.mxu0 %v570
        %602 = vmatpush1.bf16.msra.mxu0 %v569
        %603 = vmatprep.subr.bf16.mxu0 %v572
        %604 = vmatpush1.bf16.msra.mxu0 %v571
        %605 = vmatprep.subr.bf16.mxu0 %v574
        %606 = vmatpush1.bf16.msra.mxu0 %v573
        %607 = vmatprep.subr.bf16.mxu0 %v576
        %608 = vmatpush1.bf16.msra.mxu0 %v575
        %609 = vmatprep.subr.bf16.mxu0 %v578
        %610 = vmatpush1.bf16.msra.mxu0 %v577
        %611 = vmatprep.subr.bf16.mxu0 0
        %612 = vmatpush1.bf16.msra.mxu0 0
        %613 = vmatprep.subr.bf16.mxu0 0
        %614 = vmatpush1.bf16.msra.mxu0 0
        %615 = vmatprep.subr.bf16.mxu0 0
        %616 = vmatpush1.bf16.msra.mxu0 0
        %617 = vmatprep.subr.bf16.mxu0 0
        %618 = vmatpush1.bf16.msra.mxu0 0
        %619 = vmatprep.subr.bf16.mxu0 0
        %620 = vmatpush1.bf16.msra.mxu0 0
        %621 = vmatprep.subr.bf16.mxu0 0
        %622 = vmatpush1.bf16.msra.mxu0 0
        %623 = vmatprep.subr.bf16.mxu0 0
        %624 = vmatpush1.bf16.msra.mxu0 0
        %625 = vmatprep.subr.bf16.mxu0 0
        %626 = vmatpush1.bf16.msra.mxu0 0
        %627 = vmatprep.mubr.bf16.mxu0 0
        %628 = vmatmul.mubr.bf16.gmra.mrb[0].mxu0 %v471
        %v629 = vpop.f32.mrb[0].mxu0
        %v630 = vadd.f32 %v508, %v629
        %v631 = vpop.f32.mrb[0].mxu0
        %v632 = vadd.f32 %v512, %v631
        %v633 = vpop.f32.mrb[0].mxu0
        %v634 = vadd.f32 %v508, %v633
        %v635 = vpop.f32.mrb[0].mxu0
        %v636 = vadd.f32 %v512, %v635
        %637 = vmatprep.mubr.bf16.mxu0 0
        %638 = vmatmul.mubr.bf16.gmra.mrb[0].mxu0 %v472
        %v639 = vpop.f32.mrb[0].mxu0
        %v640 = vadd.f32 %v508, %v639
        %v641 = vpop.f32.mrb[0].mxu0
        %v642 = vadd.f32 %v512, %v641
        %v643 = vpop.f32.mrb[0].mxu0
        %v644 = vadd.f32 %v508, %v643
        %v645 = vpop.f32.mrb[0].mxu0
        %v646 = vadd.f32 %v512, %v645
        %647 = vmatprep.mubr.bf16.mxu0 0
        %648 = vmatmul.mubr.bf16.gmra.mrb[0].mxu0 %v473
        %v649 = vpop.f32.mrb[0].mxu0
        %v650 = vadd.f32 %v508, %v649
        %v651 = vpop.f32.mrb[0].mxu0
        %v652 = vadd.f32 %v512, %v651
        %v653 = vpop.f32.mrb[0].mxu0
        %v654 = vadd.f32 %v508, %v653
        %v655 = vpop.f32.mrb[0].mxu0
        %v656 = vadd.f32 %v512, %v655
        %657 = vmatprep.mubr.bf16.mxu0 0
        %658 = vmatmul.mubr.bf16.gmra.mrb[0].mxu0 %v474
        %v659 = vpop.f32.mrb[0].mxu0
        %v660 = vadd.f32 %v508, %v659
        %v661 = vpop.f32.mrb[0].mxu0
        %v662 = vadd.f32 %v512, %v661
        %v663 = vpop.f32.mrb[0].mxu0
        %v664 = vadd.f32 %v508, %v663
        %v665 = vpop.f32.mrb[0].mxu0
        %v666 = vadd.f32 %v512, %v665
        %667 = vmatprep.mubr.bf16.mxu0 0
        %668 = vmatmul.mubr.bf16.gmra.mrb[0].mxu0 %v475
        %v669 = vpop.f32.mrb[0].mxu0
        %v670 = vadd.f32 %v508, %v669
        %v671 = vpop.f32.mrb[0].mxu0
        %v672 = vadd.f32 %v512, %v671
        %v673 = vpop.f32.mrb[0].mxu0
        %v674 = vadd.f32 %v508, %v673
        %v675 = vpop.f32.mrb[0].mxu0
        %v676 = vadd.f32 %v512, %v675
        %677 = vmatprep.mubr.bf16.mxu0 0
        %678 = vmatmul.mubr.bf16.gmra.mrb[0].mxu0 %v476
        %v679 = vpop.f32.mrb[0].mxu0
        %v680 = vadd.f32 %v508, %v679
        %v681 = vpop.f32.mrb[0].mxu0
        %v682 = vadd.f32 %v512, %v681
        %v683 = vpop.f32.mrb[0].mxu0
        %v684 = vadd.f32 %v508, %v683
        %v685 = vpop.f32.mrb[0].mxu0
        %v686 = vadd.f32 %v512, %v685
        %687 = vmatprep.mubr.bf16.mxu0 0
        %688 = vmatmul.mubr.bf16.gmra.mrb[0].mxu0 %v477
        %v689 = vpop.f32.mrb[0].mxu0
        %v690 = vadd.f32 %v508, %v689
        %v691 = vpop.f32.mrb[0].mxu0
        %v692 = vadd.f32 %v512, %v691
        %v693 = vpop.f32.mrb[0].mxu0
        %v694 = vadd.f32 %v508, %v693
        %v695 = vpop.f32.mrb[0].mxu0
        %v696 = vadd.f32 %v512, %v695
        %697 = vmatprep.mubr.bf16.mxu0 0
        %698 = vmatmul.mubr.bf16.gmra.mrb[0].mxu0 %v478
        %v699 = vpop.f32.mrb[0].mxu0
        %v700 = vadd.f32 %v508, %v699
        %v701 = vpop.f32.mrb[0].mxu0
        %v702 = vadd.f32 %v512, %v701
        %v703 = vpop.f32.mrb[0].mxu0
        %v704 = vadd.f32 %v508, %v703
        %v705 = vpop.f32.mrb[0].mxu0
        %v706 = vadd.f32 %v512, %v705
        %707 = vmatprep.mubr.bf16.mxu0 0
        %708 = vmatmul.mubr.bf16.gmra.mrb[0].mxu0 %v479
        %v709 = vpop.f32.mrb[0].mxu0
        %v710 = vadd.f32 %v508, %v709
        %v711 = vpop.f32.mrb[0].mxu0
        %v712 = vadd.f32 %v512, %v711
        %v713 = vpop.f32.mrb[0].mxu0
        %v714 = vadd.f32 %v508, %v713
        %v715 = vpop.f32.mrb[0].mxu0
        %v716 = vadd.f32 %v512, %v715
        %717 = vmatprep.mubr.bf16.mxu0 0
        %718 = vmatmul.mubr.bf16.gmra.mrb[0].mxu0 %v480
        %v719 = vpop.f32.mrb[0].mxu0
        %v720 = vadd.f32 %v508, %v719
        %v721 = vpop.f32.mrb[0].mxu0
        %v722 = vadd.f32 %v512, %v721
        %v723 = vpop.f32.mrb[0].mxu0
        %v724 = vadd.f32 %v508, %v723
        %v725 = vpop.f32.mrb[0].mxu0
        %v726 = vadd.f32 %v512, %v725
        %727 = vmatprep.mubr.bf16.mxu0 0
        %728 = vmatmul.mubr.bf16.gmra.mrb[0].mxu0 %v481
        %v729 = vpop.f32.mrb[0].mxu0
        %v730 = vadd.f32 %v508, %v729
        %v731 = vpop.f32.mrb[0].mxu0
        %v732 = vadd.f32 %v512, %v731
        %v733 = vpop.f32.mrb[0].mxu0
        %v734 = vadd.f32 %v508, %v733
        %v735 = vpop.f32.mrb[0].mxu0
        %v736 = vadd.f32 %v512, %v735
        %737 = vmatprep.mubr.bf16.mxu0 0
        %738 = vmatmul.mubr.bf16.gmra.mrb[0].mxu0 %v482
        %v739 = vpop.f32.mrb[0].mxu0
        %v740 = vadd.f32 %v508, %v739
        %v741 = vpop.f32.mrb[0].mxu0
        %v742 = vadd.f32 %v512, %v741
        %v743 = vpop.f32.mrb[0].mxu0
        %v744 = vadd.f32 %v508, %v743
        %v745 = vpop.f32.mrb[0].mxu0
        %v746 = vadd.f32 %v512, %v745
        %747 = vmatprep.mubr.bf16.mxu0 0
        %748 = vmatmul.mubr.bf16.gmra.mrb[0].mxu0 %v483
        %v749 = vpop.f32.mrb[0].mxu0
        %v750 = vadd.f32 %v508, %v749
        %v751 = vpop.f32.mrb[0].mxu0
        %v752 = vadd.f32 %v512, %v751
        %v753 = vpop.f32.mrb[0].mxu0
        %v754 = vadd.f32 %v508, %v753
        %v755 = vpop.f32.mrb[0].mxu0
        %v756 = vadd.f32 %v512, %v755
        %757 = vmatprep.mubr.bf16.mxu0 0
        %758 = vmatmul.mubr.bf16.gmra.mrb[0].mxu0 %v484
        %v759 = vpop.f32.mrb[0].mxu0
        %v760 = vadd.f32 %v508, %v759
        %v761 = vpop.f32.mrb[0].mxu0
        %v762 = vadd.f32 %v512, %v761
        %v763 = vpop.f32.mrb[0].mxu0
        %v764 = vadd.f32 %v508, %v763
        %v765 = vpop.f32.mrb[0].mxu0
        %v766 = vadd.f32 %v512, %v765
        %767 = vmatprep.mubr.bf16.mxu0 0
        %768 = vmatmul.mubr.bf16.gmra.mrb[0].mxu0 %v485
        %v769 = vpop.f32.mrb[0].mxu0
        %v770 = vadd.f32 %v508, %v769
        %v771 = vpop.f32.mrb[0].mxu0
        %v772 = vadd.f32 %v512, %v771
        %v773 = vpop.f32.mrb[0].mxu0
        %v774 = vadd.f32 %v508, %v773
        %v775 = vpop.f32.mrb[0].mxu0
        %v776 = vadd.f32 %v512, %v775
        %777 = vmatprep.mubr.bf16.mxu0 0
        %778 = vmatmul.mubr.bf16.gmra.mrb[0].mxu0 %v486
        %v779 = vpop.f32.mrb[0].mxu0
        %v780 = vadd.f32 %v508, %v779
        %v781 = vpop.f32.mrb[0].mxu0
        %v782 = vadd.f32 %v512, %v781
        %v783 = vpop.f32.mrb[0].mxu0
        %v784 = vadd.f32 %v508, %v783
        %v785 = vpop.f32.mrb[0].mxu0
        %v786 = vadd.f32 %v512, %v785
        %787 = vdwg.mxu0
        %v788 = vld [vmem:[%s3] sm:$0x3]
        %v789 = vld [vmem:[%s4] sm:$0x3]
        %v790 = vadd.f32 %v630, %v632
        %791 = vadd.xlane.f32.xlu0 %v790
        %v792 = vpop.xlane.xlu0 %791
        %v793 = vadd.f32 %v634, %v636
        %794 = vadd.xlane.f32.xlu0 %v793
        %v795 = vpop.xlane.xlu0 %794
        %v796 = vadd.f32 %v640, %v642
        %797 = vadd.xlane.f32.xlu0 %v796
        %v798 = vpop.xlane.xlu0 %797
        %v799 = vadd.f32 %v644, %v646
        %800 = vadd.xlane.f32.xlu0 %v799
        %v801 = vpop.xlane.xlu0 %800
        %v802 = vadd.f32 %v650, %v652
        %803 = vadd.xlane.f32.xlu0 %v802
        %v804 = vpop.xlane.xlu0 %803
        %v805 = vadd.f32 %v654, %v656
        %806 = vadd.xlane.f32.xlu0 %v805
        %v807 = vpop.xlane.xlu0 %806
        %v808 = vadd.f32 %v660, %v662
        %809 = vadd.xlane.f32.xlu0 %v808
        %v810 = vpop.xlane.xlu0 %809
        %v811 = vadd.f32 %v664, %v666
        %812 = vadd.xlane.f32.xlu0 %v811
        %v813 = vpop.xlane.xlu0 %812
        %v814 = vadd.f32 %v670, %v672
        %815 = vadd.xlane.f32.xlu0 %v814
        %v816 = vpop.xlane.xlu0 %815
        %v817 = vadd.f32 %v674, %v676
        %818 = vadd.xlane.f32.xlu0 %v817
        %v819 = vpop.xlane.xlu0 %818
        %v820 = vadd.f32 %v680, %v682
        %821 = vadd.xlane.f32.xlu0 %v820
        %v822 = vpop.xlane.xlu0 %821
        %v823 = vadd.f32 %v684, %v686
        %824 = vadd.xlane.f32.xlu0 %v823
        %v825 = vpop.xlane.xlu0 %824
        %v826 = vadd.f32 %v690, %v692
        %827 = vadd.xlane.f32.xlu0 %v826
        %v828 = vpop.xlane.xlu0 %827
        %v829 = vadd.f32 %v694, %v696
        %830 = vadd.xlane.f32.xlu0 %v829
        %v831 = vpop.xlane.xlu0 %830
        %v832 = vadd.f32 %v700, %v702
        %833 = vadd.xlane.f32.xlu0 %v832
        %v834 = vpop.xlane.xlu0 %833
        %v835 = vadd.f32 %v704, %v706
        %836 = vadd.xlane.f32.xlu0 %v835
        %v837 = vpop.xlane.xlu0 %836
        %v838 = vadd.f32 %v710, %v712
        %839 = vadd.xlane.f32.xlu0 %v838
        %v840 = vpop.xlane.xlu0 %839
        %v841 = vadd.f32 %v714, %v716
        %842 = vadd.xlane.f32.xlu0 %v841
        %v843 = vpop.xlane.xlu0 %842
        %v844 = vadd.f32 %v720, %v722
        %845 = vadd.xlane.f32.xlu0 %v844
        %v846 = vpop.xlane.xlu0 %845
        %v847 = vadd.f32 %v724, %v726
        %848 = vadd.xlane.f32.xlu0 %v847
        %v849 = vpop.xlane.xlu0 %848
        %v850 = vadd.f32 %v730, %v732
        %851 = vadd.xlane.f32.xlu0 %v850
        %v852 = vpop.xlane.xlu0 %851
        %v853 = vadd.f32 %v734, %v736
        %854 = vadd.xlane.f32.xlu0 %v853
        %v855 = vpop.xlane.xlu0 %854
        %v856 = vadd.f32 %v740, %v742
        %857 = vadd.xlane.f32.xlu0 %v856
        %v858 = vpop.xlane.xlu0 %857
        %v859 = vadd.f32 %v744, %v746
        %860 = vadd.xlane.f32.xlu0 %v859
        %v861 = vpop.xlane.xlu0 %860
        %v862 = vadd.f32 %v750, %v752
        %863 = vadd.xlane.f32.xlu0 %v862
        %v864 = vpop.xlane.xlu0 %863
        %v865 = vadd.f32 %v754, %v756
        %866 = vadd.xlane.f32.xlu0 %v865
        %v867 = vpop.xlane.xlu0 %866
        %v868 = vadd.f32 %v760, %v762
        %869 = vadd.xlane.f32.xlu0 %v868
        %v870 = vpop.xlane.xlu0 %869
        %v871 = vadd.f32 %v764, %v766
        %872 = vadd.xlane.f32.xlu0 %v871
        %v873 = vpop.xlane.xlu0 %872
        %v874 = vadd.f32 %v770, %v772
        %875 = vadd.xlane.f32.xlu0 %v874
        %v876 = vpop.xlane.xlu0 %875
        %v877 = vadd.f32 %v774, %v776
        %878 = vadd.xlane.f32.xlu0 %v877
        %v879 = vpop.xlane.xlu0 %878
        %v880 = vadd.f32 %v780, %v782
        %881 = vadd.xlane.f32.xlu0 %v880
        %v882 = vpop.xlane.xlu0 %881
        %v883 = vadd.f32 %v784, %v786
        %884 = vadd.xlane.f32.xlu0 %v883
        %v885 = vpop.xlane.xlu0 %884
        %v886 = vrcp.pop 256.0
        %v887 = vmul.f32 %v792, %v886
        %v888 = vmul.f32 %v795, %v886
        %v889 = vmul.f32 %v798, %v886
        %v890 = vmul.f32 %v801, %v886
        %v891 = vmul.f32 %v804, %v886
        %v892 = vmul.f32 %v807, %v886
        %v893 = vmul.f32 %v810, %v886
        %v894 = vmul.f32 %v813, %v886
        %v895 = vmul.f32 %v816, %v886
        %v896 = vmul.f32 %v819, %v886
        %v897 = vmul.f32 %v822, %v886
        %v898 = vmul.f32 %v825, %v886
        %v899 = vmul.f32 %v828, %v886
        %v900 = vmul.f32 %v831, %v886
        %v901 = vmul.f32 %v834, %v886
        %v902 = vmul.f32 %v837, %v886
        %v903 = vmul.f32 %v840, %v886
        %v904 = vmul.f32 %v843, %v886
        %v905 = vmul.f32 %v846, %v886
        %v906 = vmul.f32 %v849, %v886
        %v907 = vmul.f32 %v852, %v886
        %v908 = vmul.f32 %v855, %v886
        %v909 = vmul.f32 %v858, %v886
        %v910 = vmul.f32 %v861, %v886
        %v911 = vmul.f32 %v864, %v886
        %v912 = vmul.f32 %v867, %v886
        %v913 = vmul.f32 %v870, %v886
        %v914 = vmul.f32 %v873, %v886
        %v915 = vmul.f32 %v876, %v886
        %v916 = vmul.f32 %v879, %v886
        %v917 = vmul.f32 %v882, %v886
        %v918 = vmul.f32 %v885, %v886
        %v919 = vsub.f32 %v630, %v887
        %v920 = vsub.f32 %v632, %v887
        %v921 = vsub.f32 %v634, %v888
        %v922 = vsub.f32 %v636, %v888
        %v923 = vsub.f32 %v640, %v889
        %v924 = vsub.f32 %v642, %v889
        %v925 = vsub.f32 %v644, %v890
        %v926 = vsub.f32 %v646, %v890
        %v927 = vsub.f32 %v650, %v891
        %v928 = vsub.f32 %v652, %v891
        %v929 = vsub.f32 %v654, %v892
        %v930 = vsub.f32 %v656, %v892
        %v931 = vsub.f32 %v660, %v893
        %v932 = vsub.f32 %v662, %v893
        %v933 = vsub.f32 %v664, %v894
        %v934 = vsub.f32 %v666, %v894
        %v935 = vsub.f32 %v670, %v895
        %v936 = vsub.f32 %v672, %v895
        %v937 = vsub.f32 %v674, %v896
        %v938 = vsub.f32 %v676, %v896
        %v939 = vsub.f32 %v680, %v897
        %v940 = vsub.f32 %v682, %v897
        %v941 = vsub.f32 %v684, %v898
        %v942 = vsub.f32 %v686, %v898
        %v943 = vsub.f32 %v690, %v899
        %v944 = vsub.f32 %v692, %v899
        %v945 = vsub.f32 %v694, %v900
        %v946 = vsub.f32 %v696, %v900
        %v947 = vsub.f32 %v700, %v901
        %v948 = vsub.f32 %v702, %v901
        %v949 = vsub.f32 %v704, %v902
        %v950 = vsub.f32 %v706, %v902
        %v951 = vsub.f32 %v710, %v903
        %v952 = vsub.f32 %v712, %v903
        %v953 = vsub.f32 %v714, %v904
        %v954 = vsub.f32 %v716, %v904
        %v955 = vsub.f32 %v720, %v905
        %v956 = vsub.f32 %v722, %v905
        %v957 = vsub.f32 %v724, %v906
        %v958 = vsub.f32 %v726, %v906
        %v959 = vsub.f32 %v730, %v907
        %v960 = vsub.f32 %v732, %v907
        %v961 = vsub.f32 %v734, %v908
        %v962 = vsub.f32 %v736, %v908
        %v963 = vsub.f32 %v740, %v909
        %v964 = vsub.f32 %v742, %v909
        %v965 = vsub.f32 %v744, %v910
        %v966 = vsub.f32 %v746, %v910
        %v967 = vsub.f32 %v750, %v911
        %v968 = vsub.f32 %v752, %v911
        %v969 = vsub.f32 %v754, %v912
        %v970 = vsub.f32 %v756, %v912
        %v971 = vsub.f32 %v760, %v913
        %v972 = vsub.f32 %v762, %v913
        %v973 = vsub.f32 %v764, %v914
        %v974 = vsub.f32 %v766, %v914
        %v975 = vsub.f32 %v770, %v915
        %v976 = vsub.f32 %v772, %v915
        %v977 = vsub.f32 %v774, %v916
        %v978 = vsub.f32 %v776, %v916
        %v979 = vsub.f32 %v780, %v917
        %v980 = vsub.f32 %v782, %v917
        %v981 = vsub.f32 %v784, %v918
        %v982 = vsub.f32 %v786, %v918
        %v983 = vmul.f32 %v919, %v919
        %v984 = vmul.f32 %v920, %v920
        %v985 = vmul.f32 %v921, %v921
        %v986 = vmul.f32 %v922, %v922
        %v987 = vmul.f32 %v923, %v923
        %v988 = vmul.f32 %v924, %v924
        %v989 = vmul.f32 %v925, %v925
        %v990 = vmul.f32 %v926, %v926
        %v991 = vmul.f32 %v927, %v927
        %v992 = vmul.f32 %v928, %v928
        %v993 = vmul.f32 %v929, %v929
        %v994 = vmul.f32 %v930, %v930
        %v995 = vmul.f32 %v931, %v931
        %v996 = vmul.f32 %v932, %v932
        %v997 = vmul.f32 %v933, %v933
        %v998 = vmul.f32 %v934, %v934
        %v999 = vmul.f32 %v935, %v935
        %v1000 = vmul.f32 %v936, %v936
        %v1001 = vmul.f32 %v937, %v937
        %v1002 = vmul.f32 %v938, %v938
        %v1003 = vmul.f32 %v939, %v939
        %v1004 = vmul.f32 %v940, %v940
        %v1005 = vmul.f32 %v941, %v941
        %v1006 = vmul.f32 %v942, %v942
        %v1007 = vmul.f32 %v943, %v943
        %v1008 = vmul.f32 %v944, %v944
        %v1009 = vmul.f32 %v945, %v945
        %v1010 = vmul.f32 %v946, %v946
        %v1011 = vmul.f32 %v947, %v947
        %v1012 = vmul.f32 %v948, %v948
        %v1013 = vmul.f32 %v949, %v949
        %v1014 = vmul.f32 %v950, %v950
        %v1015 = vmul.f32 %v951, %v951
        %v1016 = vmul.f32 %v952, %v952
        %v1017 = vmul.f32 %v953, %v953
        %v1018 = vmul.f32 %v954, %v954
        %v1019 = vmul.f32 %v955, %v955
        %v1020 = vmul.f32 %v956, %v956
        %v1021 = vmul.f32 %v957, %v957
        %v1022 = vmul.f32 %v958, %v958
        %v1023 = vmul.f32 %v959, %v959
        %v1024 = vmul.f32 %v960, %v960
        %v1025 = vmul.f32 %v961, %v961
        %v1026 = vmul.f32 %v962, %v962
        %v1027 = vmul.f32 %v963, %v963
        %v1028 = vmul.f32 %v964, %v964
        %v1029 = vmul.f32 %v965, %v965
        %v1030 = vmul.f32 %v966, %v966
        %v1031 = vmul.f32 %v967, %v967
        %v1032 = vmul.f32 %v968, %v968
        %v1033 = vmul.f32 %v969, %v969
        %v1034 = vmul.f32 %v970, %v970
        %v1035 = vmul.f32 %v971, %v971
        %v1036 = vmul.f32 %v972, %v972
        %v1037 = vmul.f32 %v973, %v973
        %v1038 = vmul.f32 %v974, %v974
        %v1039 = vmul.f32 %v975, %v975
        %v1040 = vmul.f32 %v976, %v976
        %v1041 = vmul.f32 %v977, %v977
        %v1042 = vmul.f32 %v978, %v978
        %v1043 = vmul.f32 %v979, %v979
        %v1044 = vmul.f32 %v980, %v980
        %v1045 = vmul.f32 %v981, %v981
        %v1046 = vmul.f32 %v982, %v982
        %v1047 = vadd.f32 %v983, %v984
        %1048 = vadd.xlane.f32.xlu0 %v1047
        %v1049 = vpop.xlane.xlu0 %1048
        %v1050 = vadd.f32 %v985, %v986
        %1051 = vadd.xlane.f32.xlu0 %v1050
        %v1052 = vpop.xlane.xlu0 %1051
        %v1053 = vadd.f32 %v987, %v988
        %1054 = vadd.xlane.f32.xlu0 %v1053
        %v1055 = vpop.xlane.xlu0 %1054
        %v1056 = vadd.f32 %v989, %v990
        %1057 = vadd.xlane.f32.xlu0 %v1056
        %v1058 = vpop.xlane.xlu0 %1057
        %v1059 = vadd.f32 %v991, %v992
        %1060 = vadd.xlane.f32.xlu0 %v1059
        %v1061 = vpop.xlane.xlu0 %1060
        %v1062 = vadd.f32 %v993, %v994
        %1063 = vadd.xlane.f32.xlu0 %v1062
        %v1064 = vpop.xlane.xlu0 %1063
        %v1065 = vadd.f32 %v995, %v996
        %1066 = vadd.xlane.f32.xlu0 %v1065
        %v1067 = vpop.xlane.xlu0 %1066
        %v1068 = vadd.f32 %v997, %v998
        %1069 = vadd.xlane.f32.xlu0 %v1068
        %v1070 = vpop.xlane.xlu0 %1069
        %v1071 = vadd.f32 %v999, %v1000
        %1072 = vadd.xlane.f32.xlu0 %v1071
        %v1073 = vpop.xlane.xlu0 %1072
        %v1074 = vadd.f32 %v1001, %v1002
        %1075 = vadd.xlane.f32.xlu0 %v1074
        %v1076 = vpop.xlane.xlu0 %1075
        %v1077 = vadd.f32 %v1003, %v1004
        %1078 = vadd.xlane.f32.xlu0 %v1077
        %v1079 = vpop.xlane.xlu0 %1078
        %v1080 = vadd.f32 %v1005, %v1006
        %1081 = vadd.xlane.f32.xlu0 %v1080
        %v1082 = vpop.xlane.xlu0 %1081
        %v1083 = vadd.f32 %v1007, %v1008
        %1084 = vadd.xlane.f32.xlu0 %v1083
        %v1085 = vpop.xlane.xlu0 %1084
        %v1086 = vadd.f32 %v1009, %v1010
        %1087 = vadd.xlane.f32.xlu0 %v1086
        %v1088 = vpop.xlane.xlu0 %1087
        %v1089 = vadd.f32 %v1011, %v1012
        %1090 = vadd.xlane.f32.xlu0 %v1089
        %v1091 = vpop.xlane.xlu0 %1090
        %v1092 = vadd.f32 %v1013, %v1014
        %1093 = vadd.xlane.f32.xlu0 %v1092
        %v1094 = vpop.xlane.xlu0 %1093
        %v1095 = vadd.f32 %v1015, %v1016
        %1096 = vadd.xlane.f32.xlu0 %v1095
        %v1097 = vpop.xlane.xlu0 %1096
        %v1098 = vadd.f32 %v1017, %v1018
        %1099 = vadd.xlane.f32.xlu0 %v1098
        %v1100 = vpop.xlane.xlu0 %1099
        %v1101 = vadd.f32 %v1019, %v1020
        %1102 = vadd.xlane.f32.xlu0 %v1101
        %v1103 = vpop.xlane.xlu0 %1102
        %v1104 = vadd.f32 %v1021, %v1022
        %1105 = vadd.xlane.f32.xlu0 %v1104
        %v1106 = vpop.xlane.xlu0 %1105
        %v1107 = vadd.f32 %v1023, %v1024
        %1108 = vadd.xlane.f32.xlu0 %v1107
        %v1109 = vpop.xlane.xlu0 %1108
        %v1110 = vadd.f32 %v1025, %v1026
        %1111 = vadd.xlane.f32.xlu0 %v1110
        %v1112 = vpop.xlane.xlu0 %1111
        %v1113 = vadd.f32 %v1027, %v1028
        %1114 = vadd.xlane.f32.xlu0 %v1113
        %v1115 = vpop.xlane.xlu0 %1114
        %v1116 = vadd.f32 %v1029, %v1030
        %1117 = vadd.xlane.f32.xlu0 %v1116
        %v1118 = vpop.xlane.xlu0 %1117
        %v1119 = vadd.f32 %v1031, %v1032
        %1120 = vadd.xlane.f32.xlu0 %v1119
        %v1121 = vpop.xlane.xlu0 %1120
        %v1122 = vadd.f32 %v1033, %v1034
        %1123 = vadd.xlane.f32.xlu0 %v1122
        %v1124 = vpop.xlane.xlu0 %1123
        %v1125 = vadd.f32 %v1035, %v1036
        %1126 = vadd.xlane.f32.xlu0 %v1125
        %v1127 = vpop.xlane.xlu0 %1126
        %v1128 = vadd.f32 %v1037, %v1038
        %1129 = vadd.xlane.f32.xlu0 %v1128
        %v1130 = vpop.xlane.xlu0 %1129
        %v1131 = vadd.f32 %v1039, %v1040
        %1132 = vadd.xlane.f32.xlu0 %v1131
        %v1133 = vpop.xlane.xlu0 %1132
        %v1134 = vadd.f32 %v1041, %v1042
        %1135 = vadd.xlane.f32.xlu0 %v1134
        %v1136 = vpop.xlane.xlu0 %1135
        %v1137 = vadd.f32 %v1043, %v1044
        %1138 = vadd.xlane.f32.xlu0 %v1137
        %v1139 = vpop.xlane.xlu0 %1138
        %v1140 = vadd.f32 %v1045, %v1046
        %1141 = vadd.xlane.f32.xlu0 %v1140
        %v1142 = vpop.xlane.xlu0 %1141
        %v1143 = vmul.f32 %v1049, %v886
        %v1144 = vmul.f32 %v1052, %v886
        %v1145 = vmul.f32 %v1055, %v886
        %v1146 = vmul.f32 %v1058, %v886
        %v1147 = vmul.f32 %v1061, %v886
        %v1148 = vmul.f32 %v1064, %v886
        %v1149 = vmul.f32 %v1067, %v886
        %v1150 = vmul.f32 %v1070, %v886
        %v1151 = vmul.f32 %v1073, %v886
        %v1152 = vmul.f32 %v1076, %v886
        %v1153 = vmul.f32 %v1079, %v886
        %v1154 = vmul.f32 %v1082, %v886
        %v1155 = vmul.f32 %v1085, %v886
        %v1156 = vmul.f32 %v1088, %v886
        %v1157 = vmul.f32 %v1091, %v886
        %v1158 = vmul.f32 %v1094, %v886
        %v1159 = vmul.f32 %v1097, %v886
        %v1160 = vmul.f32 %v1100, %v886
        %v1161 = vmul.f32 %v1103, %v886
        %v1162 = vmul.f32 %v1106, %v886
        %v1163 = vmul.f32 %v1109, %v886
        %v1164 = vmul.f32 %v1112, %v886
        %v1165 = vmul.f32 %v1115, %v886
        %v1166 = vmul.f32 %v1118, %v886
        %v1167 = vmul.f32 %v1121, %v886
        %v1168 = vmul.f32 %v1124, %v886
        %v1169 = vmul.f32 %v1127, %v886
        %v1170 = vmul.f32 %v1130, %v886
        %v1171 = vmul.f32 %v1133, %v886
        %v1172 = vmul.f32 %v1136, %v886
        %v1173 = vmul.f32 %v1139, %v886
        %v1174 = vmul.f32 %v1142, %v886
        %v1175 = vadd.f32 %v1143, 1e-05
        %v1176 = vadd.f32 %v1144, 1e-05
        %v1177 = vadd.f32 %v1145, 1e-05
        %v1178 = vadd.f32 %v1146, 1e-05
        %v1179 = vadd.f32 %v1147, 1e-05
        %v1180 = vadd.f32 %v1148, 1e-05
        %v1181 = vadd.f32 %v1149, 1e-05
        %v1182 = vadd.f32 %v1150, 1e-05
        %v1183 = vadd.f32 %v1151, 1e-05
        %v1184 = vadd.f32 %v1152, 1e-05
        %v1185 = vadd.f32 %v1153, 1e-05
        %v1186 = vadd.f32 %v1154, 1e-05
        %v1187 = vadd.f32 %v1155, 1e-05
        %v1188 = vadd.f32 %v1156, 1e-05
        %v1189 = vadd.f32 %v1157, 1e-05
        %v1190 = vadd.f32 %v1158, 1e-05
        %v1191 = vadd.f32 %v1159, 1e-05
        %v1192 = vadd.f32 %v1160, 1e-05
        %v1193 = vadd.f32 %v1161, 1e-05
        %v1194 = vadd.f32 %v1162, 1e-05
        %v1195 = vadd.f32 %v1163, 1e-05
        %v1196 = vadd.f32 %v1164, 1e-05
        %v1197 = vadd.f32 %v1165, 1e-05
        %v1198 = vadd.f32 %v1166, 1e-05
        %v1199 = vadd.f32 %v1167, 1e-05
        %v1200 = vadd.f32 %v1168, 1e-05
        %v1201 = vadd.f32 %v1169, 1e-05
        %v1202 = vadd.f32 %v1170, 1e-05
        %v1203 = vadd.f32 %v1171, 1e-05
        %v1204 = vadd.f32 %v1172, 1e-05
        %v1205 = vadd.f32 %v1173, 1e-05
        %v1206 = vadd.f32 %v1174, 1e-05
        %v1207 = vrsqrt.pop %v1175
        %v1208 = vrsqrt.pop %v1176
        %v1209 = vrsqrt.pop %v1177
        %v1210 = vrsqrt.pop %v1178
        %v1211 = vrsqrt.pop %v1179
        %v1212 = vrsqrt.pop %v1180
        %v1213 = vrsqrt.pop %v1181
        %v1214 = vrsqrt.pop %v1182
        %v1215 = vrsqrt.pop %v1183
        %v1216 = vrsqrt.pop %v1184
        %v1217 = vrsqrt.pop %v1185
        %v1218 = vrsqrt.pop %v1186
        %v1219 = vrsqrt.pop %v1187
        %v1220 = vrsqrt.pop %v1188
        %v1221 = vrsqrt.pop %v1189
        %v1222 = vrsqrt.pop %v1190
        %v1223 = vrsqrt.pop %v1191
        %v1224 = vrsqrt.pop %v1192
        %v1225 = vrsqrt.pop %v1193
        %v1226 = vrsqrt.pop %v1194
        %v1227 = vrsqrt.pop %v1195
        %v1228 = vrsqrt.pop %v1196
        %v1229 = vrsqrt.pop %v1197
        %v1230 = vrsqrt.pop %v1198
        %v1231 = vrsqrt.pop %v1199
        %v1232 = vrsqrt.pop %v1200
        %v1233 = vrsqrt.pop %v1201
        %v1234 = vrsqrt.pop %v1202
        %v1235 = vrsqrt.pop %v1203
        %v1236 = vrsqrt.pop %v1204
        %v1237 = vrsqrt.pop %v1205
        %v1238 = vrsqrt.pop %v1206
        %v1239 = vmul.f32 %v919, %v1207
        %v1240 = vmul.f32 %v920, %v1207
        %v1241 = vmul.f32 %v921, %v1208
        %v1242 = vmul.f32 %v922, %v1208
        %v1243 = vmul.f32 %v923, %v1209
        %v1244 = vmul.f32 %v924, %v1209
        %v1245 = vmul.f32 %v925, %v1210
        %v1246 = vmul.f32 %v926, %v1210
        %v1247 = vmul.f32 %v927, %v1211
        %v1248 = vmul.f32 %v928, %v1211
        %v1249 = vmul.f32 %v929, %v1212
        %v1250 = vmul.f32 %v930, %v1212
        %v1251 = vmul.f32 %v931, %v1213
        %v1252 = vmul.f32 %v932, %v1213
        %v1253 = vmul.f32 %v933, %v1214
        %v1254 = vmul.f32 %v934, %v1214
        %v1255 = vmul.f32 %v935, %v1215
        %v1256 = vmul.f32 %v936, %v1215
        %v1257 = vmul.f32 %v937, %v1216
        %v1258 = vmul.f32 %v938, %v1216
        %v1259 = vmul.f32 %v939, %v1217
        %v1260 = vmul.f32 %v940, %v1217
        %v1261 = vmul.f32 %v941, %v1218
        %v1262 = vmul.f32 %v942, %v1218
        %v1263 = vmul.f32 %v943, %v1219
        %v1264 = vmul.f32 %v944, %v1219
        %v1265 = vmul.f32 %v945, %v1220
        %v1266 = vmul.f32 %v946, %v1220
        %v1267 = vmul.f32 %v947, %v1221
        %v1268 = vmul.f32 %v948, %v1221
        %v1269 = vmul.f32 %v949, %v1222
        %v1270 = vmul.f32 %v950, %v1222
        %v1271 = vmul.f32 %v951, %v1223
        %v1272 = vmul.f32 %v952, %v1223
        %v1273 = vmul.f32 %v953, %v1224
        %v1274 = vmul.f32 %v954, %v1224
        %v1275 = vmul.f32 %v955, %v1225
        %v1276 = vmul.f32 %v956, %v1225
        %v1277 = vmul.f32 %v957, %v1226
        %v1278 = vmul.f32 %v958, %v1226
        %v1279 = vmul.f32 %v959, %v1227
        %v1280 = vmul.f32 %v960, %v1227
        %v1281 = vmul.f32 %v961, %v1228
        %v1282 = vmul.f32 %v962, %v1228
        %v1283 = vmul.f32 %v963, %v1229
        %v1284 = vmul.f32 %v964, %v1229
        %v1285 = vmul.f32 %v965, %v1230
        %v1286 = vmul.f32 %v966, %v1230
        %v1287 = vmul.f32 %v967, %v1231
        %v1288 = vmul.f32 %v968, %v1231
        %v1289 = vmul.f32 %v969, %v1232
        %v1290 = vmul.f32 %v970, %v1232
        %v1291 = vmul.f32 %v971, %v1233
        %v1292 = vmul.f32 %v972, %v1233
        %v1293 = vmul.f32 %v973, %v1234
        %v1294 = vmul.f32 %v974, %v1234
        %v1295 = vmul.f32 %v975, %v1235
        %v1296 = vmul.f32 %v976, %v1235
        %v1297 = vmul.f32 %v977, %v1236
        %v1298 = vmul.f32 %v978, %v1236
        %v1299 = vmul.f32 %v979, %v1237
        %v1300 = vmul.f32 %v980, %v1237
        %v1301 = vmul.f32 %v981, %v1238
        %v1302 = vmul.f32 %v982, %v1238
        %v1304 = vlaneseq
        %v1305 = vshrl.u32 %v1304, 7
        %v1306 = vsub.s32 0, %v1305
        %v1307 = vrot.slane %v788, %v1306
        %v1308 = vlaneseq
        %v1309 = vshrl.u32 %v1308, 7
        %v1310 = vsub.s32 1, %v1309
        %v1311 = vrot.slane %v788, %v1310
        %v1314 = vmul.f32 %v1239, %v1307
        %v1315 = vmul.f32 %v1240, %v1311
        %v1316 = vmul.f32 %v1241, %v1307
        %v1317 = vmul.f32 %v1242, %v1311
        %v1318 = vmul.f32 %v1243, %v1307
        %v1319 = vmul.f32 %v1244, %v1311
        %v1320 = vmul.f32 %v1245, %v1307
        %v1321 = vmul.f32 %v1246, %v1311
        %v1322 = vmul.f32 %v1247, %v1307
        %v1323 = vmul.f32 %v1248, %v1311
        %v1324 = vmul.f32 %v1249, %v1307
        %v1325 = vmul.f32 %v1250, %v1311
        %v1326 = vmul.f32 %v1251, %v1307
        %v1327 = vmul.f32 %v1252, %v1311
        %v1328 = vmul.f32 %v1253, %v1307
        %v1329 = vmul.f32 %v1254, %v1311
        %v1330 = vmul.f32 %v1255, %v1307
        %v1331 = vmul.f32 %v1256, %v1311
        %v1332 = vmul.f32 %v1257, %v1307
        %v1333 = vmul.f32 %v1258, %v1311
        %v1334 = vmul.f32 %v1259, %v1307
        %v1335 = vmul.f32 %v1260, %v1311
        %v1336 = vmul.f32 %v1261, %v1307
        %v1337 = vmul.f32 %v1262, %v1311
        %v1338 = vmul.f32 %v1263, %v1307
        %v1339 = vmul.f32 %v1264, %v1311
        %v1340 = vmul.f32 %v1265, %v1307
        %v1341 = vmul.f32 %v1266, %v1311
        %v1342 = vmul.f32 %v1267, %v1307
        %v1343 = vmul.f32 %v1268, %v1311
        %v1344 = vmul.f32 %v1269, %v1307
        %v1345 = vmul.f32 %v1270, %v1311
        %v1346 = vmul.f32 %v1271, %v1307
        %v1347 = vmul.f32 %v1272, %v1311
        %v1348 = vmul.f32 %v1273, %v1307
        %v1349 = vmul.f32 %v1274, %v1311
        %v1350 = vmul.f32 %v1275, %v1307
        %v1351 = vmul.f32 %v1276, %v1311
        %v1352 = vmul.f32 %v1277, %v1307
        %v1353 = vmul.f32 %v1278, %v1311
        %v1354 = vmul.f32 %v1279, %v1307
        %v1355 = vmul.f32 %v1280, %v1311
        %v1356 = vmul.f32 %v1281, %v1307
        %v1357 = vmul.f32 %v1282, %v1311
        %v1358 = vmul.f32 %v1283, %v1307
        %v1359 = vmul.f32 %v1284, %v1311
        %v1360 = vmul.f32 %v1285, %v1307
        %v1361 = vmul.f32 %v1286, %v1311
        %v1362 = vmul.f32 %v1287, %v1307
        %v1363 = vmul.f32 %v1288, %v1311
        %v1364 = vmul.f32 %v1289, %v1307
        %v1365 = vmul.f32 %v1290, %v1311
        %v1366 = vmul.f32 %v1291, %v1307
        %v1367 = vmul.f32 %v1292, %v1311
        %v1368 = vmul.f32 %v1293, %v1307
        %v1369 = vmul.f32 %v1294, %v1311
        %v1370 = vmul.f32 %v1295, %v1307
        %v1371 = vmul.f32 %v1296, %v1311
        %v1372 = vmul.f32 %v1297, %v1307
        %v1373 = vmul.f32 %v1298, %v1311
        %v1374 = vmul.f32 %v1299, %v1307
        %v1375 = vmul.f32 %v1300, %v1311
        %v1376 = vmul.f32 %v1301, %v1307
        %v1377 = vmul.f32 %v1302, %v1311
        %v1379 = vlaneseq
        %v1380 = vshrl.u32 %v1379, 7
        %v1381 = vsub.s32 0, %v1380
        %v1382 = vrot.slane %v789, %v1381
        %v1383 = vlaneseq
        %v1384 = vshrl.u32 %v1383, 7
        %v1385 = vsub.s32 1, %v1384
        %v1386 = vrot.slane %v789, %v1385
        %v1389 = vadd.f32 %v1314, %v1382
        %v1390 = vadd.f32 %v1315, %v1386
        %v1391 = vadd.f32 %v1316, %v1382
        %v1392 = vadd.f32 %v1317, %v1386
        %v1393 = vadd.f32 %v1318, %v1382
        %v1394 = vadd.f32 %v1319, %v1386
        %v1395 = vadd.f32 %v1320, %v1382
        %v1396 = vadd.f32 %v1321, %v1386
        %v1397 = vadd.f32 %v1322, %v1382
        %v1398 = vadd.f32 %v1323, %v1386
        %v1399 = vadd.f32 %v1324, %v1382
        %v1400 = vadd.f32 %v1325, %v1386
        %v1401 = vadd.f32 %v1326, %v1382
        %v1402 = vadd.f32 %v1327, %v1386
        %v1403 = vadd.f32 %v1328, %v1382
        %v1404 = vadd.f32 %v1329, %v1386
        %v1405 = vadd.f32 %v1330, %v1382
        %v1406 = vadd.f32 %v1331, %v1386
        %v1407 = vadd.f32 %v1332, %v1382
        %v1408 = vadd.f32 %v1333, %v1386
        %v1409 = vadd.f32 %v1334, %v1382
        %v1410 = vadd.f32 %v1335, %v1386
        %v1411 = vadd.f32 %v1336, %v1382
        %v1412 = vadd.f32 %v1337, %v1386
        %v1413 = vadd.f32 %v1338, %v1382
        %v1414 = vadd.f32 %v1339, %v1386
        %v1415 = vadd.f32 %v1340, %v1382
        %v1416 = vadd.f32 %v1341, %v1386
        %v1417 = vadd.f32 %v1342, %v1382
        %v1418 = vadd.f32 %v1343, %v1386
        %v1419 = vadd.f32 %v1344, %v1382
        %v1420 = vadd.f32 %v1345, %v1386
        %v1421 = vadd.f32 %v1346, %v1382
        %v1422 = vadd.f32 %v1347, %v1386
        %v1423 = vadd.f32 %v1348, %v1382
        %v1424 = vadd.f32 %v1349, %v1386
        %v1425 = vadd.f32 %v1350, %v1382
        %v1426 = vadd.f32 %v1351, %v1386
        %v1427 = vadd.f32 %v1352, %v1382
        %v1428 = vadd.f32 %v1353, %v1386
        %v1429 = vadd.f32 %v1354, %v1382
        %v1430 = vadd.f32 %v1355, %v1386
        %v1431 = vadd.f32 %v1356, %v1382
        %v1432 = vadd.f32 %v1357, %v1386
        %v1433 = vadd.f32 %v1358, %v1382
        %v1434 = vadd.f32 %v1359, %v1386
        %v1435 = vadd.f32 %v1360, %v1382
        %v1436 = vadd.f32 %v1361, %v1386
        %v1437 = vadd.f32 %v1362, %v1382
        %v1438 = vadd.f32 %v1363, %v1386
        %v1439 = vadd.f32 %v1364, %v1382
        %v1440 = vadd.f32 %v1365, %v1386
        %v1441 = vadd.f32 %v1366, %v1382
        %v1442 = vadd.f32 %v1367, %v1386
        %v1443 = vadd.f32 %v1368, %v1382
        %v1444 = vadd.f32 %v1369, %v1386
        %v1445 = vadd.f32 %v1370, %v1382
        %v1446 = vadd.f32 %v1371, %v1386
        %v1447 = vadd.f32 %v1372, %v1382
        %v1448 = vadd.f32 %v1373, %v1386
        %v1449 = vadd.f32 %v1374, %v1382
        %v1450 = vadd.f32 %v1375, %v1386
        %v1451 = vadd.f32 %v1376, %v1382
        %v1452 = vadd.f32 %v1377, %v1386
        %v1453 = vmul.f32 %v1389, 0.5
        %v1454 = vmul.f32 %v1390, 0.5
        %v1455 = vmul.f32 %v1391, 0.5
        %v1456 = vmul.f32 %v1392, 0.5
        %v1457 = vmul.f32 %v1393, 0.5
        %v1458 = vmul.f32 %v1394, 0.5
        %v1459 = vmul.f32 %v1395, 0.5
        %v1460 = vmul.f32 %v1396, 0.5
        %v1461 = vmul.f32 %v1397, 0.5
        %v1462 = vmul.f32 %v1398, 0.5
        %v1463 = vmul.f32 %v1399, 0.5
        %v1464 = vmul.f32 %v1400, 0.5
        %v1465 = vmul.f32 %v1401, 0.5
        %v1466 = vmul.f32 %v1402, 0.5
        %v1467 = vmul.f32 %v1403, 0.5
        %v1468 = vmul.f32 %v1404, 0.5
        %v1469 = vmul.f32 %v1405, 0.5
        %v1470 = vmul.f32 %v1406, 0.5
        %v1471 = vmul.f32 %v1407, 0.5
        %v1472 = vmul.f32 %v1408, 0.5
        %v1473 = vmul.f32 %v1409, 0.5
        %v1474 = vmul.f32 %v1410, 0.5
        %v1475 = vmul.f32 %v1411, 0.5
        %v1476 = vmul.f32 %v1412, 0.5
        %v1477 = vmul.f32 %v1413, 0.5
        %v1478 = vmul.f32 %v1414, 0.5
        %v1479 = vmul.f32 %v1415, 0.5
        %v1480 = vmul.f32 %v1416, 0.5
        %v1481 = vmul.f32 %v1417, 0.5
        %v1482 = vmul.f32 %v1418, 0.5
        %v1483 = vmul.f32 %v1419, 0.5
        %v1484 = vmul.f32 %v1420, 0.5
        %v1485 = vmul.f32 %v1421, 0.5
        %v1486 = vmul.f32 %v1422, 0.5
        %v1487 = vmul.f32 %v1423, 0.5
        %v1488 = vmul.f32 %v1424, 0.5
        %v1489 = vmul.f32 %v1425, 0.5
        %v1490 = vmul.f32 %v1426, 0.5
        %v1491 = vmul.f32 %v1427, 0.5
        %v1492 = vmul.f32 %v1428, 0.5
        %v1493 = vmul.f32 %v1429, 0.5
        %v1494 = vmul.f32 %v1430, 0.5
        %v1495 = vmul.f32 %v1431, 0.5
        %v1496 = vmul.f32 %v1432, 0.5
        %v1497 = vmul.f32 %v1433, 0.5
        %v1498 = vmul.f32 %v1434, 0.5
        %v1499 = vmul.f32 %v1435, 0.5
        %v1500 = vmul.f32 %v1436, 0.5
        %v1501 = vmul.f32 %v1437, 0.5
        %v1502 = vmul.f32 %v1438, 0.5
        %v1503 = vmul.f32 %v1439, 0.5
        %v1504 = vmul.f32 %v1440, 0.5
        %v1505 = vmul.f32 %v1441, 0.5
        %v1506 = vmul.f32 %v1442, 0.5
        %v1507 = vmul.f32 %v1443, 0.5
        %v1508 = vmul.f32 %v1444, 0.5
        %v1509 = vmul.f32 %v1445, 0.5
        %v1510 = vmul.f32 %v1446, 0.5
        %v1511 = vmul.f32 %v1447, 0.5
        %v1512 = vmul.f32 %v1448, 0.5
        %v1513 = vmul.f32 %v1449, 0.5
        %v1514 = vmul.f32 %v1450, 0.5
        %v1515 = vmul.f32 %v1451, 0.5
        %v1516 = vmul.f32 %v1452, 0.5
        %v1517 = vmul.f32 %v1389, 0.70710677
        %v1518 = vmul.f32 %v1390, 0.70710677
        %v1519 = vmul.f32 %v1391, 0.70710677
        %v1520 = vmul.f32 %v1392, 0.70710677
        %v1521 = vmul.f32 %v1393, 0.70710677
        %v1522 = vmul.f32 %v1394, 0.70710677
        %v1523 = vmul.f32 %v1395, 0.70710677
        %v1524 = vmul.f32 %v1396, 0.70710677
        %v1525 = vmul.f32 %v1397, 0.70710677
        %v1526 = vmul.f32 %v1398, 0.70710677
        %v1527 = vmul.f32 %v1399, 0.70710677
        %v1528 = vmul.f32 %v1400, 0.70710677
        %v1529 = vmul.f32 %v1401, 0.70710677
        %v1530 = vmul.f32 %v1402, 0.70710677
        %v1531 = vmul.f32 %v1403, 0.70710677
        %v1532 = vmul.f32 %v1404, 0.70710677
        %v1533 = vmul.f32 %v1405, 0.70710677
        %v1534 = vmul.f32 %v1406, 0.70710677
        %v1535 = vmul.f32 %v1407, 0.70710677
        %v1536 = vmul.f32 %v1408, 0.70710677
        %v1537 = vmul.f32 %v1409, 0.70710677
        %v1538 = vmul.f32 %v1410, 0.70710677
        %v1539 = vmul.f32 %v1411, 0.70710677
        %v1540 = vmul.f32 %v1412, 0.70710677
        %v1541 = vmul.f32 %v1413, 0.70710677
        %v1542 = vmul.f32 %v1414, 0.70710677
        %v1543 = vmul.f32 %v1415, 0.70710677
        %v1544 = vmul.f32 %v1416, 0.70710677
        %v1545 = vmul.f32 %v1417, 0.70710677
        %v1546 = vmul.f32 %v1418, 0.70710677
        %v1547 = vmul.f32 %v1419, 0.70710677
        %v1548 = vmul.f32 %v1420, 0.70710677
        %v1549 = vmul.f32 %v1421, 0.70710677
        %v1550 = vmul.f32 %v1422, 0.70710677
        %v1551 = vmul.f32 %v1423, 0.70710677
        %v1552 = vmul.f32 %v1424, 0.70710677
        %v1553 = vmul.f32 %v1425, 0.70710677
        %v1554 = vmul.f32 %v1426, 0.70710677
        %v1555 = vmul.f32 %v1427, 0.70710677
        %v1556 = vmul.f32 %v1428, 0.70710677
        %v1557 = vmul.f32 %v1429, 0.70710677
        %v1558 = vmul.f32 %v1430, 0.70710677
        %v1559 = vmul.f32 %v1431, 0.70710677
        %v1560 = vmul.f32 %v1432, 0.70710677
        %v1561 = vmul.f32 %v1433, 0.70710677
        %v1562 = vmul.f32 %v1434, 0.70710677
        %v1563 = vmul.f32 %v1435, 0.70710677
        %v1564 = vmul.f32 %v1436, 0.70710677
        %v1565 = vmul.f32 %v1437, 0.70710677
        %v1566 = vmul.f32 %v1438, 0.70710677
        %v1567 = vmul.f32 %v1439, 0.70710677
        %v1568 = vmul.f32 %v1440, 0.70710677
        %v1569 = vmul.f32 %v1441, 0.70710677
        %v1570 = vmul.f32 %v1442, 0.70710677
        %v1571 = vmul.f32 %v1443, 0.70710677
        %v1572 = vmul.f32 %v1444, 0.70710677
        %v1573 = vmul.f32 %v1445, 0.70710677
        %v1574 = vmul.f32 %v1446, 0.70710677
        %v1575 = vmul.f32 %v1447, 0.70710677
        %v1576 = vmul.f32 %v1448, 0.70710677
        %v1577 = vmul.f32 %v1449, 0.70710677
        %v1578 = vmul.f32 %v1450, 0.70710677
        %v1579 = vmul.f32 %v1451, 0.70710677
        %v1580 = vmul.f32 %v1452, 0.70710677
        %v1581 = verf.f32.pop %v1517
        %v1582 = verf.f32.pop %v1518
        %v1583 = verf.f32.pop %v1519
        %v1584 = verf.f32.pop %v1520
        %v1585 = verf.f32.pop %v1521
        %v1586 = verf.f32.pop %v1522
        %v1587 = verf.f32.pop %v1523
        %v1588 = verf.f32.pop %v1524
        %v1589 = verf.f32.pop %v1525
        %v1590 = verf.f32.pop %v1526
        %v1591 = verf.f32.pop %v1527
        %v1592 = verf.f32.pop %v1528
        %v1593 = verf.f32.pop %v1529
        %v1594 = verf.f32.pop %v1530
        %v1595 = verf.f32.pop %v1531
        %v1596 = verf.f32.pop %v1532
        %v1597 = verf.f32.pop %v1533
        %v1598 = verf.f32.pop %v1534
        %v1599 = verf.f32.pop %v1535
        %v1600 = verf.f32.pop %v1536
        %v1601 = verf.f32.pop %v1537
        %v1602 = verf.f32.pop %v1538
        %v1603 = verf.f32.pop %v1539
        %v1604 = verf.f32.pop %v1540
        %v1605 = verf.f32.pop %v1541
        %v1606 = verf.f32.pop %v1542
        %v1607 = verf.f32.pop %v1543
        %v1608 = verf.f32.pop %v1544
        %v1609 = verf.f32.pop %v1545
        %v1610 = verf.f32.pop %v1546
        %v1611 = verf.f32.pop %v1547
        %v1612 = verf.f32.pop %v1548
        %v1613 = verf.f32.pop %v1549
        %v1614 = verf.f32.pop %v1550
        %v1615 = verf.f32.pop %v1551
        %v1616 = verf.f32.pop %v1552
        %v1617 = verf.f32.pop %v1553
        %v1618 = verf.f32.pop %v1554
        %v1619 = verf.f32.pop %v1555
        %v1620 = verf.f32.pop %v1556
        %v1621 = verf.f32.pop %v1557
        %v1622 = verf.f32.pop %v1558
        %v1623 = verf.f32.pop %v1559
        %v1624 = verf.f32.pop %v1560
        %v1625 = verf.f32.pop %v1561
        %v1626 = verf.f32.pop %v1562
        %v1627 = verf.f32.pop %v1563
        %v1628 = verf.f32.pop %v1564
        %v1629 = verf.f32.pop %v1565
        %v1630 = verf.f32.pop %v1566
        %v1631 = verf.f32.pop %v1567
        %v1632 = verf.f32.pop %v1568
        %v1633 = verf.f32.pop %v1569
        %v1634 = verf.f32.pop %v1570
        %v1635 = verf.f32.pop %v1571
        %v1636 = verf.f32.pop %v1572
        %v1637 = verf.f32.pop %v1573
        %v1638 = verf.f32.pop %v1574
        %v1639 = verf.f32.pop %v1575
        %v1640 = verf.f32.pop %v1576
        %v1641 = verf.f32.pop %v1577
        %v1642 = verf.f32.pop %v1578
        %v1643 = verf.f32.pop %v1579
        %v1644 = verf.f32.pop %v1580
        %v1645 = vadd.f32 %v1581, 1.0
        %v1646 = vadd.f32 %v1582, 1.0
        %v1647 = vadd.f32 %v1583, 1.0
        %v1648 = vadd.f32 %v1584, 1.0
        %v1649 = vadd.f32 %v1585, 1.0
        %v1650 = vadd.f32 %v1586, 1.0
        %v1651 = vadd.f32 %v1587, 1.0
        %v1652 = vadd.f32 %v1588, 1.0
        %v1653 = vadd.f32 %v1589, 1.0
        %v1654 = vadd.f32 %v1590, 1.0
        %v1655 = vadd.f32 %v1591, 1.0
        %v1656 = vadd.f32 %v1592, 1.0
        %v1657 = vadd.f32 %v1593, 1.0
        %v1658 = vadd.f32 %v1594, 1.0
        %v1659 = vadd.f32 %v1595, 1.0
        %v1660 = vadd.f32 %v1596, 1.0
        %v1661 = vadd.f32 %v1597, 1.0
        %v1662 = vadd.f32 %v1598, 1.0
        %v1663 = vadd.f32 %v1599, 1.0
        %v1664 = vadd.f32 %v1600, 1.0
        %v1665 = vadd.f32 %v1601, 1.0
        %v1666 = vadd.f32 %v1602, 1.0
        %v1667 = vadd.f32 %v1603, 1.0
        %v1668 = vadd.f32 %v1604, 1.0
        %v1669 = vadd.f32 %v1605, 1.0
        %v1670 = vadd.f32 %v1606, 1.0
        %v1671 = vadd.f32 %v1607, 1.0
        %v1672 = vadd.f32 %v1608, 1.0
        %v1673 = vadd.f32 %v1609, 1.0
        %v1674 = vadd.f32 %v1610, 1.0
        %v1675 = vadd.f32 %v1611, 1.0
        %v1676 = vadd.f32 %v1612, 1.0
        %v1677 = vadd.f32 %v1613, 1.0
        %v1678 = vadd.f32 %v1614, 1.0
        %v1679 = vadd.f32 %v1615, 1.0
        %v1680 = vadd.f32 %v1616, 1.0
        %v1681 = vadd.f32 %v1617, 1.0
        %v1682 = vadd.f32 %v1618, 1.0
        %v1683 = vadd.f32 %v1619, 1.0
        %v1684 = vadd.f32 %v1620, 1.0
        %v1685 = vadd.f32 %v1621, 1.0
        %v1686 = vadd.f32 %v1622, 1.0
        %v1687 = vadd.f32 %v1623, 1.0
        %v1688 = vadd.f32 %v1624, 1.0
        %v1689 = vadd.f32 %v1625, 1.0
        %v1690 = vadd.f32 %v1626, 1.0
        %v1691 = vadd.f32 %v1627, 1.0
        %v1692 = vadd.f32 %v1628, 1.0
        %v1693 = vadd.f32 %v1629, 1.0
        %v1694 = vadd.f32 %v1630, 1.0
        %v1695 = vadd.f32 %v1631, 1.0
        %v1696 = vadd.f32 %v1632, 1.0
        %v1697 = vadd.f32 %v1633, 1.0
        %v1698 = vadd.f32 %v1634, 1.0
        %v1699 = vadd.f32 %v1635, 1.0
        %v1700 = vadd.f32 %v1636, 1.0
        %v1701 = vadd.f32 %v1637, 1.0
        %v1702 = vadd.f32 %v1638, 1.0
        %v1703 = vadd.f32 %v1639, 1.0
        %v1704 = vadd.f32 %v1640, 1.0
        %v1705 = vadd.f32 %v1641, 1.0
        %v1706 = vadd.f32 %v1642, 1.0
        %v1707 = vadd.f32 %v1643, 1.0
        %v1708 = vadd.f32 %v1644, 1.0
        %v1709 = vmul.f32 %v1453, %v1645
        %v1710 = vmul.f32 %v1454, %v1646
        %v1711 = vmul.f32 %v1455, %v1647
        %v1712 = vmul.f32 %v1456, %v1648
        %v1713 = vmul.f32 %v1457, %v1649
        %v1714 = vmul.f32 %v1458, %v1650
        %v1715 = vmul.f32 %v1459, %v1651
        %v1716 = vmul.f32 %v1460, %v1652
        %v1717 = vmul.f32 %v1461, %v1653
        %v1718 = vmul.f32 %v1462, %v1654
        %v1719 = vmul.f32 %v1463, %v1655
        %v1720 = vmul.f32 %v1464, %v1656
        %v1721 = vmul.f32 %v1465, %v1657
        %v1722 = vmul.f32 %v1466, %v1658
        %v1723 = vmul.f32 %v1467, %v1659
        %v1724 = vmul.f32 %v1468, %v1660
        %v1725 = vmul.f32 %v1469, %v1661
        %v1726 = vmul.f32 %v1470, %v1662
        %v1727 = vmul.f32 %v1471, %v1663
        %v1728 = vmul.f32 %v1472, %v1664
        %v1729 = vmul.f32 %v1473, %v1665
        %v1730 = vmul.f32 %v1474, %v1666
        %v1731 = vmul.f32 %v1475, %v1667
        %v1732 = vmul.f32 %v1476, %v1668
        %v1733 = vmul.f32 %v1477, %v1669
        %v1734 = vmul.f32 %v1478, %v1670
        %v1735 = vmul.f32 %v1479, %v1671
        %v1736 = vmul.f32 %v1480, %v1672
        %v1737 = vmul.f32 %v1481, %v1673
        %v1738 = vmul.f32 %v1482, %v1674
        %v1739 = vmul.f32 %v1483, %v1675
        %v1740 = vmul.f32 %v1484, %v1676
        %v1741 = vmul.f32 %v1485, %v1677
        %v1742 = vmul.f32 %v1486, %v1678
        %v1743 = vmul.f32 %v1487, %v1679
        %v1744 = vmul.f32 %v1488, %v1680
        %v1745 = vmul.f32 %v1489, %v1681
        %v1746 = vmul.f32 %v1490, %v1682
        %v1747 = vmul.f32 %v1491, %v1683
        %v1748 = vmul.f32 %v1492, %v1684
        %v1749 = vmul.f32 %v1493, %v1685
        %v1750 = vmul.f32 %v1494, %v1686
        %v1751 = vmul.f32 %v1495, %v1687
        %v1752 = vmul.f32 %v1496, %v1688
        %v1753 = vmul.f32 %v1497, %v1689
        %v1754 = vmul.f32 %v1498, %v1690
        %v1755 = vmul.f32 %v1499, %v1691
        %v1756 = vmul.f32 %v1500, %v1692
        %v1757 = vmul.f32 %v1501, %v1693
        %v1758 = vmul.f32 %v1502, %v1694
        %v1759 = vmul.f32 %v1503, %v1695
        %v1760 = vmul.f32 %v1504, %v1696
        %v1761 = vmul.f32 %v1505, %v1697
        %v1762 = vmul.f32 %v1506, %v1698
        %v1763 = vmul.f32 %v1507, %v1699
        %v1764 = vmul.f32 %v1508, %v1700
        %v1765 = vmul.f32 %v1509, %v1701
        %v1766 = vmul.f32 %v1510, %v1702
        %v1767 = vmul.f32 %v1511, %v1703
        %v1768 = vmul.f32 %v1512, %v1704
        %v1769 = vmul.f32 %v1513, %v1705
        %v1770 = vmul.f32 %v1514, %v1706
        %v1771 = vmul.f32 %v1515, %v1707
        %v1772 = vmul.f32 %v1516, %v1708
        %v1773 = vpack.c.bf16 %v1711, %v1709
        %v1774 = vpack.c.bf16 %v1712, %v1710
        %v1775 = vpack.c.bf16 %v1715, %v1713
        %v1776 = vpack.c.bf16 %v1716, %v1714
        %v1777 = vpack.c.bf16 %v1719, %v1717
        %v1778 = vpack.c.bf16 %v1720, %v1718
        %v1779 = vpack.c.bf16 %v1723, %v1721
        %v1780 = vpack.c.bf16 %v1724, %v1722
        %v1781 = vpack.c.bf16 %v1727, %v1725
        %v1782 = vpack.c.bf16 %v1728, %v1726
        %v1783 = vpack.c.bf16 %v1731, %v1729
        %v1784 = vpack.c.bf16 %v1732, %v1730
        %v1785 = vpack.c.bf16 %v1735, %v1733
        %v1786 = vpack.c.bf16 %v1736, %v1734
        %v1787 = vpack.c.bf16 %v1739, %v1737
        %v1788 = vpack.c.bf16 %v1740, %v1738
        %v1789 = vpack.c.bf16 %v1743, %v1741
        %v1790 = vpack.c.bf16 %v1744, %v1742
        %v1791 = vpack.c.bf16 %v1747, %v1745
        %v1792 = vpack.c.bf16 %v1748, %v1746
        %v1793 = vpack.c.bf16 %v1751, %v1749
        %v1794 = vpack.c.bf16 %v1752, %v1750
        %v1795 = vpack.c.bf16 %v1755, %v1753
        %v1796 = vpack.c.bf16 %v1756, %v1754
        %v1797 = vpack.c.bf16 %v1759, %v1757
        %v1798 = vpack.c.bf16 %v1760, %v1758
        %v1799 = vpack.c.bf16 %v1763, %v1761
        %v1800 = vpack.c.bf16 %v1764, %v1762
        %v1801 = vpack.c.bf16 %v1767, %v1765
        %v1802 = vpack.c.bf16 %v1768, %v1766
        %v1803 = vpack.c.bf16 %v1771, %v1769
        %v1804 = vpack.c.bf16 %v1772, %v1770
        %v1805 = vld [vmem:[#allocation8] sm:$0xf]
        %v1806 = vld [vmem:[#allocation8 + $0x4] sm:$0xf]
        %v1807 = vld [vmem:[#allocation8 + $0x8] sm:$0xf]
        %v1808 = vld [vmem:[#allocation8 + $0xc] sm:$0xf]
        %v1809 = vld [vmem:[#allocation8 + $0x10] sm:$0xf]
        %v1810 = vld [vmem:[#allocation8 + $0x14] sm:$0xf]
        %v1811 = vld [vmem:[#allocation8 + $0x18] sm:$0xf]
        %v1812 = vld [vmem:[#allocation8 + $0x1c] sm:$0xf]
        %v1813 = vld [vmem:[#allocation8 + $0x20] sm:$0xf]
        %v1814 = vld [vmem:[#allocation8 + $0x24] sm:$0xf]
        %v1815 = vld [vmem:[#allocation8 + $0x28] sm:$0xf]
        %v1816 = vld [vmem:[#allocation8 + $0x2c] sm:$0xf]
        %v1817 = vld [vmem:[#allocation8 + $0x30] sm:$0xf]
        %v1818 = vld [vmem:[#allocation8 + $0x34] sm:$0xf]
        %v1819 = vld [vmem:[#allocation8 + $0x38] sm:$0xf]
        %v1820 = vld [vmem:[#allocation8 + $0x3c] sm:$0xf]
        %v1821 = vld [vmem:[#allocation8 + $0x40] sm:$0xf]
        %v1822 = vld [vmem:[#allocation8 + $0x44] sm:$0xf]
        %v1823 = vld [vmem:[#allocation8 + $0x48] sm:$0xf]
        %v1824 = vld [vmem:[#allocation8 + $0x4c] sm:$0xf]
        %v1825 = vld [vmem:[#allocation8 + $0x50] sm:$0xf]
        %v1826 = vld [vmem:[#allocation8 + $0x54] sm:$0xf]
        %v1827 = vld [vmem:[#allocation8 + $0x58] sm:$0xf]
        %v1828 = vld [vmem:[#allocation8 + $0x5c] sm:$0xf]
        %v1829 = vld [vmem:[#allocation8 + $0x60] sm:$0xf]
        %v1830 = vld [vmem:[#allocation8 + $0x64] sm:$0xf]
        %v1831 = vld [vmem:[#allocation8 + $0x68] sm:$0xf]
        %v1832 = vld [vmem:[#allocation8 + $0x6c] sm:$0xf]
        %v1833 = vld [vmem:[#allocation8 + $0x70] sm:$0xf]
        %v1834 = vld [vmem:[#allocation8 + $0x74] sm:$0xf]
        %v1835 = vld [vmem:[#allocation8 + $0x78] sm:$0xf]
        %v1836 = vld [vmem:[#allocation8 + $0x7c] sm:$0xf]
        %v1837 = vld [vmem:[%s6] sm:$0x1]
        %v1839 = vlaneseq
        %v1840 = vshrl.u32 %v1839, 7
        %v1841 = vsub.s32 0, %v1840
        %v1842 = vrot.slane %v1837, %v1841
        %v1876 = vunpack.c.l.b16 %v1805
        %v1877 = vunpack.c.l.b16 %v1806
        %v1878 = vunpack.c.l.b16 %v1807
        %v1879 = vunpack.c.l.b16 %v1808
        %v1880 = vunpack.c.l.b16 %v1809
        %v1881 = vunpack.c.l.b16 %v1810
        %v1882 = vunpack.c.l.b16 %v1811
        %v1883 = vunpack.c.l.b16 %v1812
        %v1884 = vunpack.c.l.b16 %v1813
        %v1885 = vunpack.c.l.b16 %v1814
        %v1886 = vunpack.c.l.b16 %v1815
        %v1887 = vunpack.c.l.b16 %v1816
        %v1888 = vunpack.c.l.b16 %v1817
        %v1889 = vunpack.c.l.b16 %v1818
        %v1890 = vunpack.c.l.b16 %v1819
        %v1891 = vunpack.c.l.b16 %v1820
        %v1892 = vunpack.c.l.b16 %v1821
        %v1893 = vunpack.c.l.b16 %v1822
        %v1894 = vunpack.c.l.b16 %v1823
        %v1895 = vunpack.c.l.b16 %v1824
        %v1896 = vunpack.c.l.b16 %v1825
        %v1897 = vunpack.c.l.b16 %v1826
        %v1898 = vunpack.c.l.b16 %v1827
        %v1899 = vunpack.c.l.b16 %v1828
        %v1900 = vunpack.c.l.b16 %v1829
        %v1901 = vunpack.c.l.b16 %v1830
        %v1902 = vunpack.c.l.b16 %v1831
        %v1903 = vunpack.c.l.b16 %v1832
        %v1904 = vunpack.c.l.b16 %v1833
        %v1905 = vunpack.c.l.b16 %v1834
        %v1906 = vunpack.c.l.b16 %v1835
        %v1907 = vunpack.c.l.b16 %v1836
        %v1908 = vpack.c.b16 %v1877, %v1876
        %v1909 = vpack.c.b16 %v1879, %v1878
        %v1910 = vpack.c.b16 %v1881, %v1880
        %v1911 = vpack.c.b16 %v1883, %v1882
        %v1912 = vpack.c.b16 %v1885, %v1884
        %v1913 = vpack.c.b16 %v1887, %v1886
        %v1914 = vpack.c.b16 %v1889, %v1888
        %v1915 = vpack.c.b16 %v1891, %v1890
        %v1916 = vpack.c.b16 %v1893, %v1892
        %v1917 = vpack.c.b16 %v1895, %v1894
        %v1918 = vpack.c.b16 %v1897, %v1896
        %v1919 = vpack.c.b16 %v1899, %v1898
        %v1920 = vpack.c.b16 %v1901, %v1900
        %v1921 = vpack.c.b16 %v1903, %v1902
        %v1922 = vpack.c.b16 %v1905, %v1904
        %v1923 = vpack.c.b16 %v1907, %v1906
        %1940 = vmatprep.subr.bf16.mxu0 0
        %1941 = vmatpush1.bf16.msra.mxu0 %v1908
        %1942 = vmatprep.subr.bf16.mxu0 0
        %1943 = vmatpush1.bf16.msra.mxu0 %v1909
        %1944 = vmatprep.subr.bf16.mxu0 0
        %1945 = vmatpush1.bf16.msra.mxu0 %v1910
        %1946 = vmatprep.subr.bf16.mxu0 0
        %1947 = vmatpush1.bf16.msra.mxu0 %v1911
        %1948 = vmatprep.subr.bf16.mxu0 0
        %1949 = vmatpush1.bf16.msra.mxu0 %v1912
        %1950 = vmatprep.subr.bf16.mxu0 0
        %1951 = vmatpush1.bf16.msra.mxu0 %v1913
        %1952 = vmatprep.subr.bf16.mxu0 0
        %1953 = vmatpush1.bf16.msra.mxu0 %v1914
        %1954 = vmatprep.subr.bf16.mxu0 0
        %1955 = vmatpush1.bf16.msra.mxu0 %v1915
        %1956 = vmatprep.subr.bf16.mxu0 0
        %1957 = vmatpush1.bf16.msra.mxu0 %v1916
        %1958 = vmatprep.subr.bf16.mxu0 0
        %1959 = vmatpush1.bf16.msra.mxu0 %v1917
        %1960 = vmatprep.subr.bf16.mxu0 0
        %1961 = vmatpush1.bf16.msra.mxu0 %v1918
        %1962 = vmatprep.subr.bf16.mxu0 0
        %1963 = vmatpush1.bf16.msra.mxu0 %v1919
        %1964 = vmatprep.subr.bf16.mxu0 0
        %1965 = vmatpush1.bf16.msra.mxu0 %v1920
        %1966 = vmatprep.subr.bf16.mxu0 0
        %1967 = vmatpush1.bf16.msra.mxu0 %v1921
        %1968 = vmatprep.subr.bf16.mxu0 0
        %1969 = vmatpush1.bf16.msra.mxu0 %v1922
        %1970 = vmatprep.subr.bf16.mxu0 0
        %1971 = vmatpush1.bf16.msra.mxu0 %v1923
        %1972 = vmatprep.mubr.bf16.mxu0 %v1774
        %1973 = vmatmul.mubr.bf16.gmra.mrb[0].mxu0 %v1773
        %v1974 = vpop.f32.mrb[0].mxu0
        %v1975 = vadd.f32 %v1842, %v1974
        %v1976 = vpop.f32.mrb[0].mxu0
        %v1977 = vpop.f32.mrb[0].mxu0
        %v1978 = vadd.f32 %v1842, %v1977
        %v1979 = vpop.f32.mrb[0].mxu0
        %1980 = vmatprep.mubr.bf16.mxu0 %v1776
        %1981 = vmatmul.mubr.bf16.gmra.mrb[0].mxu0 %v1775
        %v1982 = vpop.f32.mrb[0].mxu0
        %v1983 = vadd.f32 %v1842, %v1982
        %v1984 = vpop.f32.mrb[0].mxu0
        %v1985 = vpop.f32.mrb[0].mxu0
        %v1986 = vadd.f32 %v1842, %v1985
        %v1987 = vpop.f32.mrb[0].mxu0
        %1988 = vmatprep.mubr.bf16.mxu0 %v1778
        %1989 = vmatmul.mubr.bf16.gmra.mrb[0].mxu0 %v1777
        %v1990 = vpop.f32.mrb[0].mxu0
        %v1991 = vadd.f32 %v1842, %v1990
        %v1992 = vpop.f32.mrb[0].mxu0
        %v1993 = vpop.f32.mrb[0].mxu0
        %v1994 = vadd.f32 %v1842, %v1993
        %v1995 = vpop.f32.mrb[0].mxu0
        %1996 = vmatprep.mubr.bf16.mxu0 %v1780
        %1997 = vmatmul.mubr.bf16.gmra.mrb[0].mxu0 %v1779
        %v1998 = vpop.f32.mrb[0].mxu0
        %v1999 = vadd.f32 %v1842, %v1998
        %v2000 = vpop.f32.mrb[0].mxu0
        %v2001 = vpop.f32.mrb[0].mxu0
        %v2002 = vadd.f32 %v1842, %v2001
        %v2003 = vpop.f32.mrb[0].mxu0
        %2004 = vmatprep.mubr.bf16.mxu0 %v1782
        %2005 = vmatmul.mubr.bf16.gmra.mrb[0].mxu0 %v1781
        %v2006 = vpop.f32.mrb[0].mxu0
        %v2007 = vadd.f32 %v1842, %v2006
        %v2008 = vpop.f32.mrb[0].mxu0
        %v2009 = vpop.f32.mrb[0].mxu0
        %v2010 = vadd.f32 %v1842, %v2009
        %v2011 = vpop.f32.mrb[0].mxu0
        %2012 = vmatprep.mubr.bf16.mxu0 %v1784
        %2013 = vmatmul.mubr.bf16.gmra.mrb[0].mxu0 %v1783
        %v2014 = vpop.f32.mrb[0].mxu0
        %v2015 = vadd.f32 %v1842, %v2014
        %v2016 = vpop.f32.mrb[0].mxu0
        %v2017 = vpop.f32.mrb[0].mxu0
        %v2018 = vadd.f32 %v1842, %v2017
        %v2019 = vpop.f32.mrb[0].mxu0
        %2020 = vmatprep.mubr.bf16.mxu0 %v1786
        %2021 = vmatmul.mubr.bf16.gmra.mrb[0].mxu0 %v1785
        %v2022 = vpop.f32.mrb[0].mxu0
        %v2023 = vadd.f32 %v1842, %v2022
        %v2024 = vpop.f32.mrb[0].mxu0
        %v2025 = vpop.f32.mrb[0].mxu0
        %v2026 = vadd.f32 %v1842, %v2025
        %v2027 = vpop.f32.mrb[0].mxu0
        %2028 = vmatprep.mubr.bf16.mxu0 %v1788
        %2029 = vmatmul.mubr.bf16.gmra.mrb[0].mxu0 %v1787
        %v2030 = vpop.f32.mrb[0].mxu0
        %v2031 = vadd.f32 %v1842, %v2030
        %v2032 = vpop.f32.mrb[0].mxu0
        %v2033 = vpop.f32.mrb[0].mxu0
        %v2034 = vadd.f32 %v1842, %v2033
        %v2035 = vpop.f32.mrb[0].mxu0
        %2036 = vmatprep.mubr.bf16.mxu0 %v1790
        %2037 = vmatmul.mubr.bf16.gmra.mrb[0].mxu0 %v1789
        %v2038 = vpop.f32.mrb[0].mxu0
        %v2039 = vadd.f32 %v1842, %v2038
        %v2040 = vpop.f32.mrb[0].mxu0
        %v2041 = vpop.f32.mrb[0].mxu0
        %v2042 = vadd.f32 %v1842, %v2041
        %v2043 = vpop.f32.mrb[0].mxu0
        %2044 = vmatprep.mubr.bf16.mxu0 %v1792
        %2045 = vmatmul.mubr.bf16.gmra.mrb[0].mxu0 %v1791
        %v2046 = vpop.f32.mrb[0].mxu0
        %v2047 = vadd.f32 %v1842, %v2046
        %v2048 = vpop.f32.mrb[0].mxu0
        %v2049 = vpop.f32.mrb[0].mxu0
        %v2050 = vadd.f32 %v1842, %v2049
        %v2051 = vpop.f32.mrb[0].mxu0
        %2052 = vmatprep.mubr.bf16.mxu0 %v1794
        %2053 = vmatmul.mubr.bf16.gmra.mrb[0].mxu0 %v1793
        %v2054 = vpop.f32.mrb[0].mxu0
        %v2055 = vadd.f32 %v1842, %v2054
        %v2056 = vpop.f32.mrb[0].mxu0
        %v2057 = vpop.f32.mrb[0].mxu0
        %v2058 = vadd.f32 %v1842, %v2057
        %v2059 = vpop.f32.mrb[0].mxu0
        %2060 = vmatprep.mubr.bf16.mxu0 %v1796
        %2061 = vmatmul.mubr.bf16.gmra.mrb[0].mxu0 %v1795
        %v2062 = vpop.f32.mrb[0].mxu0
        %v2063 = vadd.f32 %v1842, %v2062
        %v2064 = vpop.f32.mrb[0].mxu0
        %v2065 = vpop.f32.mrb[0].mxu0
        %v2066 = vadd.f32 %v1842, %v2065
        %v2067 = vpop.f32.mrb[0].mxu0
        %2068 = vmatprep.mubr.bf16.mxu0 %v1798
        %2069 = vmatmul.mubr.bf16.gmra.mrb[0].mxu0 %v1797
        %v2070 = vpop.f32.mrb[0].mxu0
        %v2071 = vadd.f32 %v1842, %v2070
        %v2072 = vpop.f32.mrb[0].mxu0
        %v2073 = vpop.f32.mrb[0].mxu0
        %v2074 = vadd.f32 %v1842, %v2073
        %v2075 = vpop.f32.mrb[0].mxu0
        %2076 = vmatprep.mubr.bf16.mxu0 %v1800
        %2077 = vmatmul.mubr.bf16.gmra.mrb[0].mxu0 %v1799
        %v2078 = vpop.f32.mrb[0].mxu0
        %v2079 = vadd.f32 %v1842, %v2078
        %v2080 = vpop.f32.mrb[0].mxu0
        %v2081 = vpop.f32.mrb[0].mxu0
        %v2082 = vadd.f32 %v1842, %v2081
        %v2083 = vpop.f32.mrb[0].mxu0
        %2084 = vmatprep.mubr.bf16.mxu0 %v1802
        %2085 = vmatmul.mubr.bf16.gmra.mrb[0].mxu0 %v1801
        %v2086 = vpop.f32.mrb[0].mxu0
        %v2087 = vadd.f32 %v1842, %v2086
        %v2088 = vpop.f32.mrb[0].mxu0
        %v2089 = vpop.f32.mrb[0].mxu0
        %v2090 = vadd.f32 %v1842, %v2089
        %v2091 = vpop.f32.mrb[0].mxu0
        %2092 = vmatprep.mubr.bf16.mxu0 %v1804
        %2093 = vmatmul.mubr.bf16.gmra.mrb[0].mxu0 %v1803
        %v2094 = vpop.f32.mrb[0].mxu0
        %v2095 = vadd.f32 %v1842, %v2094
        %v2096 = vpop.f32.mrb[0].mxu0
        %v2097 = vpop.f32.mrb[0].mxu0
        %v2098 = vadd.f32 %v1842, %v2097
        %v2099 = vpop.f32.mrb[0].mxu0
        %2100 = vdwg.mxu0
        %v2101 = vld [vmem:[%s7] sm:$0x1]
        %v2102 = vld [vmem:[%s8] sm:$0x1]
        %2103 = vadd.xlane.f32.xlu0 %v1975
        %v2104 = vpop.xlane.xlu0 %2103
        %2105 = vadd.xlane.f32.xlu0 %v1978
        %v2106 = vpop.xlane.xlu0 %2105
        %2107 = vadd.xlane.f32.xlu0 %v1983
        %v2108 = vpop.xlane.xlu0 %2107
        %2109 = vadd.xlane.f32.xlu0 %v1986
        %v2110 = vpop.xlane.xlu0 %2109
        %2111 = vadd.xlane.f32.xlu0 %v1991
        %v2112 = vpop.xlane.xlu0 %2111
        %2113 = vadd.xlane.f32.xlu0 %v1994
        %v2114 = vpop.xlane.xlu0 %2113
        %2115 = vadd.xlane.f32.xlu0 %v1999
        %v2116 = vpop.xlane.xlu0 %2115
        %2117 = vadd.xlane.f32.xlu0 %v2002
        %v2118 = vpop.xlane.xlu0 %2117
        %2119 = vadd.xlane.f32.xlu0 %v2007
        %v2120 = vpop.xlane.xlu0 %2119
        %2121 = vadd.xlane.f32.xlu0 %v2010
        %v2122 = vpop.xlane.xlu0 %2121
        %2123 = vadd.xlane.f32.xlu0 %v2015
        %v2124 = vpop.xlane.xlu0 %2123
        %2125 = vadd.xlane.f32.xlu0 %v2018
        %v2126 = vpop.xlane.xlu0 %2125
        %2127 = vadd.xlane.f32.xlu0 %v2023
        %v2128 = vpop.xlane.xlu0 %2127
        %2129 = vadd.xlane.f32.xlu0 %v2026
        %v2130 = vpop.xlane.xlu0 %2129
        %2131 = vadd.xlane.f32.xlu0 %v2031
        %v2132 = vpop.xlane.xlu0 %2131
        %2133 = vadd.xlane.f32.xlu0 %v2034
        %v2134 = vpop.xlane.xlu0 %2133
        %2135 = vadd.xlane.f32.xlu0 %v2039
        %v2136 = vpop.xlane.xlu0 %2135
        %2137 = vadd.xlane.f32.xlu0 %v2042
        %v2138 = vpop.xlane.xlu0 %2137
        %2139 = vadd.xlane.f32.xlu0 %v2047
        %v2140 = vpop.xlane.xlu0 %2139
        %2141 = vadd.xlane.f32.xlu0 %v2050
        %v2142 = vpop.xlane.xlu0 %2141
        %2143 = vadd.xlane.f32.xlu0 %v2055
        %v2144 = vpop.xlane.xlu0 %2143
        %2145 = vadd.xlane.f32.xlu0 %v2058
        %v2146 = vpop.xlane.xlu0 %2145
        %2147 = vadd.xlane.f32.xlu0 %v2063
        %v2148 = vpop.xlane.xlu0 %2147
        %2149 = vadd.xlane.f32.xlu0 %v2066
        %v2150 = vpop.xlane.xlu0 %2149
        %2151 = vadd.xlane.f32.xlu0 %v2071
        %v2152 = vpop.xlane.xlu0 %2151
        %2153 = vadd.xlane.f32.xlu0 %v2074
        %v2154 = vpop.xlane.xlu0 %2153
        %2155 = vadd.xlane.f32.xlu0 %v2079
        %v2156 = vpop.xlane.xlu0 %2155
        %2157 = vadd.xlane.f32.xlu0 %v2082
        %v2158 = vpop.xlane.xlu0 %2157
        %2159 = vadd.xlane.f32.xlu0 %v2087
        %v2160 = vpop.xlane.xlu0 %2159
        %2161 = vadd.xlane.f32.xlu0 %v2090
        %v2162 = vpop.xlane.xlu0 %2161
        %2163 = vadd.xlane.f32.xlu0 %v2095
        %v2164 = vpop.xlane.xlu0 %2163
        %2165 = vadd.xlane.f32.xlu0 %v2098
        %v2166 = vpop.xlane.xlu0 %2165
        %v2167 = vrcp.pop 128.0
        %v2168 = vmul.f32 %v2104, %v2167
        %v2169 = vmul.f32 %v2106, %v2167
        %v2170 = vmul.f32 %v2108, %v2167
        %v2171 = vmul.f32 %v2110, %v2167
        %v2172 = vmul.f32 %v2112, %v2167
        %v2173 = vmul.f32 %v2114, %v2167
        %v2174 = vmul.f32 %v2116, %v2167
        %v2175 = vmul.f32 %v2118, %v2167
        %v2176 = vmul.f32 %v2120, %v2167
        %v2177 = vmul.f32 %v2122, %v2167
        %v2178 = vmul.f32 %v2124, %v2167
        %v2179 = vmul.f32 %v2126, %v2167
        %v2180 = vmul.f32 %v2128, %v2167
        %v2181 = vmul.f32 %v2130, %v2167
        %v2182 = vmul.f32 %v2132, %v2167
        %v2183 = vmul.f32 %v2134, %v2167
        %v2184 = vmul.f32 %v2136, %v2167
        %v2185 = vmul.f32 %v2138, %v2167
        %v2186 = vmul.f32 %v2140, %v2167
        %v2187 = vmul.f32 %v2142, %v2167
        %v2188 = vmul.f32 %v2144, %v2167
        %v2189 = vmul.f32 %v2146, %v2167
        %v2190 = vmul.f32 %v2148, %v2167
        %v2191 = vmul.f32 %v2150, %v2167
        %v2192 = vmul.f32 %v2152, %v2167
        %v2193 = vmul.f32 %v2154, %v2167
        %v2194 = vmul.f32 %v2156, %v2167
        %v2195 = vmul.f32 %v2158, %v2167
        %v2196 = vmul.f32 %v2160, %v2167
        %v2197 = vmul.f32 %v2162, %v2167
        %v2198 = vmul.f32 %v2164, %v2167
        %v2199 = vmul.f32 %v2166, %v2167
        %v2200 = vsub.f32 %v1975, %v2168
        %v2201 = vsub.f32 %v1978, %v2169
        %v2202 = vsub.f32 %v1983, %v2170
        %v2203 = vsub.f32 %v1986, %v2171
        %v2204 = vsub.f32 %v1991, %v2172
        %v2205 = vsub.f32 %v1994, %v2173
        %v2206 = vsub.f32 %v1999, %v2174
        %v2207 = vsub.f32 %v2002, %v2175
        %v2208 = vsub.f32 %v2007, %v2176
        %v2209 = vsub.f32 %v2010, %v2177
        %v2210 = vsub.f32 %v2015, %v2178
        %v2211 = vsub.f32 %v2018, %v2179
        %v2212 = vsub.f32 %v2023, %v2180
        %v2213 = vsub.f32 %v2026, %v2181
        %v2214 = vsub.f32 %v2031, %v2182
        %v2215 = vsub.f32 %v2034, %v2183
        %v2216 = vsub.f32 %v2039, %v2184
        %v2217 = vsub.f32 %v2042, %v2185
        %v2218 = vsub.f32 %v2047, %v2186
        %v2219 = vsub.f32 %v2050, %v2187
        %v2220 = vsub.f32 %v2055, %v2188
        %v2221 = vsub.f32 %v2058, %v2189
        %v2222 = vsub.f32 %v2063, %v2190
        %v2223 = vsub.f32 %v2066, %v2191
        %v2224 = vsub.f32 %v2071, %v2192
        %v2225 = vsub.f32 %v2074, %v2193
        %v2226 = vsub.f32 %v2079, %v2194
        %v2227 = vsub.f32 %v2082, %v2195
        %v2228 = vsub.f32 %v2087, %v2196
        %v2229 = vsub.f32 %v2090, %v2197
        %v2230 = vsub.f32 %v2095, %v2198
        %v2231 = vsub.f32 %v2098, %v2199
        %v2232 = vmul.f32 %v2200, %v2200
        %v2233 = vmul.f32 %v2201, %v2201
        %v2234 = vmul.f32 %v2202, %v2202
        %v2235 = vmul.f32 %v2203, %v2203
        %v2236 = vmul.f32 %v2204, %v2204
        %v2237 = vmul.f32 %v2205, %v2205
        %v2238 = vmul.f32 %v2206, %v2206
        %v2239 = vmul.f32 %v2207, %v2207
        %v2240 = vmul.f32 %v2208, %v2208
        %v2241 = vmul.f32 %v2209, %v2209
        %v2242 = vmul.f32 %v2210, %v2210
        %v2243 = vmul.f32 %v2211, %v2211
        %v2244 = vmul.f32 %v2212, %v2212
        %v2245 = vmul.f32 %v2213, %v2213
        %v2246 = vmul.f32 %v2214, %v2214
        %v2247 = vmul.f32 %v2215, %v2215
        %v2248 = vmul.f32 %v2216, %v2216
        %v2249 = vmul.f32 %v2217, %v2217
        %v2250 = vmul.f32 %v2218, %v2218
        %v2251 = vmul.f32 %v2219, %v2219
        %v2252 = vmul.f32 %v2220, %v2220
        %v2253 = vmul.f32 %v2221, %v2221
        %v2254 = vmul.f32 %v2222, %v2222
        %v2255 = vmul.f32 %v2223, %v2223
        %v2256 = vmul.f32 %v2224, %v2224
        %v2257 = vmul.f32 %v2225, %v2225
        %v2258 = vmul.f32 %v2226, %v2226
        %v2259 = vmul.f32 %v2227, %v2227
        %v2260 = vmul.f32 %v2228, %v2228
        %v2261 = vmul.f32 %v2229, %v2229
        %v2262 = vmul.f32 %v2230, %v2230
        %v2263 = vmul.f32 %v2231, %v2231
        %2264 = vadd.xlane.f32.xlu0 %v2232
        %v2265 = vpop.xlane.xlu0 %2264
        %2266 = vadd.xlane.f32.xlu0 %v2233
        %v2267 = vpop.xlane.xlu0 %2266
        %2268 = vadd.xlane.f32.xlu0 %v2234
        %v2269 = vpop.xlane.xlu0 %2268
        %2270 = vadd.xlane.f32.xlu0 %v2235
        %v2271 = vpop.xlane.xlu0 %2270
        %2272 = vadd.xlane.f32.xlu0 %v2236
        %v2273 = vpop.xlane.xlu0 %2272
        %2274 = vadd.xlane.f32.xlu0 %v2237
        %v2275 = vpop.xlane.xlu0 %2274
        %2276 = vadd.xlane.f32.xlu0 %v2238
        %v2277 = vpop.xlane.xlu0 %2276
        %2278 = vadd.xlane.f32.xlu0 %v2239
        %v2279 = vpop.xlane.xlu0 %2278
        %2280 = vadd.xlane.f32.xlu0 %v2240
        %v2281 = vpop.xlane.xlu0 %2280
        %2282 = vadd.xlane.f32.xlu0 %v2241
        %v2283 = vpop.xlane.xlu0 %2282
        %2284 = vadd.xlane.f32.xlu0 %v2242
        %v2285 = vpop.xlane.xlu0 %2284
        %2286 = vadd.xlane.f32.xlu0 %v2243
        %v2287 = vpop.xlane.xlu0 %2286
        %2288 = vadd.xlane.f32.xlu0 %v2244
        %v2289 = vpop.xlane.xlu0 %2288
        %2290 = vadd.xlane.f32.xlu0 %v2245
        %v2291 = vpop.xlane.xlu0 %2290
        %2292 = vadd.xlane.f32.xlu0 %v2246
        %v2293 = vpop.xlane.xlu0 %2292
        %2294 = vadd.xlane.f32.xlu0 %v2247
        %v2295 = vpop.xlane.xlu0 %2294
        %2296 = vadd.xlane.f32.xlu0 %v2248
        %v2297 = vpop.xlane.xlu0 %2296
        %2298 = vadd.xlane.f32.xlu0 %v2249
        %v2299 = vpop.xlane.xlu0 %2298
        %2300 = vadd.xlane.f32.xlu0 %v2250
        %v2301 = vpop.xlane.xlu0 %2300
        %2302 = vadd.xlane.f32.xlu0 %v2251
        %v2303 = vpop.xlane.xlu0 %2302
        %2304 = vadd.xlane.f32.xlu0 %v2252
        %v2305 = vpop.xlane.xlu0 %2304
        %2306 = vadd.xlane.f32.xlu0 %v2253
        %v2307 = vpop.xlane.xlu0 %2306
        %2308 = vadd.xlane.f32.xlu0 %v2254
        %v2309 = vpop.xlane.xlu0 %2308
        %2310 = vadd.xlane.f32.xlu0 %v2255
        %v2311 = vpop.xlane.xlu0 %2310
        %2312 = vadd.xlane.f32.xlu0 %v2256
        %v2313 = vpop.xlane.xlu0 %2312
        %2314 = vadd.xlane.f32.xlu0 %v2257
        %v2315 = vpop.xlane.xlu0 %2314
        %2316 = vadd.xlane.f32.xlu0 %v2258
        %v2317 = vpop.xlane.xlu0 %2316
        %2318 = vadd.xlane.f32.xlu0 %v2259
        %v2319 = vpop.xlane.xlu0 %2318
        %2320 = vadd.xlane.f32.xlu0 %v2260
        %v2321 = vpop.xlane.xlu0 %2320
        %2322 = vadd.xlane.f32.xlu0 %v2261
        %v2323 = vpop.xlane.xlu0 %2322
        %2324 = vadd.xlane.f32.xlu0 %v2262
        %v2325 = vpop.xlane.xlu0 %2324
        %2326 = vadd.xlane.f32.xlu0 %v2263
        %v2327 = vpop.xlane.xlu0 %2326
        %v2328 = vmul.f32 %v2265, %v2167
        %v2329 = vmul.f32 %v2267, %v2167
        %v2330 = vmul.f32 %v2269, %v2167
        %v2331 = vmul.f32 %v2271, %v2167
        %v2332 = vmul.f32 %v2273, %v2167
        %v2333 = vmul.f32 %v2275, %v2167
        %v2334 = vmul.f32 %v2277, %v2167
        %v2335 = vmul.f32 %v2279, %v2167
        %v2336 = vmul.f32 %v2281, %v2167
        %v2337 = vmul.f32 %v2283, %v2167
        %v2338 = vmul.f32 %v2285, %v2167
        %v2339 = vmul.f32 %v2287, %v2167
        %v2340 = vmul.f32 %v2289, %v2167
        %v2341 = vmul.f32 %v2291, %v2167
        %v2342 = vmul.f32 %v2293, %v2167
        %v2343 = vmul.f32 %v2295, %v2167
        %v2344 = vmul.f32 %v2297, %v2167
        %v2345 = vmul.f32 %v2299, %v2167
        %v2346 = vmul.f32 %v2301, %v2167
        %v2347 = vmul.f32 %v2303, %v2167
        %v2348 = vmul.f32 %v2305, %v2167
        %v2349 = vmul.f32 %v2307, %v2167
        %v2350 = vmul.f32 %v2309, %v2167
        %v2351 = vmul.f32 %v2311, %v2167
        %v2352 = vmul.f32 %v2313, %v2167
        %v2353 = vmul.f32 %v2315, %v2167
        %v2354 = vmul.f32 %v2317, %v2167
        %v2355 = vmul.f32 %v2319, %v2167
        %v2356 = vmul.f32 %v2321, %v2167
        %v2357 = vmul.f32 %v2323, %v2167
        %v2358 = vmul.f32 %v2325, %v2167
        %v2359 = vmul.f32 %v2327, %v2167
        %v2360 = vadd.f32 %v2328, 1e-05
        %v2361 = vadd.f32 %v2329, 1e-05
        %v2362 = vadd.f32 %v2330, 1e-05
        %v2363 = vadd.f32 %v2331, 1e-05
        %v2364 = vadd.f32 %v2332, 1e-05
        %v2365 = vadd.f32 %v2333, 1e-05
        %v2366 = vadd.f32 %v2334, 1e-05
        %v2367 = vadd.f32 %v2335, 1e-05
        %v2368 = vadd.f32 %v2336, 1e-05
        %v2369 = vadd.f32 %v2337, 1e-05
        %v2370 = vadd.f32 %v2338, 1e-05
        %v2371 = vadd.f32 %v2339, 1e-05
        %v2372 = vadd.f32 %v2340, 1e-05
        %v2373 = vadd.f32 %v2341, 1e-05
        %v2374 = vadd.f32 %v2342, 1e-05
        %v2375 = vadd.f32 %v2343, 1e-05
        %v2376 = vadd.f32 %v2344, 1e-05
        %v2377 = vadd.f32 %v2345, 1e-05
        %v2378 = vadd.f32 %v2346, 1e-05
        %v2379 = vadd.f32 %v2347, 1e-05
        %v2380 = vadd.f32 %v2348, 1e-05
        %v2381 = vadd.f32 %v2349, 1e-05
        %v2382 = vadd.f32 %v2350, 1e-05
        %v2383 = vadd.f32 %v2351, 1e-05
        %v2384 = vadd.f32 %v2352, 1e-05
        %v2385 = vadd.f32 %v2353, 1e-05
        %v2386 = vadd.f32 %v2354, 1e-05
        %v2387 = vadd.f32 %v2355, 1e-05
        %v2388 = vadd.f32 %v2356, 1e-05
        %v2389 = vadd.f32 %v2357, 1e-05
        %v2390 = vadd.f32 %v2358, 1e-05
        %v2391 = vadd.f32 %v2359, 1e-05
        %v2392 = vrsqrt.pop %v2360
        %v2393 = vrsqrt.pop %v2361
        %v2394 = vrsqrt.pop %v2362
        %v2395 = vrsqrt.pop %v2363
        %v2396 = vrsqrt.pop %v2364
        %v2397 = vrsqrt.pop %v2365
        %v2398 = vrsqrt.pop %v2366
        %v2399 = vrsqrt.pop %v2367
        %v2400 = vrsqrt.pop %v2368
        %v2401 = vrsqrt.pop %v2369
        %v2402 = vrsqrt.pop %v2370
        %v2403 = vrsqrt.pop %v2371
        %v2404 = vrsqrt.pop %v2372
        %v2405 = vrsqrt.pop %v2373
        %v2406 = vrsqrt.pop %v2374
        %v2407 = vrsqrt.pop %v2375
        %v2408 = vrsqrt.pop %v2376
        %v2409 = vrsqrt.pop %v2377
        %v2410 = vrsqrt.pop %v2378
        %v2411 = vrsqrt.pop %v2379
        %v2412 = vrsqrt.pop %v2380
        %v2413 = vrsqrt.pop %v2381
        %v2414 = vrsqrt.pop %v2382
        %v2415 = vrsqrt.pop %v2383
        %v2416 = vrsqrt.pop %v2384
        %v2417 = vrsqrt.pop %v2385
        %v2418 = vrsqrt.pop %v2386
        %v2419 = vrsqrt.pop %v2387
        %v2420 = vrsqrt.pop %v2388
        %v2421 = vrsqrt.pop %v2389
        %v2422 = vrsqrt.pop %v2390
        %v2423 = vrsqrt.pop %v2391
        %v2424 = vmul.f32 %v2200, %v2392
        %v2425 = vmul.f32 %v2201, %v2393
        %v2426 = vmul.f32 %v2202, %v2394
        %v2427 = vmul.f32 %v2203, %v2395
        %v2428 = vmul.f32 %v2204, %v2396
        %v2429 = vmul.f32 %v2205, %v2397
        %v2430 = vmul.f32 %v2206, %v2398
        %v2431 = vmul.f32 %v2207, %v2399
        %v2432 = vmul.f32 %v2208, %v2400
        %v2433 = vmul.f32 %v2209, %v2401
        %v2434 = vmul.f32 %v2210, %v2402
        %v2435 = vmul.f32 %v2211, %v2403
        %v2436 = vmul.f32 %v2212, %v2404
        %v2437 = vmul.f32 %v2213, %v2405
        %v2438 = vmul.f32 %v2214, %v2406
        %v2439 = vmul.f32 %v2215, %v2407
        %v2440 = vmul.f32 %v2216, %v2408
        %v2441 = vmul.f32 %v2217, %v2409
        %v2442 = vmul.f32 %v2218, %v2410
        %v2443 = vmul.f32 %v2219, %v2411
        %v2444 = vmul.f32 %v2220, %v2412
        %v2445 = vmul.f32 %v2221, %v2413
        %v2446 = vmul.f32 %v2222, %v2414
        %v2447 = vmul.f32 %v2223, %v2415
        %v2448 = vmul.f32 %v2224, %v2416
        %v2449 = vmul.f32 %v2225, %v2417
        %v2450 = vmul.f32 %v2226, %v2418
        %v2451 = vmul.f32 %v2227, %v2419
        %v2452 = vmul.f32 %v2228, %v2420
        %v2453 = vmul.f32 %v2229, %v2421
        %v2454 = vmul.f32 %v2230, %v2422
        %v2455 = vmul.f32 %v2231, %v2423
        %v2457 = vlaneseq
        %v2458 = vshrl.u32 %v2457, 7
        %v2459 = vsub.s32 0, %v2458
        %v2460 = vrot.slane %v2101, %v2459
        %v2462 = vmul.f32 %v2424, %v2460
        %v2463 = vmul.f32 %v2425, %v2460
        %v2464 = vmul.f32 %v2426, %v2460
        %v2465 = vmul.f32 %v2427, %v2460
        %v2466 = vmul.f32 %v2428, %v2460
        %v2467 = vmul.f32 %v2429, %v2460
        %v2468 = vmul.f32 %v2430, %v2460
        %v2469 = vmul.f32 %v2431, %v2460
        %v2470 = vmul.f32 %v2432, %v2460
        %v2471 = vmul.f32 %v2433, %v2460
        %v2472 = vmul.f32 %v2434, %v2460
        %v2473 = vmul.f32 %v2435, %v2460
        %v2474 = vmul.f32 %v2436, %v2460
        %v2475 = vmul.f32 %v2437, %v2460
        %v2476 = vmul.f32 %v2438, %v2460
        %v2477 = vmul.f32 %v2439, %v2460
        %v2478 = vmul.f32 %v2440, %v2460
        %v2479 = vmul.f32 %v2441, %v2460
        %v2480 = vmul.f32 %v2442, %v2460
        %v2481 = vmul.f32 %v2443, %v2460
        %v2482 = vmul.f32 %v2444, %v2460
        %v2483 = vmul.f32 %v2445, %v2460
        %v2484 = vmul.f32 %v2446, %v2460
        %v2485 = vmul.f32 %v2447, %v2460
        %v2486 = vmul.f32 %v2448, %v2460
        %v2487 = vmul.f32 %v2449, %v2460
        %v2488 = vmul.f32 %v2450, %v2460
        %v2489 = vmul.f32 %v2451, %v2460
        %v2490 = vmul.f32 %v2452, %v2460
        %v2491 = vmul.f32 %v2453, %v2460
        %v2492 = vmul.f32 %v2454, %v2460
        %v2493 = vmul.f32 %v2455, %v2460
        %v2495 = vlaneseq
        %v2496 = vshrl.u32 %v2495, 7
        %v2497 = vsub.s32 0, %v2496
        %v2498 = vrot.slane %v2102, %v2497
        %v2500 = vadd.f32 %v2462, %v2498
        %v2501 = vadd.f32 %v2463, %v2498
        %v2502 = vadd.f32 %v2464, %v2498
        %v2503 = vadd.f32 %v2465, %v2498
        %v2504 = vadd.f32 %v2466, %v2498
        %v2505 = vadd.f32 %v2467, %v2498
        %v2506 = vadd.f32 %v2468, %v2498
        %v2507 = vadd.f32 %v2469, %v2498
        %v2508 = vadd.f32 %v2470, %v2498
        %v2509 = vadd.f32 %v2471, %v2498
        %v2510 = vadd.f32 %v2472, %v2498
        %v2511 = vadd.f32 %v2473, %v2498
        %v2512 = vadd.f32 %v2474, %v2498
        %v2513 = vadd.f32 %v2475, %v2498
        %v2514 = vadd.f32 %v2476, %v2498
        %v2515 = vadd.f32 %v2477, %v2498
        %v2516 = vadd.f32 %v2478, %v2498
        %v2517 = vadd.f32 %v2479, %v2498
        %v2518 = vadd.f32 %v2480, %v2498
        %v2519 = vadd.f32 %v2481, %v2498
        %v2520 = vadd.f32 %v2482, %v2498
        %v2521 = vadd.f32 %v2483, %v2498
        %v2522 = vadd.f32 %v2484, %v2498
        %v2523 = vadd.f32 %v2485, %v2498
        %v2524 = vadd.f32 %v2486, %v2498
        %v2525 = vadd.f32 %v2487, %v2498
        %v2526 = vadd.f32 %v2488, %v2498
        %v2527 = vadd.f32 %v2489, %v2498
        %v2528 = vadd.f32 %v2490, %v2498
        %v2529 = vadd.f32 %v2491, %v2498
        %v2530 = vadd.f32 %v2492, %v2498
        %v2531 = vadd.f32 %v2493, %v2498
        %v2532 = vmul.f32 %v2500, 0.5
        %v2533 = vmul.f32 %v2501, 0.5
        %v2534 = vmul.f32 %v2502, 0.5
        %v2535 = vmul.f32 %v2503, 0.5
        %v2536 = vmul.f32 %v2504, 0.5
        %v2537 = vmul.f32 %v2505, 0.5
        %v2538 = vmul.f32 %v2506, 0.5
        %v2539 = vmul.f32 %v2507, 0.5
        %v2540 = vmul.f32 %v2508, 0.5
        %v2541 = vmul.f32 %v2509, 0.5
        %v2542 = vmul.f32 %v2510, 0.5
        %v2543 = vmul.f32 %v2511, 0.5
        %v2544 = vmul.f32 %v2512, 0.5
        %v2545 = vmul.f32 %v2513, 0.5
        %v2546 = vmul.f32 %v2514, 0.5
        %v2547 = vmul.f32 %v2515, 0.5
        %v2548 = vmul.f32 %v2516, 0.5
        %v2549 = vmul.f32 %v2517, 0.5
        %v2550 = vmul.f32 %v2518, 0.5
        %v2551 = vmul.f32 %v2519, 0.5
        %v2552 = vmul.f32 %v2520, 0.5
        %v2553 = vmul.f32 %v2521, 0.5
        %v2554 = vmul.f32 %v2522, 0.5
        %v2555 = vmul.f32 %v2523, 0.5
        %v2556 = vmul.f32 %v2524, 0.5
        %v2557 = vmul.f32 %v2525, 0.5
        %v2558 = vmul.f32 %v2526, 0.5
        %v2559 = vmul.f32 %v2527, 0.5
        %v2560 = vmul.f32 %v2528, 0.5
        %v2561 = vmul.f32 %v2529, 0.5
        %v2562 = vmul.f32 %v2530, 0.5
        %v2563 = vmul.f32 %v2531, 0.5
        %v2564 = vmul.f32 %v2500, 0.70710677
        %v2565 = vmul.f32 %v2501, 0.70710677
        %v2566 = vmul.f32 %v2502, 0.70710677
        %v2567 = vmul.f32 %v2503, 0.70710677
        %v2568 = vmul.f32 %v2504, 0.70710677
        %v2569 = vmul.f32 %v2505, 0.70710677
        %v2570 = vmul.f32 %v2506, 0.70710677
        %v2571 = vmul.f32 %v2507, 0.70710677
        %v2572 = vmul.f32 %v2508, 0.70710677
        %v2573 = vmul.f32 %v2509, 0.70710677
        %v2574 = vmul.f32 %v2510, 0.70710677
        %v2575 = vmul.f32 %v2511, 0.70710677
        %v2576 = vmul.f32 %v2512, 0.70710677
        %v2577 = vmul.f32 %v2513, 0.70710677
        %v2578 = vmul.f32 %v2514, 0.70710677
        %v2579 = vmul.f32 %v2515, 0.70710677
        %v2580 = vmul.f32 %v2516, 0.70710677
        %v2581 = vmul.f32 %v2517, 0.70710677
        %v2582 = vmul.f32 %v2518, 0.70710677
        %v2583 = vmul.f32 %v2519, 0.70710677
        %v2584 = vmul.f32 %v2520, 0.70710677
        %v2585 = vmul.f32 %v2521, 0.70710677
        %v2586 = vmul.f32 %v2522, 0.70710677
        %v2587 = vmul.f32 %v2523, 0.70710677
        %v2588 = vmul.f32 %v2524, 0.70710677
        %v2589 = vmul.f32 %v2525, 0.70710677
        %v2590 = vmul.f32 %v2526, 0.70710677
        %v2591 = vmul.f32 %v2527, 0.70710677
        %v2592 = vmul.f32 %v2528, 0.70710677
        %v2593 = vmul.f32 %v2529, 0.70710677
        %v2594 = vmul.f32 %v2530, 0.70710677
        %v2595 = vmul.f32 %v2531, 0.70710677
        %v2596 = verf.f32.pop %v2564
        %v2597 = verf.f32.pop %v2565
        %v2598 = verf.f32.pop %v2566
        %v2599 = verf.f32.pop %v2567
        %v2600 = verf.f32.pop %v2568
        %v2601 = verf.f32.pop %v2569
        %v2602 = verf.f32.pop %v2570
        %v2603 = verf.f32.pop %v2571
        %v2604 = verf.f32.pop %v2572
        %v2605 = verf.f32.pop %v2573
        %v2606 = verf.f32.pop %v2574
        %v2607 = verf.f32.pop %v2575
        %v2608 = verf.f32.pop %v2576
        %v2609 = verf.f32.pop %v2577
        %v2610 = verf.f32.pop %v2578
        %v2611 = verf.f32.pop %v2579
        %v2612 = verf.f32.pop %v2580
        %v2613 = verf.f32.pop %v2581
        %v2614 = verf.f32.pop %v2582
        %v2615 = verf.f32.pop %v2583
        %v2616 = verf.f32.pop %v2584
        %v2617 = verf.f32.pop %v2585
        %v2618 = verf.f32.pop %v2586
        %v2619 = verf.f32.pop %v2587
        %v2620 = verf.f32.pop %v2588
        %v2621 = verf.f32.pop %v2589
        %v2622 = verf.f32.pop %v2590
        %v2623 = verf.f32.pop %v2591
        %v2624 = verf.f32.pop %v2592
        %v2625 = verf.f32.pop %v2593
        %v2626 = verf.f32.pop %v2594
        %v2627 = verf.f32.pop %v2595
        %v2628 = vadd.f32 %v2596, 1.0
        %v2629 = vadd.f32 %v2597, 1.0
        %v2630 = vadd.f32 %v2598, 1.0
        %v2631 = vadd.f32 %v2599, 1.0
        %v2632 = vadd.f32 %v2600, 1.0
        %v2633 = vadd.f32 %v2601, 1.0
        %v2634 = vadd.f32 %v2602, 1.0
        %v2635 = vadd.f32 %v2603, 1.0
        %v2636 = vadd.f32 %v2604, 1.0
        %v2637 = vadd.f32 %v2605, 1.0
        %v2638 = vadd.f32 %v2606, 1.0
        %v2639 = vadd.f32 %v2607, 1.0
        %v2640 = vadd.f32 %v2608, 1.0
        %v2641 = vadd.f32 %v2609, 1.0
        %v2642 = vadd.f32 %v2610, 1.0
        %v2643 = vadd.f32 %v2611, 1.0
        %v2644 = vadd.f32 %v2612, 1.0
        %v2645 = vadd.f32 %v2613, 1.0
        %v2646 = vadd.f32 %v2614, 1.0
        %v2647 = vadd.f32 %v2615, 1.0
        %v2648 = vadd.f32 %v2616, 1.0
        %v2649 = vadd.f32 %v2617, 1.0
        %v2650 = vadd.f32 %v2618, 1.0
        %v2651 = vadd.f32 %v2619, 1.0
        %v2652 = vadd.f32 %v2620, 1.0
        %v2653 = vadd.f32 %v2621, 1.0
        %v2654 = vadd.f32 %v2622, 1.0
        %v2655 = vadd.f32 %v2623, 1.0
        %v2656 = vadd.f32 %v2624, 1.0
        %v2657 = vadd.f32 %v2625, 1.0
        %v2658 = vadd.f32 %v2626, 1.0
        %v2659 = vadd.f32 %v2627, 1.0
        %v2660 = vmul.f32 %v2532, %v2628
        %v2661 = vmul.f32 %v2533, %v2629
        %v2662 = vmul.f32 %v2534, %v2630
        %v2663 = vmul.f32 %v2535, %v2631
        %v2664 = vmul.f32 %v2536, %v2632
        %v2665 = vmul.f32 %v2537, %v2633
        %v2666 = vmul.f32 %v2538, %v2634
        %v2667 = vmul.f32 %v2539, %v2635
        %v2668 = vmul.f32 %v2540, %v2636
        %v2669 = vmul.f32 %v2541, %v2637
        %v2670 = vmul.f32 %v2542, %v2638
        %v2671 = vmul.f32 %v2543, %v2639
        %v2672 = vmul.f32 %v2544, %v2640
        %v2673 = vmul.f32 %v2545, %v2641
        %v2674 = vmul.f32 %v2546, %v2642
        %v2675 = vmul.f32 %v2547, %v2643
        %v2676 = vmul.f32 %v2548, %v2644
        %v2677 = vmul.f32 %v2549, %v2645
        %v2678 = vmul.f32 %v2550, %v2646
        %v2679 = vmul.f32 %v2551, %v2647
        %v2680 = vmul.f32 %v2552, %v2648
        %v2681 = vmul.f32 %v2553, %v2649
        %v2682 = vmul.f32 %v2554, %v2650
        %v2683 = vmul.f32 %v2555, %v2651
        %v2684 = vmul.f32 %v2556, %v2652
        %v2685 = vmul.f32 %v2557, %v2653
        %v2686 = vmul.f32 %v2558, %v2654
        %v2687 = vmul.f32 %v2559, %v2655
        %v2688 = vmul.f32 %v2560, %v2656
        %v2689 = vmul.f32 %v2561, %v2657
        %v2690 = vmul.f32 %v2562, %v2658
        %v2691 = vmul.f32 %v2563, %v2659
        %v2692 = vld [vmem:[%s9] sm:$0xff]
        %2693 = vmatprep.subr.mxu0 0.0
        %2694 = vmatpush1.xpose.msra.mxu0 %v2660
        %2695 = vmatprep.subr.mxu0 0.0
        %2696 = vmatpush1.xpose.msra.mxu0 %v2661
        %2697 = vmatprep.subr.mxu0 0.0
        %2698 = vmatpush1.xpose.msra.mxu0 %v2662
        %2699 = vmatprep.subr.mxu0 0.0
        %2700 = vmatpush1.xpose.msra.mxu0 %v2663
        %2701 = vmatprep.subr.mxu0 0.0
        %2702 = vmatpush1.xpose.msra.mxu0 %v2664
        %2703 = vmatprep.subr.mxu0 0.0
        %2704 = vmatpush1.xpose.msra.mxu0 %v2665
        %2705 = vmatprep.subr.mxu0 0.0
        %2706 = vmatpush1.xpose.msra.mxu0 %v2666
        %2707 = vmatprep.subr.mxu0 0.0
        %2708 = vmatpush1.xpose.msra.mxu0 %v2667
        %2709 = vmatprep.subr.mxu0 0.0
        %2710 = vmatpush1.xpose.msra.mxu0 %v2668
        %2711 = vmatprep.subr.mxu0 0.0
        %2712 = vmatpush1.xpose.msra.mxu0 %v2669
        %2713 = vmatprep.subr.mxu0 0.0
        %2714 = vmatpush1.xpose.msra.mxu0 %v2670
        %2715 = vmatprep.subr.mxu0 0.0
        %2716 = vmatpush1.xpose.msra.mxu0 %v2671
        %2717 = vmatprep.subr.mxu0 0.0
        %2718 = vmatpush1.xpose.msra.mxu0 %v2672
        %2719 = vmatprep.subr.mxu0 0.0
        %2720 = vmatpush1.xpose.msra.mxu0 %v2673
        %2721 = vmatprep.subr.mxu0 0.0
        %2722 = vmatpush1.xpose.msra.mxu0 %v2674
        %2723 = vmatprep.subr.mxu0 0.0
        %2724 = vmatpush1.xpose.msra.mxu0 %v2675
        %2725 = vmatprep.subr.mxu0 0.0
        %2726 = vmatpush1.xpose.msra.mxu0 %v2676
        %2727 = vmatprep.subr.mxu0 0.0
        %2728 = vmatpush1.xpose.msra.mxu0 %v2677
        %2729 = vmatprep.subr.mxu0 0.0
        %2730 = vmatpush1.xpose.msra.mxu0 %v2678
        %2731 = vmatprep.subr.mxu0 0.0
        %2732 = vmatpush1.xpose.msra.mxu0 %v2679
        %2733 = vmatprep.subr.mxu0 0.0
        %2734 = vmatpush1.xpose.msra.mxu0 %v2680
        %2735 = vmatprep.subr.mxu0 0.0
        %2736 = vmatpush1.xpose.msra.mxu0 %v2681
        %2737 = vmatprep.subr.mxu0 0.0
        %2738 = vmatpush1.xpose.msra.mxu0 %v2682
        %2739 = vmatprep.subr.mxu0 0.0
        %2740 = vmatpush1.xpose.msra.mxu0 %v2683
        %2741 = vmatprep.subr.mxu0 0.0
        %2742 = vmatpush1.xpose.msra.mxu0 %v2684
        %2743 = vmatprep.subr.mxu0 0.0
        %2744 = vmatpush1.xpose.msra.mxu0 %v2685
        %2745 = vmatprep.subr.mxu0 0.0
        %2746 = vmatpush1.xpose.msra.mxu0 %v2686
        %2747 = vmatprep.subr.mxu0 0.0
        %2748 = vmatpush1.xpose.msra.mxu0 %v2687
        %2749 = vmatprep.subr.mxu0 0.0
        %2750 = vmatpush1.xpose.msra.mxu0 %v2688
        %2751 = vmatprep.subr.mxu0 0.0
        %2752 = vmatpush1.xpose.msra.mxu0 %v2689
        %2753 = vmatprep.subr.mxu0 0.0
        %2754 = vmatpush1.xpose.msra.mxu0 %v2690
        %2755 = vmatprep.subr.mxu0 0.0
        %2756 = vmatpush1.xpose.msra.mxu0 %v2691
        %2757 = vmatprep.mubr.f32.mxu0 0.0
        %2758 = vmatmul.mubr.f32.gmra.mrb[0].mxu0 %v2692
        %v2759 = vpop.f32.mrb[0].mxu0
        %v2760 = vadd.f32 0.0, %v2759
        %v2761 = vpop.f32.mrb[0].mxu0
        %v2762 = vadd.f32 0.0, %v2761
        %2763 = vdwg.mxu0
        %v2764 = vld [vmem:[#allocation2] sm:$0x1]
        %2766 = vset.pattern.permute.xlu0 0
        %2767 = vperm.xlu0 %2766, %v2764
        %v2768 = vpop.permute.xlu0 %2767
        %v2770 = vlaneseq
        %v2771 = vshrl.u32 %v2770, 7
        %v2772 = vsub.s32 0, %v2771
        %v2773 = vrot.slane %v2768, %v2772
        %v2774 = vadd.f32 %v2760, %v2773
        %v2775 = vadd.f32 %v2762, %v2773
        %v2778 = vcombine.low %v2774, %v2775
        %v2780 = vunpack.c.l.s4 1966171168
        %v2781 = vunpack.c.0.s8 %v2780
        %v2782 = vlaneseq
        %v2783 = vshrl.u32 %v2782, 7
        %v2784 = vsub.s32 %v2781, %v2783
        %v2785 = vrot.slane %v2778, %v2784
        %v2787 = vunpack.c.l.s4 1966171168
        %v2788 = vunpack.c.0.s8 %v2787
        %v2789 = vlaneseq
        %v2790 = vshrl.u32 %v2789, 7
        %v2791 = vsub.s32 %v2788, %v2790
        %v2792 = vrot.slane %v2785, %v2791
        %v2794 = vlaneseq
        %vm2795 = vcmp.ge.s32.totalorder %v2794, 0
        %vm2796 = vcmp.lt.s32.totalorder %v2794, 256
        %vm2797 = vmand %vm2795, %vm2796
        %2798 = vst.msk [vmem:[%s435] sm:$0x3] %vm2797, %v2792
        %s2799 = sand.u32 %s275, 1
        %s2800 = scalar_lea.sflag [#allocation5], %s2799
        %s2801 = sand.u32 %s275, 1
        %s2802 = smul.addr %s2801, 2
        %s2803 = scalar_lea.vmem [#allocation9], %s2802
        // Predicated region
        $region77: #{tpu_custom_call.1} parent=63 // pred_check
          %p2804 = pneg %p285
        $region78: #{tpu_custom_call.1} parent=63 // pred_check_branch
          %2806 = sbr.rel (%p2804) target = $region80
        $region79: #{tpu_custom_call.1} parent=63 // pred_region
          %s2807 = smul.u32 2, %s31
          %s2809 = ssub.s32 32, 32
          %2810 = vsyncadd %s2800, %s2809
          %s2811 = smul.addr %s2807, 16
          %s2812 = scalar_lea.hbm %s11, %s2811
          %s2814 = sshll.u32 %s2803, 4
          %s2815 = int_to_ptr.vmem [resolvable:$true] %s2814
          %2817 = dma.vmem_to_hbm [thread:$0]  %s2815, 32, %s2812, %s2800
        $region80: #{tpu_custom_call.1} parent=63 // pred_fallthru
          _
      $region64: #{tpu_custom_call.1} parent=5 // pred_fallthru
        _
      %p2818 = scmp.le.s32.totalorder 2, %s26
      // Predicated region
      $region81: #{tpu_custom_call.1} parent=5 // pred_check
        %p2819 = pneg %p2818
      $region82: #{tpu_custom_call.1} parent=5 // pred_check_branch
        %2821 = sbr.rel (%p2819) target = $region84
      $region83: #{tpu_custom_call.1} parent=5 // pred_region
        %s2822 = ssub.s32 %s26, 2
        // Predicated region
        $region85: #{tpu_custom_call.1} parent=83 // pred_check
          %p2823 = pneg %p291
        $region86: #{tpu_custom_call.1} parent=83 // pred_check_branch
          %2825 = sbr.rel (%p2823) target = $region88
        $region87: #{tpu_custom_call.1} parent=83 // pred_region
          %s2826 = sand.u32 %s276, 1
          %s2827 = scalar_lea.sflag [#allocation5], %s2826
          %s2828 = sand.u32 %s276, 1
          %s2829 = smul.addr %s2828, 2
          %s2830 = scalar_lea.vmem [#allocation9], %s2829
          %2831 = dma.done %s2827, 32
        $region88: #{tpu_custom_call.1} parent=83 // pred_fallthru
          _
      $region84: #{tpu_custom_call.1} parent=5 // pred_fallthru
        _
    $region6: #{tpu_custom_call.1} parent=1 // loop_footer
      %s30 = sadd.s32 1, %s26
    $region7: #{tpu_custom_call.1} parent=1 // loop_footer_branch
      %25 = sbr.rel target = $region3
    $region8: #{tpu_custom_call.1} parent=1 // loop_exit
      _
    %2832 = vsyncpa [#allocation4], 1
    %s2833 = scalar_lea.sflag [#allocation4], 1
    %2834 = vsyncpa %s2833, 1
    %2835 = vsyncpa [#allocation7], 1
    %2836 = vsyncpa [#allocation5], 1
    %s2837 = scalar_lea.sflag [#allocation5], 1
    %2838 = vsyncpa %s2837, 1

</llo_original>
